<compile_context>
chip_gen: v5e
topology: v5e:2x2
jax: 0.10.0
libtpu: 0.0.40
codegen_flags: <defaults>
</compile_context>

<pallas_src>
import jax
import jax.numpy as jnp
import numpy as np
from jax.experimental import pallas as pl
from jax.experimental.pallas import tpu as pltpu

BN_EPS = 1e-5  # PyTorch BatchNorm2d default


def _stage1_kernel(xp_ref, w_ref, y_ref, stats_ref):
    """Conv(3x3, s=2) + MaxPool(3x3, s=2) + concat + masked BN partial sums.

    xp_ref   : (1, 2, 2, Cin, Hh+1, Wh+1) bf16  stride-2 phase split, zero padded
    w_ref    : (Cm, Cin*9) f32 in SMEM, column = c*9 + dy*3 + dx
    y_ref    : (Hh, Ct*Wh) f32   pre-BN tile, lane index = m*Wh + j (channel-major)
    stats_ref: (1, 2, Ct*Wh) f32 [masked sum, masked sum-of-squares] per lane
    """
    _, _, _, Cin, Hp, Wp = xp_ref.shape
    Hh, Wh = Hp - 1, Wp - 1          # full stride-2 grid computed per image
    Ho, Wo = Hh - 1, Wh - 1          # valid conv/pool output extent (k=3, s=2, p=0)
    Cm = w_ref.shape[0]
    Ct = Cm + Cin

    conv = [None] * Cm               # 13 spatial accumulators (no zeros init)
    pool = []                        # 3 per-input-channel max planes
    for c in range(Cin):
        # Load the four stride-2 phase planes for this channel once, bf16 -> f32.
        plane = [[xp_ref[0, r, s, c, :, :].astype(jnp.float32) for s in range(2)]
                 for r in range(2)]
        pool_c = None
        for dy in range(3):
            for dx in range(3):
                p = plane[dy % 2][dx % 2]
                # 3x3 tap = +0/+1 static offset inside one padded plane.
                t = p[dy // 2: dy // 2 + Hh, dx // 2: dx // 2 + Wh]   # (Hh, Wh)
                # ext branch: running elementwise max (VPU).
                pool_c = t if pool_c is None else jnp.maximum(pool_c, t)
                # main branch: scalar-broadcast FMA per output channel (VPU);
                # the lane-sparse im2col MXU matmul is intentionally avoided.
                k = c * 9 + dy * 3 + dx
                for m in range(Cm):
                    fm = w_ref[m, k] * t
                    conv[m] = fm if conv[m] is None else conv[m] + fm
        pool.append(pool_c)

    # cat(main, ext) along channels, packed lane-dense: lane = m*Wh + j.
    y = jnp.concatenate(conv + pool, axis=1)                 # (Hh, Ct*Wh) f32

    # Masked partial BN statistics (exclude the padded last output row/col).
    rows = jax.lax.broadcasted_iota(jnp.int32, (Hh, Ct * Wh), 0)
    cols = jax.lax.broadcasted_iota(jnp.int32, (Hh, Ct * Wh), 1)
    valid = ((rows < Ho) & ((cols % Wh) < Wo)).astype(jnp.float32)
    vy = y * valid
    s1 = jnp.sum(vy, axis=0, keepdims=True)                  # (1, Ct*Wh)
    s2 = jnp.sum(vy * y, axis=0, keepdims=True)              # masked sum of x^2
    stats_ref[0, :, :] = jnp.concatenate([s1, s2], axis=0)
    y_ref[...] = y


def _stage2_kernel(y_ref, scale_ref, shift_ref, o_ref):
    """Apply the folded BatchNorm scale/shift + ReLU to a lane-dense tile."""
    o_ref[...] = jnp.maximum(
        y_ref[...] * scale_ref[...] + shift_ref[...], 0.0).astype(o_ref.dtype)


@jax.jit
def initial_block(x_nchw, w, g, b):
    """x: (N, Cin, H, W) NCHW; w: (Cm, Cin, 3, 3) OIHW; g, b: (Cm + Cin,)."""
    N, Cin, H, W = x_nchw.shape
    Cm = w.shape[0]
    Ct = Cm + Cin
    assert H % 2 == 0 and W % 2 == 0 and H >= 4 and W >= 4
    Hh, Wh = H // 2, W // 2
    Ho, Wo = Hh - 1, Wh - 1
    assert Hh % 8 == 0, "toy script assumes 8-aligned row tiles (H % 16 == 0)"

    # Wrapper-side layout plumbing: NCHW -> stride-2 phase split, planar,
    # one zero row/col of padding, bf16.  xp[n,r,s,c,i,j] = x[n,c,2i+r,2j+s].
    xs = x_nchw.reshape(N, Cin, Hh, 2, Wh, 2)
    xs = jnp.transpose(xs, (0, 3, 5, 1, 2, 4))               # (N,2,2,Cin,Hh,Wh)
    xp = jnp.pad(xs, ((0, 0),) * 4 + ((0, 1), (0, 1))).astype(jnp.bfloat16)

    # Scalar conv-weight table for SMEM: column = c*9 + dy*3 + dx.
    w_smem = w.reshape(Cm, Cin * 9).astype(jnp.float32)

    vmem_limit = 32 * 1024 * 1024    # safe on v5e/v6e (128 MiB) and v7x (64 MiB)

    # ---- Stage 1: conv + pool + concat + partial BN stats (grid over batch) ----
    y2d, stats = pl.pallas_call(
        _stage1_kernel,
        grid=(N,),
        in_specs=[
            pl.BlockSpec((1, 2, 2, Cin, Hh + 1, Wh + 1),
                         lambda n: (n, 0, 0, 0, 0, 0)),
            pl.BlockSpec(memory_space=pltpu.MemorySpace.SMEM),
        ],
        out_specs=(
            pl.BlockSpec((Hh, Ct * Wh), lambda n: (n, 0)),
            pl.BlockSpec((1, 2, Ct * Wh), lambda n: (n, 0, 0)),
        ),
        out_shape=(
            jax.ShapeDtypeStruct((N * Hh, Ct * Wh), jnp.float32),
            jax.ShapeDtypeStruct((N, 2, Ct * Wh), jnp.float32),
        ),
        compiler_params=pltpu.CompilerParams(
            dimension_semantics=("parallel",),
            vmem_limit_bytes=vmem_limit),
    )(xp, w_smem)

    # ---- Finalize BN statistics (tiny per-channel math, plain JAX) ----
    s = stats.sum(axis=0).reshape(2, Ct, Wh).sum(axis=-1)    # (2, Ct)
    count = N * Ho * Wo
    mu = s[0] / count
    var = jnp.maximum(s[1] / count - mu * mu, 0.0)
    scale_c = g * jax.lax.rsqrt(var + BN_EPS)
    shift_c = b - mu * scale_c
    scale_l = jnp.repeat(scale_c, Wh).reshape(1, Ct * Wh)    # lane = m*Wh + j
    shift_l = jnp.repeat(shift_c, Wh).reshape(1, Ct * Wh)

    # ---- Stage 2: y * scale + shift, ReLU (grid over batch) ----
    out2d = pl.pallas_call(
        _stage2_kernel,
        grid=(N,),
        in_specs=[
            pl.BlockSpec((Hh, Ct * Wh), lambda n: (n, 0)),
            pl.BlockSpec((1, Ct * Wh), lambda n: (0, 0)),
            pl.BlockSpec((1, Ct * Wh), lambda n: (0, 0)),
        ],
        out_specs=pl.BlockSpec((Hh, Ct * Wh), lambda n: (n, 0)),
        out_shape=jax.ShapeDtypeStruct((N * Hh, Ct * Wh), x_nchw.dtype),
        compiler_params=pltpu.CompilerParams(
            dimension_semantics=("parallel",),
            vmem_limit_bytes=vmem_limit),
    )(y2d, scale_l, shift_l)

    # Lane-dense (N*Hh, Ct*Wh) -> NCHW, dropping the invalid last row/col.
    out = out2d.reshape(N, Hh, Ct, Wh)[:, :Ho, :, :Wo]
    return jnp.transpose(out, (0, 2, 1, 3))                  # (N, Ct, Ho, Wo)


def reference_forward(x, w, g, b):
    """Plain-JAX reference with identical semantics (NCHW throughout)."""
    main = jax.lax.conv_general_dilated(
        x, w, window_strides=(2, 2), padding="VALID",
        dimension_numbers=("NCHW", "OIHW", "NCHW"))
    ext = jax.lax.reduce_window(
        x, -jnp.inf, jax.lax.max,
        window_dimensions=(1, 1, 3, 3), window_strides=(1, 1, 2, 2),
        padding="VALID")
    out = jnp.concatenate([main, ext], axis=1)
    mu = jnp.mean(out, axis=(0, 2, 3), keepdims=True)
    var = jnp.mean((out - mu) ** 2, axis=(0, 2, 3), keepdims=True)
    out = (out - mu) * jax.lax.rsqrt(var + BN_EPS)
    out = out * g.reshape(1, -1, 1, 1) + b.reshape(1, -1, 1, 1)
    return jnp.maximum(out, 0.0)


if __name__ == "__main__":
    N, Cin, H, W = 2, 3, 16, 16     # module defaults: input_dim=3
    Cout = 16                       # output_dim
    Cm = Cout - 3                   # conv (main) branch channels = 13

    key = jax.random.PRNGKey(0)
    kx, kw, kg, kb = jax.random.split(key, 4)
    x = jax.random.normal(kx, (N, Cin, H, W), dtype=jnp.float32)
    w = 0.2 * jax.random.normal(kw, (Cm, Cin, 3, 3), dtype=jnp.float32)
    # BatchNorm affine params (PyTorch default ones/zeros, perturbed to
    # exercise the scale/shift path).
    g = 1.0 + 0.1 * jax.random.normal(kg, (Cout,), dtype=jnp.float32)
    b = 0.1 * jax.random.normal(kb, (Cout,), dtype=jnp.float32)

    out = jax.block_until_ready(initial_block(x, w, g, b))
    ref = jax.block_until_ready(reference_forward(x, w, g, b))

    # Tolerance accounts for bf16 input quantization; conv accumulation, pool
    # and all BatchNorm math are f32.
    np.testing.assert_allclose(np.asarray(out), np.asarray(ref),
                               atol=3e-2, rtol=3e-2)
    print("KERNEL_OK")
</pallas_src>

<mosaic_0001>
module attributes {stable_mosaic.version = 11 : i64} {
  func.func @_stage2_kernel(%arg0: i32, %arg1: memref<8x128xf32, #tpu.memory_space<vmem>>, %arg2: memref<1x128xf32, #tpu.memory_space<vmem>>, %arg3: memref<1x128xf32, #tpu.memory_space<vmem>>, %arg4: memref<8x128xf32, #tpu.memory_space<vmem>>) attributes {dimension_semantics = [#tpu.dimension_semantics<parallel>], iteration_bounds = array<i64: 2>, scalar_prefetch = 0 : i64, scratch_operands = 0 : i64, tpu.core_type = #tpu.core_type<tc>, window_params = [{transform_indices = @transform_0, window_bounds = array<i64: 8, 128>}, {pipeline_mode = #tpu.pipeline_mode<synchronous>, transform_indices = @transform_1, window_bounds = array<i64: 1, 128>}, {pipeline_mode = #tpu.pipeline_mode<synchronous>, transform_indices = @transform_2, window_bounds = array<i64: 1, 128>}, {transform_indices = @transform_3, window_bounds = array<i64: 8, 128>}]} {
    %c0 = arith.constant 0 : index
    %c0_0 = arith.constant 0 : index
    %0 = vector.load %arg1[%c0, %c0_0] : memref<8x128xf32, #tpu.memory_space<vmem>>, vector<8x128xf32>
    %c0_1 = arith.constant 0 : index
    %c0_2 = arith.constant 0 : index
    %1 = vector.load %arg2[%c0_1, %c0_2] : memref<1x128xf32, #tpu.memory_space<vmem>>, vector<1x128xf32>
    %2 = vector.broadcast %1 : vector<1x128xf32> to vector<8x128xf32>
    %3 = arith.mulf %0, %2 : vector<8x128xf32>
    %c0_3 = arith.constant 0 : index
    %c0_4 = arith.constant 0 : index
    %4 = vector.load %arg3[%c0_3, %c0_4] : memref<1x128xf32, #tpu.memory_space<vmem>>, vector<1x128xf32>
    %5 = vector.broadcast %4 : vector<1x128xf32> to vector<8x128xf32>
    %6 = arith.addf %3, %5 : vector<8x128xf32>
    %cst = arith.constant 0.000000e+00 : f32
    %7 = vector.broadcast %cst : f32 to vector<8x128xf32>
    %8 = arith.maximumf %6, %7 : vector<8x128xf32>
    %c0_5 = arith.constant 0 : index
    %c0_6 = arith.constant 0 : index
    %9 = vector.load %arg4[%c0_5, %c0_6] : memref<8x128xf32, #tpu.memory_space<vmem>>, vector<8x128xf32>
    tpu.vector_store %arg4[%c0_5, %c0_6], %8 {strides = array<i32>} : memref<8x128xf32, #tpu.memory_space<vmem>>, vector<8x128xf32>,
    return
  }
  func.func @transform_0(%arg0: i32) -> (i32, i32) {
    %c0_i32 = arith.constant 0 : i32
    %c0_i32_0 = arith.constant 0 : i32
    return %arg0, %c0_i32 : i32, i32
  }
  func.func @transform_1(%arg0: i32) -> (i32, i32) {
    %c0_i32 = arith.constant 0 : i32
    %c0_i32_0 = arith.constant 0 : i32
    %c0_i32_1 = arith.constant 0 : i32
    return %c0_i32, %c0_i32_0 : i32, i32
  }
  func.func @transform_2(%arg0: i32) -> (i32, i32) {
    %c0_i32 = arith.constant 0 : i32
    %c0_i32_0 = arith.constant 0 : i32
    %c0_i32_1 = arith.constant 0 : i32
    return %c0_i32, %c0_i32_0 : i32, i32
  }
  func.func @transform_3(%arg0: i32) -> (i32, i32) {
    %c0_i32 = arith.constant 0 : i32
    %c0_i32_0 = arith.constant 0 : i32
    return %arg0, %c0_i32 : i32, i32
  }
}

module attributes {stable_mosaic.version = 11 : i64} {
  func.func @_stage1_kernel(%arg0: i32, %arg1: memref<1x2x2x3x9x9xbf16, #tpu.memory_space<vmem>>, %arg2: memref<13x27xf32, #tpu.memory_space<smem>>, %arg3: memref<8x128xf32, #tpu.memory_space<vmem>>, %arg4: memref<1x2x128xf32, #tpu.memory_space<vmem>>) attributes {dimension_semantics = [#tpu.dimension_semantics<parallel>], iteration_bounds = array<i64: 2>, scalar_prefetch = 0 : i64, scratch_operands = 0 : i64, tpu.core_type = #tpu.core_type<tc>, window_params = [{transform_indices = @transform_0, window_bounds = array<i64: 1, 2, 2, 3, 9, 9>}, {transform_indices = @transform_1, window_bounds = array<i64: 13, 27>}, {transform_indices = @transform_2, window_bounds = array<i64: 8, 128>}, {transform_indices = @transform_3, window_bounds = array<i64: 1, 2, 128>}]} {
    %c0 = arith.constant 0 : index
    %c0_0 = arith.constant 0 : index
    %c0_1 = arith.constant 0 : index
    %c0_2 = arith.constant 0 : index
    %c0_3 = arith.constant 0 : index
    %c0_4 = arith.constant 0 : index
    %0 = vector.load %arg1[%c0, %c0_0, %c0_1, %c0_2, %c0_3, %c0_4] : memref<1x2x2x3x9x9xbf16, #tpu.memory_space<vmem>>, vector<1x1x1x1x9x9xbf16>
    %1 = vector.shape_cast %0 : vector<1x1x1x1x9x9xbf16> to vector<9x9xbf16>
    %2 = arith.extf %1 : vector<9x9xbf16> to vector<9x9xf32>
    %c0_5 = arith.constant 0 : index
    %c0_6 = arith.constant 0 : index
    %c1 = arith.constant 1 : index
    %c0_7 = arith.constant 0 : index
    %c0_8 = arith.constant 0 : index
    %c0_9 = arith.constant 0 : index
    %3 = vector.load %arg1[%c0_5, %c0_6, %c1, %c0_7, %c0_8, %c0_9] : memref<1x2x2x3x9x9xbf16, #tpu.memory_space<vmem>>, vector<1x1x1x1x9x9xbf16>
    %4 = vector.shape_cast %3 : vector<1x1x1x1x9x9xbf16> to vector<9x9xbf16>
    %5 = arith.extf %4 : vector<9x9xbf16> to vector<9x9xf32>
    %c0_10 = arith.constant 0 : index
    %c1_11 = arith.constant 1 : index
    %c0_12 = arith.constant 0 : index
    %c0_13 = arith.constant 0 : index
    %c0_14 = arith.constant 0 : index
    %c0_15 = arith.constant 0 : index
    %6 = vector.load %arg1[%c0_10, %c1_11, %c0_12, %c0_13, %c0_14, %c0_15] : memref<1x2x2x3x9x9xbf16, #tpu.memory_space<vmem>>, vector<1x1x1x1x9x9xbf16>
    %7 = vector.shape_cast %6 : vector<1x1x1x1x9x9xbf16> to vector<9x9xbf16>
    %8 = arith.extf %7 : vector<9x9xbf16> to vector<9x9xf32>
    %c0_16 = arith.constant 0 : index
    %c1_17 = arith.constant 1 : index
    %c1_18 = arith.constant 1 : index
    %c0_19 = arith.constant 0 : index
    %c0_20 = arith.constant 0 : index
    %c0_21 = arith.constant 0 : index
    %9 = vector.load %arg1[%c0_16, %c1_17, %c1_18, %c0_19, %c0_20, %c0_21] : memref<1x2x2x3x9x9xbf16, #tpu.memory_space<vmem>>, vector<1x1x1x1x9x9xbf16>
    %10 = vector.shape_cast %9 : vector<1x1x1x1x9x9xbf16> to vector<9x9xbf16>
    %11 = arith.extf %10 : vector<9x9xbf16> to vector<9x9xf32>
    %12 = vector.extract_strided_slice %2 {offsets = [0, 0], sizes = [8, 8], strides = [1, 1]} : vector<9x9xf32> to vector<8x8xf32>
    %c0_22 = arith.constant 0 : index
    %c0_23 = arith.constant 0 : index
    %13 = memref.load %arg2[%c0_22, %c0_23] : memref<13x27xf32, #tpu.memory_space<smem>>
    %14 = vector.broadcast %13 : f32 to vector<8x8xf32>
    %15 = arith.mulf %14, %12 : vector<8x8xf32>
    %c1_24 = arith.constant 1 : index
    %c0_25 = arith.constant 0 : index
    %16 = memref.load %arg2[%c1_24, %c0_25] : memref<13x27xf32, #tpu.memory_space<smem>>
    %17 = vector.broadcast %16 : f32 to vector<8x8xf32>
    %18 = arith.mulf %17, %12 : vector<8x8xf32>
    %c2 = arith.constant 2 : index
    %c0_26 = arith.constant 0 : index
    %19 = memref.load %arg2[%c2, %c0_26] : memref<13x27xf32, #tpu.memory_space<smem>>
    %20 = vector.broadcast %19 : f32 to vector<8x8xf32>
    %21 = arith.mulf %20, %12 : vector<8x8xf32>
    %c3 = arith.constant 3 : index
    %c0_27 = arith.constant 0 : index
    %22 = memref.load %arg2[%c3, %c0_27] : memref<13x27xf32, #tpu.memory_space<smem>>
    %23 = vector.broadcast %22 : f32 to vector<8x8xf32>
    %24 = arith.mulf %23, %12 : vector<8x8xf32>
    %c4 = arith.constant 4 : index
    %c0_28 = arith.constant 0 : index
    %25 = memref.load %arg2[%c4, %c0_28] : memref<13x27xf32, #tpu.memory_space<smem>>
    %26 = vector.broadcast %25 : f32 to vector<8x8xf32>
    %27 = arith.mulf %26, %12 : vector<8x8xf32>
    %c5 = arith.constant 5 : index
    %c0_29 = arith.constant 0 : index
    %28 = memref.load %arg2[%c5, %c0_29] : memref<13x27xf32, #tpu.memory_space<smem>>
    %29 = vector.broadcast %28 : f32 to vector<8x8xf32>
    %30 = arith.mulf %29, %12 : vector<8x8xf32>
    %c6 = arith.constant 6 : index
    %c0_30 = arith.constant 0 : index
    %31 = memref.load %arg2[%c6, %c0_30] : memref<13x27xf32, #tpu.memory_space<smem>>
    %32 = vector.broadcast %31 : f32 to vector<8x8xf32>
    %33 = arith.mulf %32, %12 : vector<8x8xf32>
    %c7 = arith.constant 7 : index
    %c0_31 = arith.constant 0 : index
    %34 = memref.load %arg2[%c7, %c0_31] : memref<13x27xf32, #tpu.memory_space<smem>>
    %35 = vector.broadcast %34 : f32 to vector<8x8xf32>
    %36 = arith.mulf %35, %12 : vector<8x8xf32>
    %c8 = arith.constant 8 : index
    %c0_32 = arith.constant 0 : index
    %37 = memref.load %arg2[%c8, %c0_32] : memref<13x27xf32, #tpu.memory_space<smem>>
    %38 = vector.broadcast %37 : f32 to vector<8x8xf32>
    %39 = arith.mulf %38, %12 : vector<8x8xf32>
    %c9 = arith.constant 9 : index
    %c0_33 = arith.constant 0 : index
    %40 = memref.load %arg2[%c9, %c0_33] : memref<13x27xf32, #tpu.memory_space<smem>>
    %41 = vector.broadcast %40 : f32 to vector<8x8xf32>
    %42 = arith.mulf %41, %12 : vector<8x8xf32>
    %c10 = arith.constant 10 : index
    %c0_34 = arith.constant 0 : index
    %43 = memref.load %arg2[%c10, %c0_34] : memref<13x27xf32, #tpu.memory_space<smem>>
    %44 = vector.broadcast %43 : f32 to vector<8x8xf32>
    %45 = arith.mulf %44, %12 : vector<8x8xf32>
    %c11 = arith.constant 11 : index
    %c0_35 = arith.constant 0 : index
    %46 = memref.load %arg2[%c11, %c0_35] : memref<13x27xf32, #tpu.memory_space<smem>>
    %47 = vector.broadcast %46 : f32 to vector<8x8xf32>
    %48 = arith.mulf %47, %12 : vector<8x8xf32>
    %c12 = arith.constant 12 : index
    %c0_36 = arith.constant 0 : index
    %49 = memref.load %arg2[%c12, %c0_36] : memref<13x27xf32, #tpu.memory_space<smem>>
    %50 = vector.broadcast %49 : f32 to vector<8x8xf32>
    %51 = arith.mulf %50, %12 : vector<8x8xf32>
    %52 = vector.extract_strided_slice %5 {offsets = [0, 0], sizes = [8, 8], strides = [1, 1]} : vector<9x9xf32> to vector<8x8xf32>
    %53 = arith.maximumf %12, %52 : vector<8x8xf32>
    %c0_37 = arith.constant 0 : index
    %c1_38 = arith.constant 1 : index
    %54 = memref.load %arg2[%c0_37, %c1_38] : memref<13x27xf32, #tpu.memory_space<smem>>
    %55 = vector.broadcast %54 : f32 to vector<8x8xf32>
    %56 = arith.mulf %55, %52 : vector<8x8xf32>
    %57 = arith.addf %15, %56 : vector<8x8xf32>
    %c1_39 = arith.constant 1 : index
    %c1_40 = arith.constant 1 : index
    %58 = memref.load %arg2[%c1_39, %c1_40] : memref<13x27xf32, #tpu.memory_space<smem>>
    %59 = vector.broadcast %58 : f32 to vector<8x8xf32>
    %60 = arith.mulf %59, %52 : vector<8x8xf32>
    %61 = arith.addf %18, %60 : vector<8x8xf32>
    %c2_41 = arith.constant 2 : index
    %c1_42 = arith.constant 1 : index
    %62 = memref.load %arg2[%c2_41, %c1_42] : memref<13x27xf32, #tpu.memory_space<smem>>
    %63 = vector.broadcast %62 : f32 to vector<8x8xf32>
    %64 = arith.mulf %63, %52 : vector<8x8xf32>
    %65 = arith.addf %21, %64 : vector<8x8xf32>
    %c3_43 = arith.constant 3 : index
    %c1_44 = arith.constant 1 : index
    %66 = memref.load %arg2[%c3_43, %c1_44] : memref<13x27xf32, #tpu.memory_space<smem>>
    %67 = vector.broadcast %66 : f32 to vector<8x8xf32>
    %68 = arith.mulf %67, %52 : vector<8x8xf32>
    %69 = arith.addf %24, %68 : vector<8x8xf32>
    %c4_45 = arith.constant 4 : index
    %c1_46 = arith.constant 1 : index
    %70 = memref.load %arg2[%c4_45, %c1_46] : memref<13x27xf32, #tpu.memory_space<smem>>
    %71 = vector.broadcast %70 : f32 to vector<8x8xf32>
    %72 = arith.mulf %71, %52 : vector<8x8xf32>
    %73 = arith.addf %27, %72 : vector<8x8xf32>
    %c5_47 = arith.constant 5 : index
    %c1_48 = arith.constant 1 : index
    %74 = memref.load %arg2[%c5_47, %c1_48] : memref<13x27xf32, #tpu.memory_space<smem>>
    %75 = vector.broadcast %74 : f32 to vector<8x8xf32>
    %76 = arith.mulf %75, %52 : vector<8x8xf32>
    %77 = arith.addf %30, %76 : vector<8x8xf32>
    %c6_49 = arith.constant 6 : index
    %c1_50 = arith.constant 1 : index
    %78 = memref.load %arg2[%c6_49, %c1_50] : memref<13x27xf32, #tpu.memory_space<smem>>
    %79 = vector.broadcast %78 : f32 to vector<8x8xf32>
    %80 = arith.mulf %79, %52 : vector<8x8xf32>
    %81 = arith.addf %33, %80 : vector<8x8xf32>
    %c7_51 = arith.constant 7 : index
    %c1_52 = arith.constant 1 : index
    %82 = memref.load %arg2[%c7_51, %c1_52] : memref<13x27xf32, #tpu.memory_space<smem>>
    %83 = vector.broadcast %82 : f32 to vector<8x8xf32>
    %84 = arith.mulf %83, %52 : vector<8x8xf32>
    %85 = arith.addf %36, %84 : vector<8x8xf32>
    %c8_53 = arith.constant 8 : index
    %c1_54 = arith.constant 1 : index
    %86 = memref.load %arg2[%c8_53, %c1_54] : memref<13x27xf32, #tpu.memory_space<smem>>
    %87 = vector.broadcast %86 : f32 to vector<8x8xf32>
    %88 = arith.mulf %87, %52 : vector<8x8xf32>
    %89 = arith.addf %39, %88 : vector<8x8xf32>
    %c9_55 = arith.constant 9 : index
    %c1_56 = arith.constant 1 : index
    %90 = memref.load %arg2[%c9_55, %c1_56] : memref<13x27xf32, #tpu.memory_space<smem>>
    %91 = vector.broadcast %90 : f32 to vector<8x8xf32>
    %92 = arith.mulf %91, %52 : vector<8x8xf32>
    %93 = arith.addf %42, %92 : vector<8x8xf32>
    %c10_57 = arith.constant 10 : index
    %c1_58 = arith.constant 1 : index
    %94 = memref.load %arg2[%c10_57, %c1_58] : memref<13x27xf32, #tpu.memory_space<smem>>
    %95 = vector.broadcast %94 : f32 to vector<8x8xf32>
    %96 = arith.mulf %95, %52 : vector<8x8xf32>
    %97 = arith.addf %45, %96 : vector<8x8xf32>
    %c11_59 = arith.constant 11 : index
    %c1_60 = arith.constant 1 : index
    %98 = memref.load %arg2[%c11_59, %c1_60] : memref<13x27xf32, #tpu.memory_space<smem>>
    %99 = vector.broadcast %98 : f32 to vector<8x8xf32>
    %100 = arith.mulf %99, %52 : vector<8x8xf32>
    %101 = arith.addf %48, %100 : vector<8x8xf32>
    %c12_61 = arith.constant 12 : index
    %c1_62 = arith.constant 1 : index
    %102 = memref.load %arg2[%c12_61, %c1_62] : memref<13x27xf32, #tpu.memory_space<smem>>
    %103 = vector.broadcast %102 : f32 to vector<8x8xf32>
    %104 = arith.mulf %103, %52 : vector<8x8xf32>
    %105 = arith.addf %51, %104 : vector<8x8xf32>
    %106 = vector.extract_strided_slice %2 {offsets = [0, 1], sizes = [8, 8], strides = [1, 1]} : vector<9x9xf32> to vector<8x8xf32>
    %107 = arith.maximumf %53, %106 : vector<8x8xf32>
    %c0_63 = arith.constant 0 : index
    %c2_64 = arith.constant 2 : index
    %108 = memref.load %arg2[%c0_63, %c2_64] : memref<13x27xf32, #tpu.memory_space<smem>>
    %109 = vector.broadcast %108 : f32 to vector<8x8xf32>
    %110 = arith.mulf %109, %106 : vector<8x8xf32>
    %111 = arith.addf %57, %110 : vector<8x8xf32>
    %c1_65 = arith.constant 1 : index
    %c2_66 = arith.constant 2 : index
    %112 = memref.load %arg2[%c1_65, %c2_66] : memref<13x27xf32, #tpu.memory_space<smem>>
    %113 = vector.broadcast %112 : f32 to vector<8x8xf32>
    %114 = arith.mulf %113, %106 : vector<8x8xf32>
    %115 = arith.addf %61, %114 : vector<8x8xf32>
    %c2_67 = arith.constant 2 : index
    %c2_68 = arith.constant 2 : index
    %116 = memref.load %arg2[%c2_67, %c2_68] : memref<13x27xf32, #tpu.memory_space<smem>>
    %117 = vector.broadcast %116 : f32 to vector<8x8xf32>
    %118 = arith.mulf %117, %106 : vector<8x8xf32>
    %119 = arith.addf %65, %118 : vector<8x8xf32>
    %c3_69 = arith.constant 3 : index
    %c2_70 = arith.constant 2 : index
    %120 = memref.load %arg2[%c3_69, %c2_70] : memref<13x27xf32, #tpu.memory_space<smem>>
    %121 = vector.broadcast %120 : f32 to vector<8x8xf32>
    %122 = arith.mulf %121, %106 : vector<8x8xf32>
    %123 = arith.addf %69, %122 : vector<8x8xf32>
    %c4_71 = arith.constant 4 : index
    %c2_72 = arith.constant 2 : index
    %124 = memref.load %arg2[%c4_71, %c2_72] : memref<13x27xf32, #tpu.memory_space<smem>>
    %125 = vector.broadcast %124 : f32 to vector<8x8xf32>
    %126 = arith.mulf %125, %106 : vector<8x8xf32>
    %127 = arith.addf %73, %126 : vector<8x8xf32>
    %c5_73 = arith.constant 5 : index
    %c2_74 = arith.constant 2 : index
    %128 = memref.load %arg2[%c5_73, %c2_74] : memref<13x27xf32, #tpu.memory_space<smem>>
    %129 = vector.broadcast %128 : f32 to vector<8x8xf32>
    %130 = arith.mulf %129, %106 : vector<8x8xf32>
    %131 = arith.addf %77, %130 : vector<8x8xf32>
    %c6_75 = arith.constant 6 : index
    %c2_76 = arith.constant 2 : index
    %132 = memref.load %arg2[%c6_75, %c2_76] : memref<13x27xf32, #tpu.memory_space<smem>>
    %133 = vector.broadcast %132 : f32 to vector<8x8xf32>
    %134 = arith.mulf %133, %106 : vector<8x8xf32>
    %135 = arith.addf %81, %134 : vector<8x8xf32>
    %c7_77 = arith.constant 7 : index
    %c2_78 = arith.constant 2 : index
    %136 = memref.load %arg2[%c7_77, %c2_78] : memref<13x27xf32, #tpu.memory_space<smem>>
    %137 = vector.broadcast %136 : f32 to vector<8x8xf32>
    %138 = arith.mulf %137, %106 : vector<8x8xf32>
    %139 = arith.addf %85, %138 : vector<8x8xf32>
    %c8_79 = arith.constant 8 : index
    %c2_80 = arith.constant 2 : index
    %140 = memref.load %arg2[%c8_79, %c2_80] : memref<13x27xf32, #tpu.memory_space<smem>>
    %141 = vector.broadcast %140 : f32 to vector<8x8xf32>
    %142 = arith.mulf %141, %106 : vector<8x8xf32>
    %143 = arith.addf %89, %142 : vector<8x8xf32>
    %c9_81 = arith.constant 9 : index
    %c2_82 = arith.constant 2 : index
    %144 = memref.load %arg2[%c9_81, %c2_82] : memref<13x27xf32, #tpu.memory_space<smem>>
    %145 = vector.broadcast %144 : f32 to vector<8x8xf32>
    %146 = arith.mulf %145, %106 : vector<8x8xf32>
    %147 = arith.addf %93, %146 : vector<8x8xf32>
    %c10_83 = arith.constant 10 : index
    %c2_84 = arith.constant 2 : index
    %148 = memref.load %arg2[%c10_83, %c2_84] : memref<13x27xf32, #tpu.memory_space<smem>>
    %149 = vector.broadcast %148 : f32 to vector<8x8xf32>
    %150 = arith.mulf %149, %106 : vector<8x8xf32>
    %151 = arith.addf %97, %150 : vector<8x8xf32>
    %c11_85 = arith.constant 11 : index
    %c2_86 = arith.constant 2 : index
    %152 = memref.load %arg2[%c11_85, %c2_86] : memref<13x27xf32, #tpu.memory_space<smem>>
    %153 = vector.broadcast %152 : f32 to vector<8x8xf32>
    %154 = arith.mulf %153, %106 : vector<8x8xf32>
    %155 = arith.addf %101, %154 : vector<8x8xf32>
    %c12_87 = arith.constant 12 : index
    %c2_88 = arith.constant 2 : index
    %156 = memref.load %arg2[%c12_87, %c2_88] : memref<13x27xf32, #tpu.memory_space<smem>>
    %157 = vector.broadcast %156 : f32 to vector<8x8xf32>
    %158 = arith.mulf %157, %106 : vector<8x8xf32>
    %159 = arith.addf %105, %158 : vector<8x8xf32>
    %160 = vector.extract_strided_slice %8 {offsets = [0, 0], sizes = [8, 8], strides = [1, 1]} : vector<9x9xf32> to vector<8x8xf32>
    %161 = arith.maximumf %107, %160 : vector<8x8xf32>
    %c0_89 = arith.constant 0 : index
    %c3_90 = arith.constant 3 : index
    %162 = memref.load %arg2[%c0_89, %c3_90] : memref<13x27xf32, #tpu.memory_space<smem>>
    %163 = vector.broadcast %162 : f32 to vector<8x8xf32>
    %164 = arith.mulf %163, %160 : vector<8x8xf32>
    %165 = arith.addf %111, %164 : vector<8x8xf32>
    %c1_91 = arith.constant 1 : index
    %c3_92 = arith.constant 3 : index
    %166 = memref.load %arg2[%c1_91, %c3_92] : memref<13x27xf32, #tpu.memory_space<smem>>
    %167 = vector.broadcast %166 : f32 to vector<8x8xf32>
    %168 = arith.mulf %167, %160 : vector<8x8xf32>
    %169 = arith.addf %115, %168 : vector<8x8xf32>
    %c2_93 = arith.constant 2 : index
    %c3_94 = arith.constant 3 : index
    %170 = memref.load %arg2[%c2_93, %c3_94] : memref<13x27xf32, #tpu.memory_space<smem>>
    %171 = vector.broadcast %170 : f32 to vector<8x8xf32>
    %172 = arith.mulf %171, %160 : vector<8x8xf32>
    %173 = arith.addf %119, %172 : vector<8x8xf32>
    %c3_95 = arith.constant 3 : index
    %c3_96 = arith.constant 3 : index
    %174 = memref.load %arg2[%c3_95, %c3_96] : memref<13x27xf32, #tpu.memory_space<smem>>
    %175 = vector.broadcast %174 : f32 to vector<8x8xf32>
    %176 = arith.mulf %175, %160 : vector<8x8xf32>
    %177 = arith.addf %123, %176 : vector<8x8xf32>
    %c4_97 = arith.constant 4 : index
    %c3_98 = arith.constant 3 : index
    %178 = memref.load %arg2[%c4_97, %c3_98] : memref<13x27xf32, #tpu.memory_space<smem>>
    %179 = vector.broadcast %178 : f32 to vector<8x8xf32>
    %180 = arith.mulf %179, %160 : vector<8x8xf32>
    %181 = arith.addf %127, %180 : vector<8x8xf32>
    %c5_99 = arith.constant 5 : index
    %c3_100 = arith.constant 3 : index
    %182 = memref.load %arg2[%c5_99, %c3_100] : memref<13x27xf32, #tpu.memory_space<smem>>
    %183 = vector.broadcast %182 : f32 to vector<8x8xf32>
    %184 = arith.mulf %183, %160 : vector<8x8xf32>
    %185 = arith.addf %131, %184 : vector<8x8xf32>
    %c6_101 = arith.constant 6 : index
    %c3_102 = arith.constant 3 : index
    %186 = memref.load %arg2[%c6_101, %c3_102] : memref<13x27xf32, #tpu.memory_space<smem>>
    %187 = vector.broadcast %186 : f32 to vector<8x8xf32>
    %188 = arith.mulf %187, %160 : vector<8x8xf32>
    %189 = arith.addf %135, %188 : vector<8x8xf32>
    %c7_103 = arith.constant 7 : index
    %c3_104 = arith.constant 3 : index
    %190 = memref.load %arg2[%c7_103, %c3_104] : memref<13x27xf32, #tpu.memory_space<smem>>
    %191 = vector.broadcast %190 : f32 to vector<8x8xf32>
    %192 = arith.mulf %191, %160 : vector<8x8xf32>
    %193 = arith.addf %139, %192 : vector<8x8xf32>
    %c8_105 = arith.constant 8 : index
    %c3_106 = arith.constant 3 : index
    %194 = memref.load %arg2[%c8_105, %c3_106] : memref<13x27xf32, #tpu.memory_space<smem>>
    %195 = vector.broadcast %194 : f32 to vector<8x8xf32>
    %196 = arith.mulf %195, %160 : vector<8x8xf32>
    %197 = arith.addf %143, %196 : vector<8x8xf32>
    %c9_107 = arith.constant 9 : index
    %c3_108 = arith.constant 3 : index
    %198 = memref.load %arg2[%c9_107, %c3_108] : memref<13x27xf32, #tpu.memory_space<smem>>
    %199 = vector.broadcast %198 : f32 to vector<8x8xf32>
    %200 = arith.mulf %199, %160 : vector<8x8xf32>
    %201 = arith.addf %147, %200 : vector<8x8xf32>
    %c10_109 = arith.constant 10 : index
    %c3_110 = arith.constant 3 : index
    %202 = memref.load %arg2[%c10_109, %c3_110] : memref<13x27xf32, #tpu.memory_space<smem>>
    %203 = vector.broadcast %202 : f32 to vector<8x8xf32>
    %204 = arith.mulf %203, %160 : vector<8x8xf32>
    %205 = arith.addf %151, %204 : vector<8x8xf32>
    %c11_111 = arith.constant 11 : index
    %c3_112 = arith.constant 3 : index
    %206 = memref.load %arg2[%c11_111, %c3_112] : memref<13x27xf32, #tpu.memory_space<smem>>
    %207 = vector.broadcast %206 : f32 to vector<8x8xf32>
    %208 = arith.mulf %207, %160 : vector<8x8xf32>
    %209 = arith.addf %155, %208 : vector<8x8xf32>
    %c12_113 = arith.constant 12 : index
    %c3_114 = arith.constant 3 : index
    %210 = memref.load %arg2[%c12_113, %c3_114] : memref<13x27xf32, #tpu.memory_space<smem>>
    %211 = vector.broadcast %210 : f32 to vector<8x8xf32>
    %212 = arith.mulf %211, %160 : vector<8x8xf32>
    %213 = arith.addf %159, %212 : vector<8x8xf32>
    %214 = vector.extract_strided_slice %11 {offsets = [0, 0], sizes = [8, 8], strides = [1, 1]} : vector<9x9xf32> to vector<8x8xf32>
    %215 = arith.maximumf %161, %214 : vector<8x8xf32>
    %c0_115 = arith.constant 0 : index
    %c4_116 = arith.constant 4 : index
    %216 = memref.load %arg2[%c0_115, %c4_116] : memref<13x27xf32, #tpu.memory_space<smem>>
    %217 = vector.broadcast %216 : f32 to vector<8x8xf32>
    %218 = arith.mulf %217, %214 : vector<8x8xf32>
    %219 = arith.addf %165, %218 : vector<8x8xf32>
    %c1_117 = arith.constant 1 : index
    %c4_118 = arith.constant 4 : index
    %220 = memref.load %arg2[%c1_117, %c4_118] : memref<13x27xf32, #tpu.memory_space<smem>>
    %221 = vector.broadcast %220 : f32 to vector<8x8xf32>
    %222 = arith.mulf %221, %214 : vector<8x8xf32>
    %223 = arith.addf %169, %222 : vector<8x8xf32>
    %c2_119 = arith.constant 2 : index
    %c4_120 = arith.constant 4 : index
    %224 = memref.load %arg2[%c2_119, %c4_120] : memref<13x27xf32, #tpu.memory_space<smem>>
    %225 = vector.broadcast %224 : f32 to vector<8x8xf32>
    %226 = arith.mulf %225, %214 : vector<8x8xf32>
    %227 = arith.addf %173, %226 : vector<8x8xf32>
    %c3_121 = arith.constant 3 : index
    %c4_122 = arith.constant 4 : index
    %228 = memref.load %arg2[%c3_121, %c4_122] : memref<13x27xf32, #tpu.memory_space<smem>>
    %229 = vector.broadcast %228 : f32 to vector<8x8xf32>
    %230 = arith.mulf %229, %214 : vector<8x8xf32>
    %231 = arith.addf %177, %230 : vector<8x8xf32>
    %c4_123 = arith.constant 4 : index
    %c4_124 = arith.constant 4 : index
    %232 = memref.load %arg2[%c4_123, %c4_124] : memref<13x27xf32, #tpu.memory_space<smem>>
    %233 = vector.broadcast %232 : f32 to vector<8x8xf32>
    %234 = arith.mulf %233, %214 : vector<8x8xf32>
    %235 = arith.addf %181, %234 : vector<8x8xf32>
    %c5_125 = arith.constant 5 : index
    %c4_126 = arith.constant 4 : index
    %236 = memref.load %arg2[%c5_125, %c4_126] : memref<13x27xf32, #tpu.memory_space<smem>>
    %237 = vector.broadcast %236 : f32 to vector<8x8xf32>
    %238 = arith.mulf %237, %214 : vector<8x8xf32>
    %239 = arith.addf %185, %238 : vector<8x8xf32>
    %c6_127 = arith.constant 6 : index
    %c4_128 = arith.constant 4 : index
    %240 = memref.load %arg2[%c6_127, %c4_128] : memref<13x27xf32, #tpu.memory_space<smem>>
    %241 = vector.broadcast %240 : f32 to vector<8x8xf32>
    %242 = arith.mulf %241, %214 : vector<8x8xf32>
    %243 = arith.addf %189, %242 : vector<8x8xf32>
    %c7_129 = arith.constant 7 : index
    %c4_130 = arith.constant 4 : index
    %244 = memref.load %arg2[%c7_129, %c4_130] : memref<13x27xf32, #tpu.memory_space<smem>>
    %245 = vector.broadcast %244 : f32 to vector<8x8xf32>
    %246 = arith.mulf %245, %214 : vector<8x8xf32>
    %247 = arith.addf %193, %246 : vector<8x8xf32>
    %c8_131 = arith.constant 8 : index
    %c4_132 = arith.constant 4 : index
    %248 = memref.load %arg2[%c8_131, %c4_132] : memref<13x27xf32, #tpu.memory_space<smem>>
    %249 = vector.broadcast %248 : f32 to vector<8x8xf32>
    %250 = arith.mulf %249, %214 : vector<8x8xf32>
    %251 = arith.addf %197, %250 : vector<8x8xf32>
    %c9_133 = arith.constant 9 : index
    %c4_134 = arith.constant 4 : index
    %252 = memref.load %arg2[%c9_133, %c4_134] : memref<13x27xf32, #tpu.memory_space<smem>>
    %253 = vector.broadcast %252 : f32 to vector<8x8xf32>
    %254 = arith.mulf %253, %214 : vector<8x8xf32>
    %255 = arith.addf %201, %254 : vector<8x8xf32>
    %c10_135 = arith.constant 10 : index
    %c4_136 = arith.constant 4 : index
    %256 = memref.load %arg2[%c10_135, %c4_136] : memref<13x27xf32, #tpu.memory_space<smem>>
    %257 = vector.broadcast %256 : f32 to vector<8x8xf32>
    %258 = arith.mulf %257, %214 : vector<8x8xf32>
    %259 = arith.addf %205, %258 : vector<8x8xf32>
    %c11_137 = arith.constant 11 : index
    %c4_138 = arith.constant 4 : index
    %260 = memref.load %arg2[%c11_137, %c4_138] : memref<13x27xf32, #tpu.memory_space<smem>>
    %261 = vector.broadcast %260 : f32 to vector<8x8xf32>
    %262 = arith.mulf %261, %214 : vector<8x8xf32>
    %263 = arith.addf %209, %262 : vector<8x8xf32>
    %c12_139 = arith.constant 12 : index
    %c4_140 = arith.constant 4 : index
    %264 = memref.load %arg2[%c12_139, %c4_140] : memref<13x27xf32, #tpu.memory_space<smem>>
    %265 = vector.broadcast %264 : f32 to vector<8x8xf32>
    %266 = arith.mulf %265, %214 : vector<8x8xf32>
    %267 = arith.addf %213, %266 : vector<8x8xf32>
    %268 = vector.extract_strided_slice %8 {offsets = [0, 1], sizes = [8, 8], strides = [1, 1]} : vector<9x9xf32> to vector<8x8xf32>
    %269 = arith.maximumf %215, %268 : vector<8x8xf32>
    %c0_141 = arith.constant 0 : index
    %c5_142 = arith.constant 5 : index
    %270 = memref.load %arg2[%c0_141, %c5_142] : memref<13x27xf32, #tpu.memory_space<smem>>
    %271 = vector.broadcast %270 : f32 to vector<8x8xf32>
    %272 = arith.mulf %271, %268 : vector<8x8xf32>
    %273 = arith.addf %219, %272 : vector<8x8xf32>
    %c1_143 = arith.constant 1 : index
    %c5_144 = arith.constant 5 : index
    %274 = memref.load %arg2[%c1_143, %c5_144] : memref<13x27xf32, #tpu.memory_space<smem>>
    %275 = vector.broadcast %274 : f32 to vector<8x8xf32>
    %276 = arith.mulf %275, %268 : vector<8x8xf32>
    %277 = arith.addf %223, %276 : vector<8x8xf32>
    %c2_145 = arith.constant 2 : index
    %c5_146 = arith.constant 5 : index
    %278 = memref.load %arg2[%c2_145, %c5_146] : memref<13x27xf32, #tpu.memory_space<smem>>
    %279 = vector.broadcast %278 : f32 to vector<8x8xf32>
    %280 = arith.mulf %279, %268 : vector<8x8xf32>
    %281 = arith.addf %227, %280 : vector<8x8xf32>
    %c3_147 = arith.constant 3 : index
    %c5_148 = arith.constant 5 : index
    %282 = memref.load %arg2[%c3_147, %c5_148] : memref<13x27xf32, #tpu.memory_space<smem>>
    %283 = vector.broadcast %282 : f32 to vector<8x8xf32>
    %284 = arith.mulf %283, %268 : vector<8x8xf32>
    %285 = arith.addf %231, %284 : vector<8x8xf32>
    %c4_149 = arith.constant 4 : index
    %c5_150 = arith.constant 5 : index
    %286 = memref.load %arg2[%c4_149, %c5_150] : memref<13x27xf32, #tpu.memory_space<smem>>
    %287 = vector.broadcast %286 : f32 to vector<8x8xf32>
    %288 = arith.mulf %287, %268 : vector<8x8xf32>
    %289 = arith.addf %235, %288 : vector<8x8xf32>
    %c5_151 = arith.constant 5 : index
    %c5_152 = arith.constant 5 : index
    %290 = memref.load %arg2[%c5_151, %c5_152] : memref<13x27xf32, #tpu.memory_space<smem>>
    %291 = vector.broadcast %290 : f32 to vector<8x8xf32>
    %292 = arith.mulf %291, %268 : vector<8x8xf32>
    %293 = arith.addf %239, %292 : vector<8x8xf32>
    %c6_153 = arith.constant 6 : index
    %c5_154 = arith.constant 5 : index
    %294 = memref.load %arg2[%c6_153, %c5_154] : memref<13x27xf32, #tpu.memory_space<smem>>
    %295 = vector.broadcast %294 : f32 to vector<8x8xf32>
    %296 = arith.mulf %295, %268 : vector<8x8xf32>
    %297 = arith.addf %243, %296 : vector<8x8xf32>
    %c7_155 = arith.constant 7 : index
    %c5_156 = arith.constant 5 : index
    %298 = memref.load %arg2[%c7_155, %c5_156] : memref<13x27xf32, #tpu.memory_space<smem>>
    %299 = vector.broadcast %298 : f32 to vector<8x8xf32>
    %300 = arith.mulf %299, %268 : vector<8x8xf32>
    %301 = arith.addf %247, %300 : vector<8x8xf32>
    %c8_157 = arith.constant 8 : index
    %c5_158 = arith.constant 5 : index
    %302 = memref.load %arg2[%c8_157, %c5_158] : memref<13x27xf32, #tpu.memory_space<smem>>
    %303 = vector.broadcast %302 : f32 to vector<8x8xf32>
    %304 = arith.mulf %303, %268 : vector<8x8xf32>
    %305 = arith.addf %251, %304 : vector<8x8xf32>
    %c9_159 = arith.constant 9 : index
    %c5_160 = arith.constant 5 : index
    %306 = memref.load %arg2[%c9_159, %c5_160] : memref<13x27xf32, #tpu.memory_space<smem>>
    %307 = vector.broadcast %306 : f32 to vector<8x8xf32>
    %308 = arith.mulf %307, %268 : vector<8x8xf32>
    %309 = arith.addf %255, %308 : vector<8x8xf32>
    %c10_161 = arith.constant 10 : index
    %c5_162 = arith.constant 5 : index
    %310 = memref.load %arg2[%c10_161, %c5_162] : memref<13x27xf32, #tpu.memory_space<smem>>
    %311 = vector.broadcast %310 : f32 to vector<8x8xf32>
    %312 = arith.mulf %311, %268 : vector<8x8xf32>
    %313 = arith.addf %259, %312 : vector<8x8xf32>
    %c11_163 = arith.constant 11 : index
    %c5_164 = arith.constant 5 : index
    %314 = memref.load %arg2[%c11_163, %c5_164] : memref<13x27xf32, #tpu.memory_space<smem>>
    %315 = vector.broadcast %314 : f32 to vector<8x8xf32>
    %316 = arith.mulf %315, %268 : vector<8x8xf32>
    %317 = arith.addf %263, %316 : vector<8x8xf32>
    %c12_165 = arith.constant 12 : index
    %c5_166 = arith.constant 5 : index
    %318 = memref.load %arg2[%c12_165, %c5_166] : memref<13x27xf32, #tpu.memory_space<smem>>
    %319 = vector.broadcast %318 : f32 to vector<8x8xf32>
    %320 = arith.mulf %319, %268 : vector<8x8xf32>
    %321 = arith.addf %267, %320 : vector<8x8xf32>
    %322 = vector.extract_strided_slice %2 {offsets = [1, 0], sizes = [8, 8], strides = [1, 1]} : vector<9x9xf32> to vector<8x8xf32>
    %323 = arith.maximumf %269, %322 : vector<8x8xf32>
    %c0_167 = arith.constant 0 : index
    %c6_168 = arith.constant 6 : index
    %324 = memref.load %arg2[%c0_167, %c6_168] : memref<13x27xf32, #tpu.memory_space<smem>>
    %325 = vector.broadcast %324 : f32 to vector<8x8xf32>
    %326 = arith.mulf %325, %322 : vector<8x8xf32>
    %327 = arith.addf %273, %326 : vector<8x8xf32>
    %c1_169 = arith.constant 1 : index
    %c6_170 = arith.constant 6 : index
    %328 = memref.load %arg2[%c1_169, %c6_170] : memref<13x27xf32, #tpu.memory_space<smem>>
    %329 = vector.broadcast %328 : f32 to vector<8x8xf32>
    %330 = arith.mulf %329, %322 : vector<8x8xf32>
    %331 = arith.addf %277, %330 : vector<8x8xf32>
    %c2_171 = arith.constant 2 : index
    %c6_172 = arith.constant 6 : index
    %332 = memref.load %arg2[%c2_171, %c6_172] : memref<13x27xf32, #tpu.memory_space<smem>>
    %333 = vector.broadcast %332 : f32 to vector<8x8xf32>
    %334 = arith.mulf %333, %322 : vector<8x8xf32>
    %335 = arith.addf %281, %334 : vector<8x8xf32>
    %c3_173 = arith.constant 3 : index
    %c6_174 = arith.constant 6 : index
    %336 = memref.load %arg2[%c3_173, %c6_174] : memref<13x27xf32, #tpu.memory_space<smem>>
    %337 = vector.broadcast %336 : f32 to vector<8x8xf32>
    %338 = arith.mulf %337, %322 : vector<8x8xf32>
    %339 = arith.addf %285, %338 : vector<8x8xf32>
    %c4_175 = arith.constant 4 : index
    %c6_176 = arith.constant 6 : index
    %340 = memref.load %arg2[%c4_175, %c6_176] : memref<13x27xf32, #tpu.memory_space<smem>>
    %341 = vector.broadcast %340 : f32 to vector<8x8xf32>
    %342 = arith.mulf %341, %322 : vector<8x8xf32>
    %343 = arith.addf %289, %342 : vector<8x8xf32>
    %c5_177 = arith.constant 5 : index
    %c6_178 = arith.constant 6 : index
    %344 = memref.load %arg2[%c5_177, %c6_178] : memref<13x27xf32, #tpu.memory_space<smem>>
    %345 = vector.broadcast %344 : f32 to vector<8x8xf32>
    %346 = arith.mulf %345, %322 : vector<8x8xf32>
    %347 = arith.addf %293, %346 : vector<8x8xf32>
    %c6_179 = arith.constant 6 : index
    %c6_180 = arith.constant 6 : index
    %348 = memref.load %arg2[%c6_179, %c6_180] : memref<13x27xf32, #tpu.memory_space<smem>>
    %349 = vector.broadcast %348 : f32 to vector<8x8xf32>
    %350 = arith.mulf %349, %322 : vector<8x8xf32>
    %351 = arith.addf %297, %350 : vector<8x8xf32>
    %c7_181 = arith.constant 7 : index
    %c6_182 = arith.constant 6 : index
    %352 = memref.load %arg2[%c7_181, %c6_182] : memref<13x27xf32, #tpu.memory_space<smem>>
    %353 = vector.broadcast %352 : f32 to vector<8x8xf32>
    %354 = arith.mulf %353, %322 : vector<8x8xf32>
    %355 = arith.addf %301, %354 : vector<8x8xf32>
    %c8_183 = arith.constant 8 : index
    %c6_184 = arith.constant 6 : index
    %356 = memref.load %arg2[%c8_183, %c6_184] : memref<13x27xf32, #tpu.memory_space<smem>>
    %357 = vector.broadcast %356 : f32 to vector<8x8xf32>
    %358 = arith.mulf %357, %322 : vector<8x8xf32>
    %359 = arith.addf %305, %358 : vector<8x8xf32>
    %c9_185 = arith.constant 9 : index
    %c6_186 = arith.constant 6 : index
    %360 = memref.load %arg2[%c9_185, %c6_186] : memref<13x27xf32, #tpu.memory_space<smem>>
    %361 = vector.broadcast %360 : f32 to vector<8x8xf32>
    %362 = arith.mulf %361, %322 : vector<8x8xf32>
    %363 = arith.addf %309, %362 : vector<8x8xf32>
    %c10_187 = arith.constant 10 : index
    %c6_188 = arith.constant 6 : index
    %364 = memref.load %arg2[%c10_187, %c6_188] : memref<13x27xf32, #tpu.memory_space<smem>>
    %365 = vector.broadcast %364 : f32 to vector<8x8xf32>
    %366 = arith.mulf %365, %322 : vector<8x8xf32>
    %367 = arith.addf %313, %366 : vector<8x8xf32>
    %c11_189 = arith.constant 11 : index
    %c6_190 = arith.constant 6 : index
    %368 = memref.load %arg2[%c11_189, %c6_190] : memref<13x27xf32, #tpu.memory_space<smem>>
    %369 = vector.broadcast %368 : f32 to vector<8x8xf32>
    %370 = arith.mulf %369, %322 : vector<8x8xf32>
    %371 = arith.addf %317, %370 : vector<8x8xf32>
    %c12_191 = arith.constant 12 : index
    %c6_192 = arith.constant 6 : index
    %372 = memref.load %arg2[%c12_191, %c6_192] : memref<13x27xf32, #tpu.memory_space<smem>>
    %373 = vector.broadcast %372 : f32 to vector<8x8xf32>
    %374 = arith.mulf %373, %322 : vector<8x8xf32>
    %375 = arith.addf %321, %374 : vector<8x8xf32>
    %376 = vector.extract_strided_slice %5 {offsets = [1, 0], sizes = [8, 8], strides = [1, 1]} : vector<9x9xf32> to vector<8x8xf32>
    %377 = arith.maximumf %323, %376 : vector<8x8xf32>
    %c0_193 = arith.constant 0 : index
    %c7_194 = arith.constant 7 : index
    %378 = memref.load %arg2[%c0_193, %c7_194] : memref<13x27xf32, #tpu.memory_space<smem>>
    %379 = vector.broadcast %378 : f32 to vector<8x8xf32>
    %380 = arith.mulf %379, %376 : vector<8x8xf32>
    %381 = arith.addf %327, %380 : vector<8x8xf32>
    %c1_195 = arith.constant 1 : index
    %c7_196 = arith.constant 7 : index
    %382 = memref.load %arg2[%c1_195, %c7_196] : memref<13x27xf32, #tpu.memory_space<smem>>
    %383 = vector.broadcast %382 : f32 to vector<8x8xf32>
    %384 = arith.mulf %383, %376 : vector<8x8xf32>
    %385 = arith.addf %331, %384 : vector<8x8xf32>
    %c2_197 = arith.constant 2 : index
    %c7_198 = arith.constant 7 : index
    %386 = memref.load %arg2[%c2_197, %c7_198] : memref<13x27xf32, #tpu.memory_space<smem>>
    %387 = vector.broadcast %386 : f32 to vector<8x8xf32>
    %388 = arith.mulf %387, %376 : vector<8x8xf32>
    %389 = arith.addf %335, %388 : vector<8x8xf32>
    %c3_199 = arith.constant 3 : index
    %c7_200 = arith.constant 7 : index
    %390 = memref.load %arg2[%c3_199, %c7_200] : memref<13x27xf32, #tpu.memory_space<smem>>
    %391 = vector.broadcast %390 : f32 to vector<8x8xf32>
    %392 = arith.mulf %391, %376 : vector<8x8xf32>
    %393 = arith.addf %339, %392 : vector<8x8xf32>
    %c4_201 = arith.constant 4 : index
    %c7_202 = arith.constant 7 : index
    %394 = memref.load %arg2[%c4_201, %c7_202] : memref<13x27xf32, #tpu.memory_space<smem>>
    %395 = vector.broadcast %394 : f32 to vector<8x8xf32>
    %396 = arith.mulf %395, %376 : vector<8x8xf32>
    %397 = arith.addf %343, %396 : vector<8x8xf32>
    %c5_203 = arith.constant 5 : index
    %c7_204 = arith.constant 7 : index
    %398 = memref.load %arg2[%c5_203, %c7_204] : memref<13x27xf32, #tpu.memory_space<smem>>
    %399 = vector.broadcast %398 : f32 to vector<8x8xf32>
    %400 = arith.mulf %399, %376 : vector<8x8xf32>
    %401 = arith.addf %347, %400 : vector<8x8xf32>
    %c6_205 = arith.constant 6 : index
    %c7_206 = arith.constant 7 : index
    %402 = memref.load %arg2[%c6_205, %c7_206] : memref<13x27xf32, #tpu.memory_space<smem>>
    %403 = vector.broadcast %402 : f32 to vector<8x8xf32>
    %404 = arith.mulf %403, %376 : vector<8x8xf32>
    %405 = arith.addf %351, %404 : vector<8x8xf32>
    %c7_207 = arith.constant 7 : index
    %c7_208 = arith.constant 7 : index
    %406 = memref.load %arg2[%c7_207, %c7_208] : memref<13x27xf32, #tpu.memory_space<smem>>
    %407 = vector.broadcast %406 : f32 to vector<8x8xf32>
    %408 = arith.mulf %407, %376 : vector<8x8xf32>
    %409 = arith.addf %355, %408 : vector<8x8xf32>
    %c8_209 = arith.constant 8 : index
    %c7_210 = arith.constant 7 : index
    %410 = memref.load %arg2[%c8_209, %c7_210] : memref<13x27xf32, #tpu.memory_space<smem>>
    %411 = vector.broadcast %410 : f32 to vector<8x8xf32>
    %412 = arith.mulf %411, %376 : vector<8x8xf32>
    %413 = arith.addf %359, %412 : vector<8x8xf32>
    %c9_211 = arith.constant 9 : index
    %c7_212 = arith.constant 7 : index
    %414 = memref.load %arg2[%c9_211, %c7_212] : memref<13x27xf32, #tpu.memory_space<smem>>
    %415 = vector.broadcast %414 : f32 to vector<8x8xf32>
    %416 = arith.mulf %415, %376 : vector<8x8xf32>
    %417 = arith.addf %363, %416 : vector<8x8xf32>
    %c10_213 = arith.constant 10 : index
    %c7_214 = arith.constant 7 : index
    %418 = memref.load %arg2[%c10_213, %c7_214] : memref<13x27xf32, #tpu.memory_space<smem>>
    %419 = vector.broadcast %418 : f32 to vector<8x8xf32>
    %420 = arith.mulf %419, %376 : vector<8x8xf32>
    %421 = arith.addf %367, %420 : vector<8x8xf32>
    %c11_215 = arith.constant 11 : index
    %c7_216 = arith.constant 7 : index
    %422 = memref.load %arg2[%c11_215, %c7_216] : memref<13x27xf32, #tpu.memory_space<smem>>
    %423 = vector.broadcast %422 : f32 to vector<8x8xf32>
    %424 = arith.mulf %423, %376 : vector<8x8xf32>
    %425 = arith.addf %371, %424 : vector<8x8xf32>
    %c12_217 = arith.constant 12 : index
    %c7_218 = arith.constant 7 : index
    %426 = memref.load %arg2[%c12_217, %c7_218] : memref<13x27xf32, #tpu.memory_space<smem>>
    %427 = vector.broadcast %426 : f32 to vector<8x8xf32>
    %428 = arith.mulf %427, %376 : vector<8x8xf32>
    %429 = arith.addf %375, %428 : vector<8x8xf32>
    %430 = vector.extract_strided_slice %2 {offsets = [1, 1], sizes = [8, 8], strides = [1, 1]} : vector<9x9xf32> to vector<8x8xf32>
    %431 = arith.maximumf %377, %430 : vector<8x8xf32>
    %c0_219 = arith.constant 0 : index
    %c8_220 = arith.constant 8 : index
    %432 = memref.load %arg2[%c0_219, %c8_220] : memref<13x27xf32, #tpu.memory_space<smem>>
    %433 = vector.broadcast %432 : f32 to vector<8x8xf32>
    %434 = arith.mulf %433, %430 : vector<8x8xf32>
    %435 = arith.addf %381, %434 : vector<8x8xf32>
    %c1_221 = arith.constant 1 : index
    %c8_222 = arith.constant 8 : index
    %436 = memref.load %arg2[%c1_221, %c8_222] : memref<13x27xf32, #tpu.memory_space<smem>>
    %437 = vector.broadcast %436 : f32 to vector<8x8xf32>
    %438 = arith.mulf %437, %430 : vector<8x8xf32>
    %439 = arith.addf %385, %438 : vector<8x8xf32>
    %c2_223 = arith.constant 2 : index
    %c8_224 = arith.constant 8 : index
    %440 = memref.load %arg2[%c2_223, %c8_224] : memref<13x27xf32, #tpu.memory_space<smem>>
    %441 = vector.broadcast %440 : f32 to vector<8x8xf32>
    %442 = arith.mulf %441, %430 : vector<8x8xf32>
    %443 = arith.addf %389, %442 : vector<8x8xf32>
    %c3_225 = arith.constant 3 : index
    %c8_226 = arith.constant 8 : index
    %444 = memref.load %arg2[%c3_225, %c8_226] : memref<13x27xf32, #tpu.memory_space<smem>>
    %445 = vector.broadcast %444 : f32 to vector<8x8xf32>
    %446 = arith.mulf %445, %430 : vector<8x8xf32>
    %447 = arith.addf %393, %446 : vector<8x8xf32>
    %c4_227 = arith.constant 4 : index
    %c8_228 = arith.constant 8 : index
    %448 = memref.load %arg2[%c4_227, %c8_228] : memref<13x27xf32, #tpu.memory_space<smem>>
    %449 = vector.broadcast %448 : f32 to vector<8x8xf32>
    %450 = arith.mulf %449, %430 : vector<8x8xf32>
    %451 = arith.addf %397, %450 : vector<8x8xf32>
    %c5_229 = arith.constant 5 : index
    %c8_230 = arith.constant 8 : index
    %452 = memref.load %arg2[%c5_229, %c8_230] : memref<13x27xf32, #tpu.memory_space<smem>>
    %453 = vector.broadcast %452 : f32 to vector<8x8xf32>
    %454 = arith.mulf %453, %430 : vector<8x8xf32>
    %455 = arith.addf %401, %454 : vector<8x8xf32>
    %c6_231 = arith.constant 6 : index
    %c8_232 = arith.constant 8 : index
    %456 = memref.load %arg2[%c6_231, %c8_232] : memref<13x27xf32, #tpu.memory_space<smem>>
    %457 = vector.broadcast %456 : f32 to vector<8x8xf32>
    %458 = arith.mulf %457, %430 : vector<8x8xf32>
    %459 = arith.addf %405, %458 : vector<8x8xf32>
    %c7_233 = arith.constant 7 : index
    %c8_234 = arith.constant 8 : index
    %460 = memref.load %arg2[%c7_233, %c8_234] : memref<13x27xf32, #tpu.memory_space<smem>>
    %461 = vector.broadcast %460 : f32 to vector<8x8xf32>
    %462 = arith.mulf %461, %430 : vector<8x8xf32>
    %463 = arith.addf %409, %462 : vector<8x8xf32>
    %c8_235 = arith.constant 8 : index
    %c8_236 = arith.constant 8 : index
    %464 = memref.load %arg2[%c8_235, %c8_236] : memref<13x27xf32, #tpu.memory_space<smem>>
    %465 = vector.broadcast %464 : f32 to vector<8x8xf32>
    %466 = arith.mulf %465, %430 : vector<8x8xf32>
    %467 = arith.addf %413, %466 : vector<8x8xf32>
    %c9_237 = arith.constant 9 : index
    %c8_238 = arith.constant 8 : index
    %468 = memref.load %arg2[%c9_237, %c8_238] : memref<13x27xf32, #tpu.memory_space<smem>>
    %469 = vector.broadcast %468 : f32 to vector<8x8xf32>
    %470 = arith.mulf %469, %430 : vector<8x8xf32>
    %471 = arith.addf %417, %470 : vector<8x8xf32>
    %c10_239 = arith.constant 10 : index
    %c8_240 = arith.constant 8 : index
    %472 = memref.load %arg2[%c10_239, %c8_240] : memref<13x27xf32, #tpu.memory_space<smem>>
    %473 = vector.broadcast %472 : f32 to vector<8x8xf32>
    %474 = arith.mulf %473, %430 : vector<8x8xf32>
    %475 = arith.addf %421, %474 : vector<8x8xf32>
    %c11_241 = arith.constant 11 : index
    %c8_242 = arith.constant 8 : index
    %476 = memref.load %arg2[%c11_241, %c8_242] : memref<13x27xf32, #tpu.memory_space<smem>>
    %477 = vector.broadcast %476 : f32 to vector<8x8xf32>
    %478 = arith.mulf %477, %430 : vector<8x8xf32>
    %479 = arith.addf %425, %478 : vector<8x8xf32>
    %c12_243 = arith.constant 12 : index
    %c8_244 = arith.constant 8 : index
    %480 = memref.load %arg2[%c12_243, %c8_244] : memref<13x27xf32, #tpu.memory_space<smem>>
    %481 = vector.broadcast %480 : f32 to vector<8x8xf32>
    %482 = arith.mulf %481, %430 : vector<8x8xf32>
    %483 = arith.addf %429, %482 : vector<8x8xf32>
    %c0_245 = arith.constant 0 : index
    %c0_246 = arith.constant 0 : index
    %c0_247 = arith.constant 0 : index
    %c1_248 = arith.constant 1 : index
    %c0_249 = arith.constant 0 : index
    %c0_250 = arith.constant 0 : index
    %484 = vector.load %arg1[%c0_245, %c0_246, %c0_247, %c1_248, %c0_249, %c0_250] : memref<1x2x2x3x9x9xbf16, #tpu.memory_space<vmem>>, vector<1x1x1x1x9x9xbf16>
    %485 = vector.shape_cast %484 : vector<1x1x1x1x9x9xbf16> to vector<9x9xbf16>
    %486 = arith.extf %485 : vector<9x9xbf16> to vector<9x9xf32>
    %c0_251 = arith.constant 0 : index
    %c0_252 = arith.constant 0 : index
    %c1_253 = arith.constant 1 : index
    %c1_254 = arith.constant 1 : index
    %c0_255 = arith.constant 0 : index
    %c0_256 = arith.constant 0 : index
    %487 = vector.load %arg1[%c0_251, %c0_252, %c1_253, %c1_254, %c0_255, %c0_256] : memref<1x2x2x3x9x9xbf16, #tpu.memory_space<vmem>>, vector<1x1x1x1x9x9xbf16>
    %488 = vector.shape_cast %487 : vector<1x1x1x1x9x9xbf16> to vector<9x9xbf16>
    %489 = arith.extf %488 : vector<9x9xbf16> to vector<9x9xf32>
    %c0_257 = arith.constant 0 : index
    %c1_258 = arith.constant 1 : index
    %c0_259 = arith.constant 0 : index
    %c1_260 = arith.constant 1 : index
    %c0_261 = arith.constant 0 : index
    %c0_262 = arith.constant 0 : index
    %490 = vector.load %arg1[%c0_257, %c1_258, %c0_259, %c1_260, %c0_261, %c0_262] : memref<1x2x2x3x9x9xbf16, #tpu.memory_space<vmem>>, vector<1x1x1x1x9x9xbf16>
    %491 = vector.shape_cast %490 : vector<1x1x1x1x9x9xbf16> to vector<9x9xbf16>
    %492 = arith.extf %491 : vector<9x9xbf16> to vector<9x9xf32>
    %c0_263 = arith.constant 0 : index
    %c1_264 = arith.constant 1 : index
    %c1_265 = arith.constant 1 : index
    %c1_266 = arith.constant 1 : index
    %c0_267 = arith.constant 0 : index
    %c0_268 = arith.constant 0 : index
    %493 = vector.load %arg1[%c0_263, %c1_264, %c1_265, %c1_266, %c0_267, %c0_268] : memref<1x2x2x3x9x9xbf16, #tpu.memory_space<vmem>>, vector<1x1x1x1x9x9xbf16>
    %494 = vector.shape_cast %493 : vector<1x1x1x1x9x9xbf16> to vector<9x9xbf16>
    %495 = arith.extf %494 : vector<9x9xbf16> to vector<9x9xf32>
    %496 = vector.extract_strided_slice %486 {offsets = [0, 0], sizes = [8, 8], strides = [1, 1]} : vector<9x9xf32> to vector<8x8xf32>
    %c0_269 = arith.constant 0 : index
    %c9_270 = arith.constant 9 : index
    %497 = memref.load %arg2[%c0_269, %c9_270] : memref<13x27xf32, #tpu.memory_space<smem>>
    %498 = vector.broadcast %497 : f32 to vector<8x8xf32>
    %499 = arith.mulf %498, %496 : vector<8x8xf32>
    %500 = arith.addf %435, %499 : vector<8x8xf32>
    %c1_271 = arith.constant 1 : index
    %c9_272 = arith.constant 9 : index
    %501 = memref.load %arg2[%c1_271, %c9_272] : memref<13x27xf32, #tpu.memory_space<smem>>
    %502 = vector.broadcast %501 : f32 to vector<8x8xf32>
    %503 = arith.mulf %502, %496 : vector<8x8xf32>
    %504 = arith.addf %439, %503 : vector<8x8xf32>
    %c2_273 = arith.constant 2 : index
    %c9_274 = arith.constant 9 : index
    %505 = memref.load %arg2[%c2_273, %c9_274] : memref<13x27xf32, #tpu.memory_space<smem>>
    %506 = vector.broadcast %505 : f32 to vector<8x8xf32>
    %507 = arith.mulf %506, %496 : vector<8x8xf32>
    %508 = arith.addf %443, %507 : vector<8x8xf32>
    %c3_275 = arith.constant 3 : index
    %c9_276 = arith.constant 9 : index
    %509 = memref.load %arg2[%c3_275, %c9_276] : memref<13x27xf32, #tpu.memory_space<smem>>
    %510 = vector.broadcast %509 : f32 to vector<8x8xf32>
    %511 = arith.mulf %510, %496 : vector<8x8xf32>
    %512 = arith.addf %447, %511 : vector<8x8xf32>
    %c4_277 = arith.constant 4 : index
    %c9_278 = arith.constant 9 : index
    %513 = memref.load %arg2[%c4_277, %c9_278] : memref<13x27xf32, #tpu.memory_space<smem>>
    %514 = vector.broadcast %513 : f32 to vector<8x8xf32>
    %515 = arith.mulf %514, %496 : vector<8x8xf32>
    %516 = arith.addf %451, %515 : vector<8x8xf32>
    %c5_279 = arith.constant 5 : index
    %c9_280 = arith.constant 9 : index
    %517 = memref.load %arg2[%c5_279, %c9_280] : memref<13x27xf32, #tpu.memory_space<smem>>
    %518 = vector.broadcast %517 : f32 to vector<8x8xf32>
    %519 = arith.mulf %518, %496 : vector<8x8xf32>
    %520 = arith.addf %455, %519 : vector<8x8xf32>
    %c6_281 = arith.constant 6 : index
    %c9_282 = arith.constant 9 : index
    %521 = memref.load %arg2[%c6_281, %c9_282] : memref<13x27xf32, #tpu.memory_space<smem>>
    %522 = vector.broadcast %521 : f32 to vector<8x8xf32>
    %523 = arith.mulf %522, %496 : vector<8x8xf32>
    %524 = arith.addf %459, %523 : vector<8x8xf32>
    %c7_283 = arith.constant 7 : index
    %c9_284 = arith.constant 9 : index
    %525 = memref.load %arg2[%c7_283, %c9_284] : memref<13x27xf32, #tpu.memory_space<smem>>
    %526 = vector.broadcast %525 : f32 to vector<8x8xf32>
    %527 = arith.mulf %526, %496 : vector<8x8xf32>
    %528 = arith.addf %463, %527 : vector<8x8xf32>
    %c8_285 = arith.constant 8 : index
    %c9_286 = arith.constant 9 : index
    %529 = memref.load %arg2[%c8_285, %c9_286] : memref<13x27xf32, #tpu.memory_space<smem>>
    %530 = vector.broadcast %529 : f32 to vector<8x8xf32>
    %531 = arith.mulf %530, %496 : vector<8x8xf32>
    %532 = arith.addf %467, %531 : vector<8x8xf32>
    %c9_287 = arith.constant 9 : index
    %c9_288 = arith.constant 9 : index
    %533 = memref.load %arg2[%c9_287, %c9_288] : memref<13x27xf32, #tpu.memory_space<smem>>
    %534 = vector.broadcast %533 : f32 to vector<8x8xf32>
    %535 = arith.mulf %534, %496 : vector<8x8xf32>
    %536 = arith.addf %471, %535 : vector<8x8xf32>
    %c10_289 = arith.constant 10 : index
    %c9_290 = arith.constant 9 : index
    %537 = memref.load %arg2[%c10_289, %c9_290] : memref<13x27xf32, #tpu.memory_space<smem>>
    %538 = vector.broadcast %537 : f32 to vector<8x8xf32>
    %539 = arith.mulf %538, %496 : vector<8x8xf32>
    %540 = arith.addf %475, %539 : vector<8x8xf32>
    %c11_291 = arith.constant 11 : index
    %c9_292 = arith.constant 9 : index
    %541 = memref.load %arg2[%c11_291, %c9_292] : memref<13x27xf32, #tpu.memory_space<smem>>
    %542 = vector.broadcast %541 : f32 to vector<8x8xf32>
    %543 = arith.mulf %542, %496 : vector<8x8xf32>
    %544 = arith.addf %479, %543 : vector<8x8xf32>
    %c12_293 = arith.constant 12 : index
    %c9_294 = arith.constant 9 : index
    %545 = memref.load %arg2[%c12_293, %c9_294] : memref<13x27xf32, #tpu.memory_space<smem>>
    %546 = vector.broadcast %545 : f32 to vector<8x8xf32>
    %547 = arith.mulf %546, %496 : vector<8x8xf32>
    %548 = arith.addf %483, %547 : vector<8x8xf32>
    %549 = vector.extract_strided_slice %489 {offsets = [0, 0], sizes = [8, 8], strides = [1, 1]} : vector<9x9xf32> to vector<8x8xf32>
    %550 = arith.maximumf %496, %549 : vector<8x8xf32>
    %c0_295 = arith.constant 0 : index
    %c10_296 = arith.constant 10 : index
    %551 = memref.load %arg2[%c0_295, %c10_296] : memref<13x27xf32, #tpu.memory_space<smem>>
    %552 = vector.broadcast %551 : f32 to vector<8x8xf32>
    %553 = arith.mulf %552, %549 : vector<8x8xf32>
    %554 = arith.addf %500, %553 : vector<8x8xf32>
    %c1_297 = arith.constant 1 : index
    %c10_298 = arith.constant 10 : index
    %555 = memref.load %arg2[%c1_297, %c10_298] : memref<13x27xf32, #tpu.memory_space<smem>>
    %556 = vector.broadcast %555 : f32 to vector<8x8xf32>
    %557 = arith.mulf %556, %549 : vector<8x8xf32>
    %558 = arith.addf %504, %557 : vector<8x8xf32>
    %c2_299 = arith.constant 2 : index
    %c10_300 = arith.constant 10 : index
    %559 = memref.load %arg2[%c2_299, %c10_300] : memref<13x27xf32, #tpu.memory_space<smem>>
    %560 = vector.broadcast %559 : f32 to vector<8x8xf32>
    %561 = arith.mulf %560, %549 : vector<8x8xf32>
    %562 = arith.addf %508, %561 : vector<8x8xf32>
    %c3_301 = arith.constant 3 : index
    %c10_302 = arith.constant 10 : index
    %563 = memref.load %arg2[%c3_301, %c10_302] : memref<13x27xf32, #tpu.memory_space<smem>>
    %564 = vector.broadcast %563 : f32 to vector<8x8xf32>
    %565 = arith.mulf %564, %549 : vector<8x8xf32>
    %566 = arith.addf %512, %565 : vector<8x8xf32>
    %c4_303 = arith.constant 4 : index
    %c10_304 = arith.constant 10 : index
    %567 = memref.load %arg2[%c4_303, %c10_304] : memref<13x27xf32, #tpu.memory_space<smem>>
    %568 = vector.broadcast %567 : f32 to vector<8x8xf32>
    %569 = arith.mulf %568, %549 : vector<8x8xf32>
    %570 = arith.addf %516, %569 : vector<8x8xf32>
    %c5_305 = arith.constant 5 : index
    %c10_306 = arith.constant 10 : index
    %571 = memref.load %arg2[%c5_305, %c10_306] : memref<13x27xf32, #tpu.memory_space<smem>>
    %572 = vector.broadcast %571 : f32 to vector<8x8xf32>
    %573 = arith.mulf %572, %549 : vector<8x8xf32>
    %574 = arith.addf %520, %573 : vector<8x8xf32>
    %c6_307 = arith.constant 6 : index
    %c10_308 = arith.constant 10 : index
    %575 = memref.load %arg2[%c6_307, %c10_308] : memref<13x27xf32, #tpu.memory_space<smem>>
    %576 = vector.broadcast %575 : f32 to vector<8x8xf32>
    %577 = arith.mulf %576, %549 : vector<8x8xf32>
    %578 = arith.addf %524, %577 : vector<8x8xf32>
    %c7_309 = arith.constant 7 : index
    %c10_310 = arith.constant 10 : index
    %579 = memref.load %arg2[%c7_309, %c10_310] : memref<13x27xf32, #tpu.memory_space<smem>>
    %580 = vector.broadcast %579 : f32 to vector<8x8xf32>
    %581 = arith.mulf %580, %549 : vector<8x8xf32>
    %582 = arith.addf %528, %581 : vector<8x8xf32>
    %c8_311 = arith.constant 8 : index
    %c10_312 = arith.constant 10 : index
    %583 = memref.load %arg2[%c8_311, %c10_312] : memref<13x27xf32, #tpu.memory_space<smem>>
    %584 = vector.broadcast %583 : f32 to vector<8x8xf32>
    %585 = arith.mulf %584, %549 : vector<8x8xf32>
    %586 = arith.addf %532, %585 : vector<8x8xf32>
    %c9_313 = arith.constant 9 : index
    %c10_314 = arith.constant 10 : index
    %587 = memref.load %arg2[%c9_313, %c10_314] : memref<13x27xf32, #tpu.memory_space<smem>>
    %588 = vector.broadcast %587 : f32 to vector<8x8xf32>
    %589 = arith.mulf %588, %549 : vector<8x8xf32>
    %590 = arith.addf %536, %589 : vector<8x8xf32>
    %c10_315 = arith.constant 10 : index
    %c10_316 = arith.constant 10 : index
    %591 = memref.load %arg2[%c10_315, %c10_316] : memref<13x27xf32, #tpu.memory_space<smem>>
    %592 = vector.broadcast %591 : f32 to vector<8x8xf32>
    %593 = arith.mulf %592, %549 : vector<8x8xf32>
    %594 = arith.addf %540, %593 : vector<8x8xf32>
    %c11_317 = arith.constant 11 : index
    %c10_318 = arith.constant 10 : index
    %595 = memref.load %arg2[%c11_317, %c10_318] : memref<13x27xf32, #tpu.memory_space<smem>>
    %596 = vector.broadcast %595 : f32 to vector<8x8xf32>
    %597 = arith.mulf %596, %549 : vector<8x8xf32>
    %598 = arith.addf %544, %597 : vector<8x8xf32>
    %c12_319 = arith.constant 12 : index
    %c10_320 = arith.constant 10 : index
    %599 = memref.load %arg2[%c12_319, %c10_320] : memref<13x27xf32, #tpu.memory_space<smem>>
    %600 = vector.broadcast %599 : f32 to vector<8x8xf32>
    %601 = arith.mulf %600, %549 : vector<8x8xf32>
    %602 = arith.addf %548, %601 : vector<8x8xf32>
    %603 = vector.extract_strided_slice %486 {offsets = [0, 1], sizes = [8, 8], strides = [1, 1]} : vector<9x9xf32> to vector<8x8xf32>
    %604 = arith.maximumf %550, %603 : vector<8x8xf32>
    %c0_321 = arith.constant 0 : index
    %c11_322 = arith.constant 11 : index
    %605 = memref.load %arg2[%c0_321, %c11_322] : memref<13x27xf32, #tpu.memory_space<smem>>
    %606 = vector.broadcast %605 : f32 to vector<8x8xf32>
    %607 = arith.mulf %606, %603 : vector<8x8xf32>
    %608 = arith.addf %554, %607 : vector<8x8xf32>
    %c1_323 = arith.constant 1 : index
    %c11_324 = arith.constant 11 : index
    %609 = memref.load %arg2[%c1_323, %c11_324] : memref<13x27xf32, #tpu.memory_space<smem>>
    %610 = vector.broadcast %609 : f32 to vector<8x8xf32>
    %611 = arith.mulf %610, %603 : vector<8x8xf32>
    %612 = arith.addf %558, %611 : vector<8x8xf32>
    %c2_325 = arith.constant 2 : index
    %c11_326 = arith.constant 11 : index
    %613 = memref.load %arg2[%c2_325, %c11_326] : memref<13x27xf32, #tpu.memory_space<smem>>
    %614 = vector.broadcast %613 : f32 to vector<8x8xf32>
    %615 = arith.mulf %614, %603 : vector<8x8xf32>
    %616 = arith.addf %562, %615 : vector<8x8xf32>
    %c3_327 = arith.constant 3 : index
    %c11_328 = arith.constant 11 : index
    %617 = memref.load %arg2[%c3_327, %c11_328] : memref<13x27xf32, #tpu.memory_space<smem>>
    %618 = vector.broadcast %617 : f32 to vector<8x8xf32>
    %619 = arith.mulf %618, %603 : vector<8x8xf32>
    %620 = arith.addf %566, %619 : vector<8x8xf32>
    %c4_329 = arith.constant 4 : index
    %c11_330 = arith.constant 11 : index
    %621 = memref.load %arg2[%c4_329, %c11_330] : memref<13x27xf32, #tpu.memory_space<smem>>
    %622 = vector.broadcast %621 : f32 to vector<8x8xf32>
    %623 = arith.mulf %622, %603 : vector<8x8xf32>
    %624 = arith.addf %570, %623 : vector<8x8xf32>
    %c5_331 = arith.constant 5 : index
    %c11_332 = arith.constant 11 : index
    %625 = memref.load %arg2[%c5_331, %c11_332] : memref<13x27xf32, #tpu.memory_space<smem>>
    %626 = vector.broadcast %625 : f32 to vector<8x8xf32>
    %627 = arith.mulf %626, %603 : vector<8x8xf32>
    %628 = arith.addf %574, %627 : vector<8x8xf32>
    %c6_333 = arith.constant 6 : index
    %c11_334 = arith.constant 11 : index
    %629 = memref.load %arg2[%c6_333, %c11_334] : memref<13x27xf32, #tpu.memory_space<smem>>
    %630 = vector.broadcast %629 : f32 to vector<8x8xf32>
    %631 = arith.mulf %630, %603 : vector<8x8xf32>
    %632 = arith.addf %578, %631 : vector<8x8xf32>
    %c7_335 = arith.constant 7 : index
    %c11_336 = arith.constant 11 : index
    %633 = memref.load %arg2[%c7_335, %c11_336] : memref<13x27xf32, #tpu.memory_space<smem>>
    %634 = vector.broadcast %633 : f32 to vector<8x8xf32>
    %635 = arith.mulf %634, %603 : vector<8x8xf32>
    %636 = arith.addf %582, %635 : vector<8x8xf32>
    %c8_337 = arith.constant 8 : index
    %c11_338 = arith.constant 11 : index
    %637 = memref.load %arg2[%c8_337, %c11_338] : memref<13x27xf32, #tpu.memory_space<smem>>
    %638 = vector.broadcast %637 : f32 to vector<8x8xf32>
    %639 = arith.mulf %638, %603 : vector<8x8xf32>
    %640 = arith.addf %586, %639 : vector<8x8xf32>
    %c9_339 = arith.constant 9 : index
    %c11_340 = arith.constant 11 : index
    %641 = memref.load %arg2[%c9_339, %c11_340] : memref<13x27xf32, #tpu.memory_space<smem>>
    %642 = vector.broadcast %641 : f32 to vector<8x8xf32>
    %643 = arith.mulf %642, %603 : vector<8x8xf32>
    %644 = arith.addf %590, %643 : vector<8x8xf32>
    %c10_341 = arith.constant 10 : index
    %c11_342 = arith.constant 11 : index
    %645 = memref.load %arg2[%c10_341, %c11_342] : memref<13x27xf32, #tpu.memory_space<smem>>
    %646 = vector.broadcast %645 : f32 to vector<8x8xf32>
    %647 = arith.mulf %646, %603 : vector<8x8xf32>
    %648 = arith.addf %594, %647 : vector<8x8xf32>
    %c11_343 = arith.constant 11 : index
    %c11_344 = arith.constant 11 : index
    %649 = memref.load %arg2[%c11_343, %c11_344] : memref<13x27xf32, #tpu.memory_space<smem>>
    %650 = vector.broadcast %649 : f32 to vector<8x8xf32>
    %651 = arith.mulf %650, %603 : vector<8x8xf32>
    %652 = arith.addf %598, %651 : vector<8x8xf32>
    %c12_345 = arith.constant 12 : index
    %c11_346 = arith.constant 11 : index
    %653 = memref.load %arg2[%c12_345, %c11_346] : memref<13x27xf32, #tpu.memory_space<smem>>
    %654 = vector.broadcast %653 : f32 to vector<8x8xf32>
    %655 = arith.mulf %654, %603 : vector<8x8xf32>
    %656 = arith.addf %602, %655 : vector<8x8xf32>
    %657 = vector.extract_strided_slice %492 {offsets = [0, 0], sizes = [8, 8], strides = [1, 1]} : vector<9x9xf32> to vector<8x8xf32>
    %658 = arith.maximumf %604, %657 : vector<8x8xf32>
    %c0_347 = arith.constant 0 : index
    %c12_348 = arith.constant 12 : index
    %659 = memref.load %arg2[%c0_347, %c12_348] : memref<13x27xf32, #tpu.memory_space<smem>>
    %660 = vector.broadcast %659 : f32 to vector<8x8xf32>
    %661 = arith.mulf %660, %657 : vector<8x8xf32>
    %662 = arith.addf %608, %661 : vector<8x8xf32>
    %c1_349 = arith.constant 1 : index
    %c12_350 = arith.constant 12 : index
    %663 = memref.load %arg2[%c1_349, %c12_350] : memref<13x27xf32, #tpu.memory_space<smem>>
    %664 = vector.broadcast %663 : f32 to vector<8x8xf32>
    %665 = arith.mulf %664, %657 : vector<8x8xf32>
    %666 = arith.addf %612, %665 : vector<8x8xf32>
    %c2_351 = arith.constant 2 : index
    %c12_352 = arith.constant 12 : index
    %667 = memref.load %arg2[%c2_351, %c12_352] : memref<13x27xf32, #tpu.memory_space<smem>>
    %668 = vector.broadcast %667 : f32 to vector<8x8xf32>
    %669 = arith.mulf %668, %657 : vector<8x8xf32>
    %670 = arith.addf %616, %669 : vector<8x8xf32>
    %c3_353 = arith.constant 3 : index
    %c12_354 = arith.constant 12 : index
    %671 = memref.load %arg2[%c3_353, %c12_354] : memref<13x27xf32, #tpu.memory_space<smem>>
    %672 = vector.broadcast %671 : f32 to vector<8x8xf32>
    %673 = arith.mulf %672, %657 : vector<8x8xf32>
    %674 = arith.addf %620, %673 : vector<8x8xf32>
    %c4_355 = arith.constant 4 : index
    %c12_356 = arith.constant 12 : index
    %675 = memref.load %arg2[%c4_355, %c12_356] : memref<13x27xf32, #tpu.memory_space<smem>>
    %676 = vector.broadcast %675 : f32 to vector<8x8xf32>
    %677 = arith.mulf %676, %657 : vector<8x8xf32>
    %678 = arith.addf %624, %677 : vector<8x8xf32>
    %c5_357 = arith.constant 5 : index
    %c12_358 = arith.constant 12 : index
    %679 = memref.load %arg2[%c5_357, %c12_358] : memref<13x27xf32, #tpu.memory_space<smem>>
    %680 = vector.broadcast %679 : f32 to vector<8x8xf32>
    %681 = arith.mulf %680, %657 : vector<8x8xf32>
    %682 = arith.addf %628, %681 : vector<8x8xf32>
    %c6_359 = arith.constant 6 : index
    %c12_360 = arith.constant 12 : index
    %683 = memref.load %arg2[%c6_359, %c12_360] : memref<13x27xf32, #tpu.memory_space<smem>>
    %684 = vector.broadcast %683 : f32 to vector<8x8xf32>
    %685 = arith.mulf %684, %657 : vector<8x8xf32>
    %686 = arith.addf %632, %685 : vector<8x8xf32>
    %c7_361 = arith.constant 7 : index
    %c12_362 = arith.constant 12 : index
    %687 = memref.load %arg2[%c7_361, %c12_362] : memref<13x27xf32, #tpu.memory_space<smem>>
    %688 = vector.broadcast %687 : f32 to vector<8x8xf32>
    %689 = arith.mulf %688, %657 : vector<8x8xf32>
    %690 = arith.addf %636, %689 : vector<8x8xf32>
    %c8_363 = arith.constant 8 : index
    %c12_364 = arith.constant 12 : index
    %691 = memref.load %arg2[%c8_363, %c12_364] : memref<13x27xf32, #tpu.memory_space<smem>>
    %692 = vector.broadcast %691 : f32 to vector<8x8xf32>
    %693 = arith.mulf %692, %657 : vector<8x8xf32>
    %694 = arith.addf %640, %693 : vector<8x8xf32>
    %c9_365 = arith.constant 9 : index
    %c12_366 = arith.constant 12 : index
    %695 = memref.load %arg2[%c9_365, %c12_366] : memref<13x27xf32, #tpu.memory_space<smem>>
    %696 = vector.broadcast %695 : f32 to vector<8x8xf32>
    %697 = arith.mulf %696, %657 : vector<8x8xf32>
    %698 = arith.addf %644, %697 : vector<8x8xf32>
    %c10_367 = arith.constant 10 : index
    %c12_368 = arith.constant 12 : index
    %699 = memref.load %arg2[%c10_367, %c12_368] : memref<13x27xf32, #tpu.memory_space<smem>>
    %700 = vector.broadcast %699 : f32 to vector<8x8xf32>
    %701 = arith.mulf %700, %657 : vector<8x8xf32>
    %702 = arith.addf %648, %701 : vector<8x8xf32>
    %c11_369 = arith.constant 11 : index
    %c12_370 = arith.constant 12 : index
    %703 = memref.load %arg2[%c11_369, %c12_370] : memref<13x27xf32, #tpu.memory_space<smem>>
    %704 = vector.broadcast %703 : f32 to vector<8x8xf32>
    %705 = arith.mulf %704, %657 : vector<8x8xf32>
    %706 = arith.addf %652, %705 : vector<8x8xf32>
    %c12_371 = arith.constant 12 : index
    %c12_372 = arith.constant 12 : index
    %707 = memref.load %arg2[%c12_371, %c12_372] : memref<13x27xf32, #tpu.memory_space<smem>>
    %708 = vector.broadcast %707 : f32 to vector<8x8xf32>
    %709 = arith.mulf %708, %657 : vector<8x8xf32>
    %710 = arith.addf %656, %709 : vector<8x8xf32>
    %711 = vector.extract_strided_slice %495 {offsets = [0, 0], sizes = [8, 8], strides = [1, 1]} : vector<9x9xf32> to vector<8x8xf32>
    %712 = arith.maximumf %658, %711 : vector<8x8xf32>
    %c0_373 = arith.constant 0 : index
    %c13 = arith.constant 13 : index
    %713 = memref.load %arg2[%c0_373, %c13] : memref<13x27xf32, #tpu.memory_space<smem>>
    %714 = vector.broadcast %713 : f32 to vector<8x8xf32>
    %715 = arith.mulf %714, %711 : vector<8x8xf32>
    %716 = arith.addf %662, %715 : vector<8x8xf32>
    %c1_374 = arith.constant 1 : index
    %c13_375 = arith.constant 13 : index
    %717 = memref.load %arg2[%c1_374, %c13_375] : memref<13x27xf32, #tpu.memory_space<smem>>
    %718 = vector.broadcast %717 : f32 to vector<8x8xf32>
    %719 = arith.mulf %718, %711 : vector<8x8xf32>
    %720 = arith.addf %666, %719 : vector<8x8xf32>
    %c2_376 = arith.constant 2 : index
    %c13_377 = arith.constant 13 : index
    %721 = memref.load %arg2[%c2_376, %c13_377] : memref<13x27xf32, #tpu.memory_space<smem>>
    %722 = vector.broadcast %721 : f32 to vector<8x8xf32>
    %723 = arith.mulf %722, %711 : vector<8x8xf32>
    %724 = arith.addf %670, %723 : vector<8x8xf32>
    %c3_378 = arith.constant 3 : index
    %c13_379 = arith.constant 13 : index
    %725 = memref.load %arg2[%c3_378, %c13_379] : memref<13x27xf32, #tpu.memory_space<smem>>
    %726 = vector.broadcast %725 : f32 to vector<8x8xf32>
    %727 = arith.mulf %726, %711 : vector<8x8xf32>
    %728 = arith.addf %674, %727 : vector<8x8xf32>
    %c4_380 = arith.constant 4 : index
    %c13_381 = arith.constant 13 : index
    %729 = memref.load %arg2[%c4_380, %c13_381] : memref<13x27xf32, #tpu.memory_space<smem>>
    %730 = vector.broadcast %729 : f32 to vector<8x8xf32>
    %731 = arith.mulf %730, %711 : vector<8x8xf32>
    %732 = arith.addf %678, %731 : vector<8x8xf32>
    %c5_382 = arith.constant 5 : index
    %c13_383 = arith.constant 13 : index
    %733 = memref.load %arg2[%c5_382, %c13_383] : memref<13x27xf32, #tpu.memory_space<smem>>
    %734 = vector.broadcast %733 : f32 to vector<8x8xf32>
    %735 = arith.mulf %734, %711 : vector<8x8xf32>
    %736 = arith.addf %682, %735 : vector<8x8xf32>
    %c6_384 = arith.constant 6 : index
    %c13_385 = arith.constant 13 : index
    %737 = memref.load %arg2[%c6_384, %c13_385] : memref<13x27xf32, #tpu.memory_space<smem>>
    %738 = vector.broadcast %737 : f32 to vector<8x8xf32>
    %739 = arith.mulf %738, %711 : vector<8x8xf32>
    %740 = arith.addf %686, %739 : vector<8x8xf32>
    %c7_386 = arith.constant 7 : index
    %c13_387 = arith.constant 13 : index
    %741 = memref.load %arg2[%c7_386, %c13_387] : memref<13x27xf32, #tpu.memory_space<smem>>
    %742 = vector.broadcast %741 : f32 to vector<8x8xf32>
    %743 = arith.mulf %742, %711 : vector<8x8xf32>
    %744 = arith.addf %690, %743 : vector<8x8xf32>
    %c8_388 = arith.constant 8 : index
    %c13_389 = arith.constant 13 : index
    %745 = memref.load %arg2[%c8_388, %c13_389] : memref<13x27xf32, #tpu.memory_space<smem>>
    %746 = vector.broadcast %745 : f32 to vector<8x8xf32>
    %747 = arith.mulf %746, %711 : vector<8x8xf32>
    %748 = arith.addf %694, %747 : vector<8x8xf32>
    %c9_390 = arith.constant 9 : index
    %c13_391 = arith.constant 13 : index
    %749 = memref.load %arg2[%c9_390, %c13_391] : memref<13x27xf32, #tpu.memory_space<smem>>
    %750 = vector.broadcast %749 : f32 to vector<8x8xf32>
    %751 = arith.mulf %750, %711 : vector<8x8xf32>
    %752 = arith.addf %698, %751 : vector<8x8xf32>
    %c10_392 = arith.constant 10 : index
    %c13_393 = arith.constant 13 : index
    %753 = memref.load %arg2[%c10_392, %c13_393] : memref<13x27xf32, #tpu.memory_space<smem>>
    %754 = vector.broadcast %753 : f32 to vector<8x8xf32>
    %755 = arith.mulf %754, %711 : vector<8x8xf32>
    %756 = arith.addf %702, %755 : vector<8x8xf32>
    %c11_394 = arith.constant 11 : index
    %c13_395 = arith.constant 13 : index
    %757 = memref.load %arg2[%c11_394, %c13_395] : memref<13x27xf32, #tpu.memory_space<smem>>
    %758 = vector.broadcast %757 : f32 to vector<8x8xf32>
    %759 = arith.mulf %758, %711 : vector<8x8xf32>
    %760 = arith.addf %706, %759 : vector<8x8xf32>
    %c12_396 = arith.constant 12 : index
    %c13_397 = arith.constant 13 : index
    %761 = memref.load %arg2[%c12_396, %c13_397] : memref<13x27xf32, #tpu.memory_space<smem>>
    %762 = vector.broadcast %761 : f32 to vector<8x8xf32>
    %763 = arith.mulf %762, %711 : vector<8x8xf32>
    %764 = arith.addf %710, %763 : vector<8x8xf32>
    %765 = vector.extract_strided_slice %492 {offsets = [0, 1], sizes = [8, 8], strides = [1, 1]} : vector<9x9xf32> to vector<8x8xf32>
    %766 = arith.maximumf %712, %765 : vector<8x8xf32>
    %c0_398 = arith.constant 0 : index
    %c14 = arith.constant 14 : index
    %767 = memref.load %arg2[%c0_398, %c14] : memref<13x27xf32, #tpu.memory_space<smem>>
    %768 = vector.broadcast %767 : f32 to vector<8x8xf32>
    %769 = arith.mulf %768, %765 : vector<8x8xf32>
    %770 = arith.addf %716, %769 : vector<8x8xf32>
    %c1_399 = arith.constant 1 : index
    %c14_400 = arith.constant 14 : index
    %771 = memref.load %arg2[%c1_399, %c14_400] : memref<13x27xf32, #tpu.memory_space<smem>>
    %772 = vector.broadcast %771 : f32 to vector<8x8xf32>
    %773 = arith.mulf %772, %765 : vector<8x8xf32>
    %774 = arith.addf %720, %773 : vector<8x8xf32>
    %c2_401 = arith.constant 2 : index
    %c14_402 = arith.constant 14 : index
    %775 = memref.load %arg2[%c2_401, %c14_402] : memref<13x27xf32, #tpu.memory_space<smem>>
    %776 = vector.broadcast %775 : f32 to vector<8x8xf32>
    %777 = arith.mulf %776, %765 : vector<8x8xf32>
    %778 = arith.addf %724, %777 : vector<8x8xf32>
    %c3_403 = arith.constant 3 : index
    %c14_404 = arith.constant 14 : index
    %779 = memref.load %arg2[%c3_403, %c14_404] : memref<13x27xf32, #tpu.memory_space<smem>>
    %780 = vector.broadcast %779 : f32 to vector<8x8xf32>
    %781 = arith.mulf %780, %765 : vector<8x8xf32>
    %782 = arith.addf %728, %781 : vector<8x8xf32>
    %c4_405 = arith.constant 4 : index
    %c14_406 = arith.constant 14 : index
    %783 = memref.load %arg2[%c4_405, %c14_406] : memref<13x27xf32, #tpu.memory_space<smem>>
    %784 = vector.broadcast %783 : f32 to vector<8x8xf32>
    %785 = arith.mulf %784, %765 : vector<8x8xf32>
    %786 = arith.addf %732, %785 : vector<8x8xf32>
    %c5_407 = arith.constant 5 : index
    %c14_408 = arith.constant 14 : index
    %787 = memref.load %arg2[%c5_407, %c14_408] : memref<13x27xf32, #tpu.memory_space<smem>>
    %788 = vector.broadcast %787 : f32 to vector<8x8xf32>
    %789 = arith.mulf %788, %765 : vector<8x8xf32>
    %790 = arith.addf %736, %789 : vector<8x8xf32>
    %c6_409 = arith.constant 6 : index
    %c14_410 = arith.constant 14 : index
    %791 = memref.load %arg2[%c6_409, %c14_410] : memref<13x27xf32, #tpu.memory_space<smem>>
    %792 = vector.broadcast %791 : f32 to vector<8x8xf32>
    %793 = arith.mulf %792, %765 : vector<8x8xf32>
    %794 = arith.addf %740, %793 : vector<8x8xf32>
    %c7_411 = arith.constant 7 : index
    %c14_412 = arith.constant 14 : index
    %795 = memref.load %arg2[%c7_411, %c14_412] : memref<13x27xf32, #tpu.memory_space<smem>>
    %796 = vector.broadcast %795 : f32 to vector<8x8xf32>
    %797 = arith.mulf %796, %765 : vector<8x8xf32>
    %798 = arith.addf %744, %797 : vector<8x8xf32>
    %c8_413 = arith.constant 8 : index
    %c14_414 = arith.constant 14 : index
    %799 = memref.load %arg2[%c8_413, %c14_414] : memref<13x27xf32, #tpu.memory_space<smem>>
    %800 = vector.broadcast %799 : f32 to vector<8x8xf32>
    %801 = arith.mulf %800, %765 : vector<8x8xf32>
    %802 = arith.addf %748, %801 : vector<8x8xf32>
    %c9_415 = arith.constant 9 : index
    %c14_416 = arith.constant 14 : index
    %803 = memref.load %arg2[%c9_415, %c14_416] : memref<13x27xf32, #tpu.memory_space<smem>>
    %804 = vector.broadcast %803 : f32 to vector<8x8xf32>
    %805 = arith.mulf %804, %765 : vector<8x8xf32>
    %806 = arith.addf %752, %805 : vector<8x8xf32>
    %c10_417 = arith.constant 10 : index
    %c14_418 = arith.constant 14 : index
    %807 = memref.load %arg2[%c10_417, %c14_418] : memref<13x27xf32, #tpu.memory_space<smem>>
    %808 = vector.broadcast %807 : f32 to vector<8x8xf32>
    %809 = arith.mulf %808, %765 : vector<8x8xf32>
    %810 = arith.addf %756, %809 : vector<8x8xf32>
    %c11_419 = arith.constant 11 : index
    %c14_420 = arith.constant 14 : index
    %811 = memref.load %arg2[%c11_419, %c14_420] : memref<13x27xf32, #tpu.memory_space<smem>>
    %812 = vector.broadcast %811 : f32 to vector<8x8xf32>
    %813 = arith.mulf %812, %765 : vector<8x8xf32>
    %814 = arith.addf %760, %813 : vector<8x8xf32>
    %c12_421 = arith.constant 12 : index
    %c14_422 = arith.constant 14 : index
    %815 = memref.load %arg2[%c12_421, %c14_422] : memref<13x27xf32, #tpu.memory_space<smem>>
    %816 = vector.broadcast %815 : f32 to vector<8x8xf32>
    %817 = arith.mulf %816, %765 : vector<8x8xf32>
    %818 = arith.addf %764, %817 : vector<8x8xf32>
    %819 = vector.extract_strided_slice %486 {offsets = [1, 0], sizes = [8, 8], strides = [1, 1]} : vector<9x9xf32> to vector<8x8xf32>
    %820 = arith.maximumf %766, %819 : vector<8x8xf32>
    %c0_423 = arith.constant 0 : index
    %c15 = arith.constant 15 : index
    %821 = memref.load %arg2[%c0_423, %c15] : memref<13x27xf32, #tpu.memory_space<smem>>
    %822 = vector.broadcast %821 : f32 to vector<8x8xf32>
    %823 = arith.mulf %822, %819 : vector<8x8xf32>
    %824 = arith.addf %770, %823 : vector<8x8xf32>
    %c1_424 = arith.constant 1 : index
    %c15_425 = arith.constant 15 : index
    %825 = memref.load %arg2[%c1_424, %c15_425] : memref<13x27xf32, #tpu.memory_space<smem>>
    %826 = vector.broadcast %825 : f32 to vector<8x8xf32>
    %827 = arith.mulf %826, %819 : vector<8x8xf32>
    %828 = arith.addf %774, %827 : vector<8x8xf32>
    %c2_426 = arith.constant 2 : index
    %c15_427 = arith.constant 15 : index
    %829 = memref.load %arg2[%c2_426, %c15_427] : memref<13x27xf32, #tpu.memory_space<smem>>
    %830 = vector.broadcast %829 : f32 to vector<8x8xf32>
    %831 = arith.mulf %830, %819 : vector<8x8xf32>
    %832 = arith.addf %778, %831 : vector<8x8xf32>
    %c3_428 = arith.constant 3 : index
    %c15_429 = arith.constant 15 : index
    %833 = memref.load %arg2[%c3_428, %c15_429] : memref<13x27xf32, #tpu.memory_space<smem>>
    %834 = vector.broadcast %833 : f32 to vector<8x8xf32>
    %835 = arith.mulf %834, %819 : vector<8x8xf32>
    %836 = arith.addf %782, %835 : vector<8x8xf32>
    %c4_430 = arith.constant 4 : index
    %c15_431 = arith.constant 15 : index
    %837 = memref.load %arg2[%c4_430, %c15_431] : memref<13x27xf32, #tpu.memory_space<smem>>
    %838 = vector.broadcast %837 : f32 to vector<8x8xf32>
    %839 = arith.mulf %838, %819 : vector<8x8xf32>
    %840 = arith.addf %786, %839 : vector<8x8xf32>
    %c5_432 = arith.constant 5 : index
    %c15_433 = arith.constant 15 : index
    %841 = memref.load %arg2[%c5_432, %c15_433] : memref<13x27xf32, #tpu.memory_space<smem>>
    %842 = vector.broadcast %841 : f32 to vector<8x8xf32>
    %843 = arith.mulf %842, %819 : vector<8x8xf32>
    %844 = arith.addf %790, %843 : vector<8x8xf32>
    %c6_434 = arith.constant 6 : index
    %c15_435 = arith.constant 15 : index
    %845 = memref.load %arg2[%c6_434, %c15_435] : memref<13x27xf32, #tpu.memory_space<smem>>
    %846 = vector.broadcast %845 : f32 to vector<8x8xf32>
    %847 = arith.mulf %846, %819 : vector<8x8xf32>
    %848 = arith.addf %794, %847 : vector<8x8xf32>
    %c7_436 = arith.constant 7 : index
    %c15_437 = arith.constant 15 : index
    %849 = memref.load %arg2[%c7_436, %c15_437] : memref<13x27xf32, #tpu.memory_space<smem>>
    %850 = vector.broadcast %849 : f32 to vector<8x8xf32>
    %851 = arith.mulf %850, %819 : vector<8x8xf32>
    %852 = arith.addf %798, %851 : vector<8x8xf32>
    %c8_438 = arith.constant 8 : index
    %c15_439 = arith.constant 15 : index
    %853 = memref.load %arg2[%c8_438, %c15_439] : memref<13x27xf32, #tpu.memory_space<smem>>
    %854 = vector.broadcast %853 : f32 to vector<8x8xf32>
    %855 = arith.mulf %854, %819 : vector<8x8xf32>
    %856 = arith.addf %802, %855 : vector<8x8xf32>
    %c9_440 = arith.constant 9 : index
    %c15_441 = arith.constant 15 : index
    %857 = memref.load %arg2[%c9_440, %c15_441] : memref<13x27xf32, #tpu.memory_space<smem>>
    %858 = vector.broadcast %857 : f32 to vector<8x8xf32>
    %859 = arith.mulf %858, %819 : vector<8x8xf32>
    %860 = arith.addf %806, %859 : vector<8x8xf32>
    %c10_442 = arith.constant 10 : index
    %c15_443 = arith.constant 15 : index
    %861 = memref.load %arg2[%c10_442, %c15_443] : memref<13x27xf32, #tpu.memory_space<smem>>
    %862 = vector.broadcast %861 : f32 to vector<8x8xf32>
    %863 = arith.mulf %862, %819 : vector<8x8xf32>
    %864 = arith.addf %810, %863 : vector<8x8xf32>
    %c11_444 = arith.constant 11 : index
    %c15_445 = arith.constant 15 : index
    %865 = memref.load %arg2[%c11_444, %c15_445] : memref<13x27xf32, #tpu.memory_space<smem>>
    %866 = vector.broadcast %865 : f32 to vector<8x8xf32>
    %867 = arith.mulf %866, %819 : vector<8x8xf32>
    %868 = arith.addf %814, %867 : vector<8x8xf32>
    %c12_446 = arith.constant 12 : index
    %c15_447 = arith.constant 15 : index
    %869 = memref.load %arg2[%c12_446, %c15_447] : memref<13x27xf32, #tpu.memory_space<smem>>
    %870 = vector.broadcast %869 : f32 to vector<8x8xf32>
    %871 = arith.mulf %870, %819 : vector<8x8xf32>
    %872 = arith.addf %818, %871 : vector<8x8xf32>
    %873 = vector.extract_strided_slice %489 {offsets = [1, 0], sizes = [8, 8], strides = [1, 1]} : vector<9x9xf32> to vector<8x8xf32>
    %874 = arith.maximumf %820, %873 : vector<8x8xf32>
    %c0_448 = arith.constant 0 : index
    %c16 = arith.constant 16 : index
    %875 = memref.load %arg2[%c0_448, %c16] : memref<13x27xf32, #tpu.memory_space<smem>>
    %876 = vector.broadcast %875 : f32 to vector<8x8xf32>
    %877 = arith.mulf %876, %873 : vector<8x8xf32>
    %878 = arith.addf %824, %877 : vector<8x8xf32>
    %c1_449 = arith.constant 1 : index
    %c16_450 = arith.constant 16 : index
    %879 = memref.load %arg2[%c1_449, %c16_450] : memref<13x27xf32, #tpu.memory_space<smem>>
    %880 = vector.broadcast %879 : f32 to vector<8x8xf32>
    %881 = arith.mulf %880, %873 : vector<8x8xf32>
    %882 = arith.addf %828, %881 : vector<8x8xf32>
    %c2_451 = arith.constant 2 : index
    %c16_452 = arith.constant 16 : index
    %883 = memref.load %arg2[%c2_451, %c16_452] : memref<13x27xf32, #tpu.memory_space<smem>>
    %884 = vector.broadcast %883 : f32 to vector<8x8xf32>
    %885 = arith.mulf %884, %873 : vector<8x8xf32>
    %886 = arith.addf %832, %885 : vector<8x8xf32>
    %c3_453 = arith.constant 3 : index
    %c16_454 = arith.constant 16 : index
    %887 = memref.load %arg2[%c3_453, %c16_454] : memref<13x27xf32, #tpu.memory_space<smem>>
    %888 = vector.broadcast %887 : f32 to vector<8x8xf32>
    %889 = arith.mulf %888, %873 : vector<8x8xf32>
    %890 = arith.addf %836, %889 : vector<8x8xf32>
    %c4_455 = arith.constant 4 : index
    %c16_456 = arith.constant 16 : index
    %891 = memref.load %arg2[%c4_455, %c16_456] : memref<13x27xf32, #tpu.memory_space<smem>>
    %892 = vector.broadcast %891 : f32 to vector<8x8xf32>
    %893 = arith.mulf %892, %873 : vector<8x8xf32>
    %894 = arith.addf %840, %893 : vector<8x8xf32>
    %c5_457 = arith.constant 5 : index
    %c16_458 = arith.constant 16 : index
    %895 = memref.load %arg2[%c5_457, %c16_458] : memref<13x27xf32, #tpu.memory_space<smem>>
    %896 = vector.broadcast %895 : f32 to vector<8x8xf32>
    %897 = arith.mulf %896, %873 : vector<8x8xf32>
    %898 = arith.addf %844, %897 : vector<8x8xf32>
    %c6_459 = arith.constant 6 : index
    %c16_460 = arith.constant 16 : index
    %899 = memref.load %arg2[%c6_459, %c16_460] : memref<13x27xf32, #tpu.memory_space<smem>>
    %900 = vector.broadcast %899 : f32 to vector<8x8xf32>
    %901 = arith.mulf %900, %873 : vector<8x8xf32>
    %902 = arith.addf %848, %901 : vector<8x8xf32>
    %c7_461 = arith.constant 7 : index
    %c16_462 = arith.constant 16 : index
    %903 = memref.load %arg2[%c7_461, %c16_462] : memref<13x27xf32, #tpu.memory_space<smem>>
    %904 = vector.broadcast %903 : f32 to vector<8x8xf32>
    %905 = arith.mulf %904, %873 : vector<8x8xf32>
    %906 = arith.addf %852, %905 : vector<8x8xf32>
    %c8_463 = arith.constant 8 : index
    %c16_464 = arith.constant 16 : index
    %907 = memref.load %arg2[%c8_463, %c16_464] : memref<13x27xf32, #tpu.memory_space<smem>>
    %908 = vector.broadcast %907 : f32 to vector<8x8xf32>
    %909 = arith.mulf %908, %873 : vector<8x8xf32>
    %910 = arith.addf %856, %909 : vector<8x8xf32>
    %c9_465 = arith.constant 9 : index
    %c16_466 = arith.constant 16 : index
    %911 = memref.load %arg2[%c9_465, %c16_466] : memref<13x27xf32, #tpu.memory_space<smem>>
    %912 = vector.broadcast %911 : f32 to vector<8x8xf32>
    %913 = arith.mulf %912, %873 : vector<8x8xf32>
    %914 = arith.addf %860, %913 : vector<8x8xf32>
    %c10_467 = arith.constant 10 : index
    %c16_468 = arith.constant 16 : index
    %915 = memref.load %arg2[%c10_467, %c16_468] : memref<13x27xf32, #tpu.memory_space<smem>>
    %916 = vector.broadcast %915 : f32 to vector<8x8xf32>
    %917 = arith.mulf %916, %873 : vector<8x8xf32>
    %918 = arith.addf %864, %917 : vector<8x8xf32>
    %c11_469 = arith.constant 11 : index
    %c16_470 = arith.constant 16 : index
    %919 = memref.load %arg2[%c11_469, %c16_470] : memref<13x27xf32, #tpu.memory_space<smem>>
    %920 = vector.broadcast %919 : f32 to vector<8x8xf32>
    %921 = arith.mulf %920, %873 : vector<8x8xf32>
    %922 = arith.addf %868, %921 : vector<8x8xf32>
    %c12_471 = arith.constant 12 : index
    %c16_472 = arith.constant 16 : index
    %923 = memref.load %arg2[%c12_471, %c16_472] : memref<13x27xf32, #tpu.memory_space<smem>>
    %924 = vector.broadcast %923 : f32 to vector<8x8xf32>
    %925 = arith.mulf %924, %873 : vector<8x8xf32>
    %926 = arith.addf %872, %925 : vector<8x8xf32>
    %927 = vector.extract_strided_slice %486 {offsets = [1, 1], sizes = [8, 8], strides = [1, 1]} : vector<9x9xf32> to vector<8x8xf32>
    %928 = arith.maximumf %874, %927 : vector<8x8xf32>
    %c0_473 = arith.constant 0 : index
    %c17 = arith.constant 17 : index
    %929 = memref.load %arg2[%c0_473, %c17] : memref<13x27xf32, #tpu.memory_space<smem>>
    %930 = vector.broadcast %929 : f32 to vector<8x8xf32>
    %931 = arith.mulf %930, %927 : vector<8x8xf32>
    %932 = arith.addf %878, %931 : vector<8x8xf32>
    %c1_474 = arith.constant 1 : index
    %c17_475 = arith.constant 17 : index
    %933 = memref.load %arg2[%c1_474, %c17_475] : memref<13x27xf32, #tpu.memory_space<smem>>
    %934 = vector.broadcast %933 : f32 to vector<8x8xf32>
    %935 = arith.mulf %934, %927 : vector<8x8xf32>
    %936 = arith.addf %882, %935 : vector<8x8xf32>
    %c2_476 = arith.constant 2 : index
    %c17_477 = arith.constant 17 : index
    %937 = memref.load %arg2[%c2_476, %c17_477] : memref<13x27xf32, #tpu.memory_space<smem>>
    %938 = vector.broadcast %937 : f32 to vector<8x8xf32>
    %939 = arith.mulf %938, %927 : vector<8x8xf32>
    %940 = arith.addf %886, %939 : vector<8x8xf32>
    %c3_478 = arith.constant 3 : index
    %c17_479 = arith.constant 17 : index
    %941 = memref.load %arg2[%c3_478, %c17_479] : memref<13x27xf32, #tpu.memory_space<smem>>
    %942 = vector.broadcast %941 : f32 to vector<8x8xf32>
    %943 = arith.mulf %942, %927 : vector<8x8xf32>
    %944 = arith.addf %890, %943 : vector<8x8xf32>
    %c4_480 = arith.constant 4 : index
    %c17_481 = arith.constant 17 : index
    %945 = memref.load %arg2[%c4_480, %c17_481] : memref<13x27xf32, #tpu.memory_space<smem>>
    %946 = vector.broadcast %945 : f32 to vector<8x8xf32>
    %947 = arith.mulf %946, %927 : vector<8x8xf32>
    %948 = arith.addf %894, %947 : vector<8x8xf32>
    %c5_482 = arith.constant 5 : index
    %c17_483 = arith.constant 17 : index
    %949 = memref.load %arg2[%c5_482, %c17_483] : memref<13x27xf32, #tpu.memory_space<smem>>
    %950 = vector.broadcast %949 : f32 to vector<8x8xf32>
    %951 = arith.mulf %950, %927 : vector<8x8xf32>
    %952 = arith.addf %898, %951 : vector<8x8xf32>
    %c6_484 = arith.constant 6 : index
    %c17_485 = arith.constant 17 : index
    %953 = memref.load %arg2[%c6_484, %c17_485] : memref<13x27xf32, #tpu.memory_space<smem>>
    %954 = vector.broadcast %953 : f32 to vector<8x8xf32>
    %955 = arith.mulf %954, %927 : vector<8x8xf32>
    %956 = arith.addf %902, %955 : vector<8x8xf32>
    %c7_486 = arith.constant 7 : index
    %c17_487 = arith.constant 17 : index
    %957 = memref.load %arg2[%c7_486, %c17_487] : memref<13x27xf32, #tpu.memory_space<smem>>
    %958 = vector.broadcast %957 : f32 to vector<8x8xf32>
    %959 = arith.mulf %958, %927 : vector<8x8xf32>
    %960 = arith.addf %906, %959 : vector<8x8xf32>
    %c8_488 = arith.constant 8 : index
    %c17_489 = arith.constant 17 : index
    %961 = memref.load %arg2[%c8_488, %c17_489] : memref<13x27xf32, #tpu.memory_space<smem>>
    %962 = vector.broadcast %961 : f32 to vector<8x8xf32>
    %963 = arith.mulf %962, %927 : vector<8x8xf32>
    %964 = arith.addf %910, %963 : vector<8x8xf32>
    %c9_490 = arith.constant 9 : index
    %c17_491 = arith.constant 17 : index
    %965 = memref.load %arg2[%c9_490, %c17_491] : memref<13x27xf32, #tpu.memory_space<smem>>
    %966 = vector.broadcast %965 : f32 to vector<8x8xf32>
    %967 = arith.mulf %966, %927 : vector<8x8xf32>
    %968 = arith.addf %914, %967 : vector<8x8xf32>
    %c10_492 = arith.constant 10 : index
    %c17_493 = arith.constant 17 : index
    %969 = memref.load %arg2[%c10_492, %c17_493] : memref<13x27xf32, #tpu.memory_space<smem>>
    %970 = vector.broadcast %969 : f32 to vector<8x8xf32>
    %971 = arith.mulf %970, %927 : vector<8x8xf32>
    %972 = arith.addf %918, %971 : vector<8x8xf32>
    %c11_494 = arith.constant 11 : index
    %c17_495 = arith.constant 17 : index
    %973 = memref.load %arg2[%c11_494, %c17_495] : memref<13x27xf32, #tpu.memory_space<smem>>
    %974 = vector.broadcast %973 : f32 to vector<8x8xf32>
    %975 = arith.mulf %974, %927 : vector<8x8xf32>
    %976 = arith.addf %922, %975 : vector<8x8xf32>
    %c12_496 = arith.constant 12 : index
    %c17_497 = arith.constant 17 : index
    %977 = memref.load %arg2[%c12_496, %c17_497] : memref<13x27xf32, #tpu.memory_space<smem>>
    %978 = vector.broadcast %977 : f32 to vector<8x8xf32>
    %979 = arith.mulf %978, %927 : vector<8x8xf32>
    %980 = arith.addf %926, %979 : vector<8x8xf32>
    %c0_498 = arith.constant 0 : index
    %c0_499 = arith.constant 0 : index
    %c0_500 = arith.constant 0 : index
    %c2_501 = arith.constant 2 : index
    %c0_502 = arith.constant 0 : index
    %c0_503 = arith.constant 0 : index
    %981 = vector.load %arg1[%c0_498, %c0_499, %c0_500, %c2_501, %c0_502, %c0_503] : memref<1x2x2x3x9x9xbf16, #tpu.memory_space<vmem>>, vector<1x1x1x1x9x9xbf16>
    %982 = vector.shape_cast %981 : vector<1x1x1x1x9x9xbf16> to vector<9x9xbf16>
    %983 = arith.extf %982 : vector<9x9xbf16> to vector<9x9xf32>
    %c0_504 = arith.constant 0 : index
    %c0_505 = arith.constant 0 : index
    %c1_506 = arith.constant 1 : index
    %c2_507 = arith.constant 2 : index
    %c0_508 = arith.constant 0 : index
    %c0_509 = arith.constant 0 : index
    %984 = vector.load %arg1[%c0_504, %c0_505, %c1_506, %c2_507, %c0_508, %c0_509] : memref<1x2x2x3x9x9xbf16, #tpu.memory_space<vmem>>, vector<1x1x1x1x9x9xbf16>
    %985 = vector.shape_cast %984 : vector<1x1x1x1x9x9xbf16> to vector<9x9xbf16>
    %986 = arith.extf %985 : vector<9x9xbf16> to vector<9x9xf32>
    %c0_510 = arith.constant 0 : index
    %c1_511 = arith.constant 1 : index
    %c0_512 = arith.constant 0 : index
    %c2_513 = arith.constant 2 : index
    %c0_514 = arith.constant 0 : index
    %c0_515 = arith.constant 0 : index
    %987 = vector.load %arg1[%c0_510, %c1_511, %c0_512, %c2_513, %c0_514, %c0_515] : memref<1x2x2x3x9x9xbf16, #tpu.memory_space<vmem>>, vector<1x1x1x1x9x9xbf16>
    %988 = vector.shape_cast %987 : vector<1x1x1x1x9x9xbf16> to vector<9x9xbf16>
    %989 = arith.extf %988 : vector<9x9xbf16> to vector<9x9xf32>
    %c0_516 = arith.constant 0 : index
    %c1_517 = arith.constant 1 : index
    %c1_518 = arith.constant 1 : index
    %c2_519 = arith.constant 2 : index
    %c0_520 = arith.constant 0 : index
    %c0_521 = arith.constant 0 : index
    %990 = vector.load %arg1[%c0_516, %c1_517, %c1_518, %c2_519, %c0_520, %c0_521] : memref<1x2x2x3x9x9xbf16, #tpu.memory_space<vmem>>, vector<1x1x1x1x9x9xbf16>
    %991 = vector.shape_cast %990 : vector<1x1x1x1x9x9xbf16> to vector<9x9xbf16>
    %992 = arith.extf %991 : vector<9x9xbf16> to vector<9x9xf32>
    %993 = vector.extract_strided_slice %983 {offsets = [0, 0], sizes = [8, 8], strides = [1, 1]} : vector<9x9xf32> to vector<8x8xf32>
    %c0_522 = arith.constant 0 : index
    %c18 = arith.constant 18 : index
    %994 = memref.load %arg2[%c0_522, %c18] : memref<13x27xf32, #tpu.memory_space<smem>>
    %995 = vector.broadcast %994 : f32 to vector<8x8xf32>
    %996 = arith.mulf %995, %993 : vector<8x8xf32>
    %997 = arith.addf %932, %996 : vector<8x8xf32>
    %c1_523 = arith.constant 1 : index
    %c18_524 = arith.constant 18 : index
    %998 = memref.load %arg2[%c1_523, %c18_524] : memref<13x27xf32, #tpu.memory_space<smem>>
    %999 = vector.broadcast %998 : f32 to vector<8x8xf32>
    %1000 = arith.mulf %999, %993 : vector<8x8xf32>
    %1001 = arith.addf %936, %1000 : vector<8x8xf32>
    %c2_525 = arith.constant 2 : index
    %c18_526 = arith.constant 18 : index
    %1002 = memref.load %arg2[%c2_525, %c18_526] : memref<13x27xf32, #tpu.memory_space<smem>>
    %1003 = vector.broadcast %1002 : f32 to vector<8x8xf32>
    %1004 = arith.mulf %1003, %993 : vector<8x8xf32>
    %1005 = arith.addf %940, %1004 : vector<8x8xf32>
    %c3_527 = arith.constant 3 : index
    %c18_528 = arith.constant 18 : index
    %1006 = memref.load %arg2[%c3_527, %c18_528] : memref<13x27xf32, #tpu.memory_space<smem>>
    %1007 = vector.broadcast %1006 : f32 to vector<8x8xf32>
    %1008 = arith.mulf %1007, %993 : vector<8x8xf32>
    %1009 = arith.addf %944, %1008 : vector<8x8xf32>
    %c4_529 = arith.constant 4 : index
    %c18_530 = arith.constant 18 : index
    %1010 = memref.load %arg2[%c4_529, %c18_530] : memref<13x27xf32, #tpu.memory_space<smem>>
    %1011 = vector.broadcast %1010 : f32 to vector<8x8xf32>
    %1012 = arith.mulf %1011, %993 : vector<8x8xf32>
    %1013 = arith.addf %948, %1012 : vector<8x8xf32>
    %c5_531 = arith.constant 5 : index
    %c18_532 = arith.constant 18 : index
    %1014 = memref.load %arg2[%c5_531, %c18_532] : memref<13x27xf32, #tpu.memory_space<smem>>
    %1015 = vector.broadcast %1014 : f32 to vector<8x8xf32>
    %1016 = arith.mulf %1015, %993 : vector<8x8xf32>
    %1017 = arith.addf %952, %1016 : vector<8x8xf32>
    %c6_533 = arith.constant 6 : index
    %c18_534 = arith.constant 18 : index
    %1018 = memref.load %arg2[%c6_533, %c18_534] : memref<13x27xf32, #tpu.memory_space<smem>>
    %1019 = vector.broadcast %1018 : f32 to vector<8x8xf32>
    %1020 = arith.mulf %1019, %993 : vector<8x8xf32>
    %1021 = arith.addf %956, %1020 : vector<8x8xf32>
    %c7_535 = arith.constant 7 : index
    %c18_536 = arith.constant 18 : index
    %1022 = memref.load %arg2[%c7_535, %c18_536] : memref<13x27xf32, #tpu.memory_space<smem>>
    %1023 = vector.broadcast %1022 : f32 to vector<8x8xf32>
    %1024 = arith.mulf %1023, %993 : vector<8x8xf32>
    %1025 = arith.addf %960, %1024 : vector<8x8xf32>
    %c8_537 = arith.constant 8 : index
    %c18_538 = arith.constant 18 : index
    %1026 = memref.load %arg2[%c8_537, %c18_538] : memref<13x27xf32, #tpu.memory_space<smem>>
    %1027 = vector.broadcast %1026 : f32 to vector<8x8xf32>
    %1028 = arith.mulf %1027, %993 : vector<8x8xf32>
    %1029 = arith.addf %964, %1028 : vector<8x8xf32>
    %c9_539 = arith.constant 9 : index
    %c18_540 = arith.constant 18 : index
    %1030 = memref.load %arg2[%c9_539, %c18_540] : memref<13x27xf32, #tpu.memory_space<smem>>
    %1031 = vector.broadcast %1030 : f32 to vector<8x8xf32>
    %1032 = arith.mulf %1031, %993 : vector<8x8xf32>
    %1033 = arith.addf %968, %1032 : vector<8x8xf32>
    %c10_541 = arith.constant 10 : index
    %c18_542 = arith.constant 18 : index
    %1034 = memref.load %arg2[%c10_541, %c18_542] : memref<13x27xf32, #tpu.memory_space<smem>>
    %1035 = vector.broadcast %1034 : f32 to vector<8x8xf32>
    %1036 = arith.mulf %1035, %993 : vector<8x8xf32>
    %1037 = arith.addf %972, %1036 : vector<8x8xf32>
    %c11_543 = arith.constant 11 : index
    %c18_544 = arith.constant 18 : index
    %1038 = memref.load %arg2[%c11_543, %c18_544] : memref<13x27xf32, #tpu.memory_space<smem>>
    %1039 = vector.broadcast %1038 : f32 to vector<8x8xf32>
    %1040 = arith.mulf %1039, %993 : vector<8x8xf32>
    %1041 = arith.addf %976, %1040 : vector<8x8xf32>
    %c12_545 = arith.constant 12 : index
    %c18_546 = arith.constant 18 : index
    %1042 = memref.load %arg2[%c12_545, %c18_546] : memref<13x27xf32, #tpu.memory_space<smem>>
    %1043 = vector.broadcast %1042 : f32 to vector<8x8xf32>
    %1044 = arith.mulf %1043, %993 : vector<8x8xf32>
    %1045 = arith.addf %980, %1044 : vector<8x8xf32>
    %1046 = vector.extract_strided_slice %986 {offsets = [0, 0], sizes = [8, 8], strides = [1, 1]} : vector<9x9xf32> to vector<8x8xf32>
    %1047 = arith.maximumf %993, %1046 : vector<8x8xf32>
    %c0_547 = arith.constant 0 : index
    %c19 = arith.constant 19 : index
    %1048 = memref.load %arg2[%c0_547, %c19] : memref<13x27xf32, #tpu.memory_space<smem>>
    %1049 = vector.broadcast %1048 : f32 to vector<8x8xf32>
    %1050 = arith.mulf %1049, %1046 : vector<8x8xf32>
    %1051 = arith.addf %997, %1050 : vector<8x8xf32>
    %c1_548 = arith.constant 1 : index
    %c19_549 = arith.constant 19 : index
    %1052 = memref.load %arg2[%c1_548, %c19_549] : memref<13x27xf32, #tpu.memory_space<smem>>
    %1053 = vector.broadcast %1052 : f32 to vector<8x8xf32>
    %1054 = arith.mulf %1053, %1046 : vector<8x8xf32>
    %1055 = arith.addf %1001, %1054 : vector<8x8xf32>
    %c2_550 = arith.constant 2 : index
    %c19_551 = arith.constant 19 : index
    %1056 = memref.load %arg2[%c2_550, %c19_551] : memref<13x27xf32, #tpu.memory_space<smem>>
    %1057 = vector.broadcast %1056 : f32 to vector<8x8xf32>
    %1058 = arith.mulf %1057, %1046 : vector<8x8xf32>
    %1059 = arith.addf %1005, %1058 : vector<8x8xf32>
    %c3_552 = arith.constant 3 : index
    %c19_553 = arith.constant 19 : index
    %1060 = memref.load %arg2[%c3_552, %c19_553] : memref<13x27xf32, #tpu.memory_space<smem>>
    %1061 = vector.broadcast %1060 : f32 to vector<8x8xf32>
    %1062 = arith.mulf %1061, %1046 : vector<8x8xf32>
    %1063 = arith.addf %1009, %1062 : vector<8x8xf32>
    %c4_554 = arith.constant 4 : index
    %c19_555 = arith.constant 19 : index
    %1064 = memref.load %arg2[%c4_554, %c19_555] : memref<13x27xf32, #tpu.memory_space<smem>>
    %1065 = vector.broadcast %1064 : f32 to vector<8x8xf32>
    %1066 = arith.mulf %1065, %1046 : vector<8x8xf32>
    %1067 = arith.addf %1013, %1066 : vector<8x8xf32>
    %c5_556 = arith.constant 5 : index
    %c19_557 = arith.constant 19 : index
    %1068 = memref.load %arg2[%c5_556, %c19_557] : memref<13x27xf32, #tpu.memory_space<smem>>
    %1069 = vector.broadcast %1068 : f32 to vector<8x8xf32>
    %1070 = arith.mulf %1069, %1046 : vector<8x8xf32>
    %1071 = arith.addf %1017, %1070 : vector<8x8xf32>
    %c6_558 = arith.constant 6 : index
    %c19_559 = arith.constant 19 : index
    %1072 = memref.load %arg2[%c6_558, %c19_559] : memref<13x27xf32, #tpu.memory_space<smem>>
    %1073 = vector.broadcast %1072 : f32 to vector<8x8xf32>
    %1074 = arith.mulf %1073, %1046 : vector<8x8xf32>
    %1075 = arith.addf %1021, %1074 : vector<8x8xf32>
    %c7_560 = arith.constant 7 : index
    %c19_561 = arith.constant 19 : index
    %1076 = memref.load %arg2[%c7_560, %c19_561] : memref<13x27xf32, #tpu.memory_space<smem>>
    %1077 = vector.broadcast %1076 : f32 to vector<8x8xf32>
    %1078 = arith.mulf %1077, %1046 : vector<8x8xf32>
    %1079 = arith.addf %1025, %1078 : vector<8x8xf32>
    %c8_562 = arith.constant 8 : index
    %c19_563 = arith.constant 19 : index
    %1080 = memref.load %arg2[%c8_562, %c19_563] : memref<13x27xf32, #tpu.memory_space<smem>>
    %1081 = vector.broadcast %1080 : f32 to vector<8x8xf32>
    %1082 = arith.mulf %1081, %1046 : vector<8x8xf32>
    %1083 = arith.addf %1029, %1082 : vector<8x8xf32>
    %c9_564 = arith.constant 9 : index
    %c19_565 = arith.constant 19 : index
    %1084 = memref.load %arg2[%c9_564, %c19_565] : memref<13x27xf32, #tpu.memory_space<smem>>
    %1085 = vector.broadcast %1084 : f32 to vector<8x8xf32>
    %1086 = arith.mulf %1085, %1046 : vector<8x8xf32>
    %1087 = arith.addf %1033, %1086 : vector<8x8xf32>
    %c10_566 = arith.constant 10 : index
    %c19_567 = arith.constant 19 : index
    %1088 = memref.load %arg2[%c10_566, %c19_567] : memref<13x27xf32, #tpu.memory_space<smem>>
    %1089 = vector.broadcast %1088 : f32 to vector<8x8xf32>
    %1090 = arith.mulf %1089, %1046 : vector<8x8xf32>
    %1091 = arith.addf %1037, %1090 : vector<8x8xf32>
    %c11_568 = arith.constant 11 : index
    %c19_569 = arith.constant 19 : index
    %1092 = memref.load %arg2[%c11_568, %c19_569] : memref<13x27xf32, #tpu.memory_space<smem>>
    %1093 = vector.broadcast %1092 : f32 to vector<8x8xf32>
    %1094 = arith.mulf %1093, %1046 : vector<8x8xf32>
    %1095 = arith.addf %1041, %1094 : vector<8x8xf32>
    %c12_570 = arith.constant 12 : index
    %c19_571 = arith.constant 19 : index
    %1096 = memref.load %arg2[%c12_570, %c19_571] : memref<13x27xf32, #tpu.memory_space<smem>>
    %1097 = vector.broadcast %1096 : f32 to vector<8x8xf32>
    %1098 = arith.mulf %1097, %1046 : vector<8x8xf32>
    %1099 = arith.addf %1045, %1098 : vector<8x8xf32>
    %1100 = vector.extract_strided_slice %983 {offsets = [0, 1], sizes = [8, 8], strides = [1, 1]} : vector<9x9xf32> to vector<8x8xf32>
    %1101 = arith.maximumf %1047, %1100 : vector<8x8xf32>
    %c0_572 = arith.constant 0 : index
    %c20 = arith.constant 20 : index
    %1102 = memref.load %arg2[%c0_572, %c20] : memref<13x27xf32, #tpu.memory_space<smem>>
    %1103 = vector.broadcast %1102 : f32 to vector<8x8xf32>
    %1104 = arith.mulf %1103, %1100 : vector<8x8xf32>
    %1105 = arith.addf %1051, %1104 : vector<8x8xf32>
    %c1_573 = arith.constant 1 : index
    %c20_574 = arith.constant 20 : index
    %1106 = memref.load %arg2[%c1_573, %c20_574] : memref<13x27xf32, #tpu.memory_space<smem>>
    %1107 = vector.broadcast %1106 : f32 to vector<8x8xf32>
    %1108 = arith.mulf %1107, %1100 : vector<8x8xf32>
    %1109 = arith.addf %1055, %1108 : vector<8x8xf32>
    %c2_575 = arith.constant 2 : index
    %c20_576 = arith.constant 20 : index
    %1110 = memref.load %arg2[%c2_575, %c20_576] : memref<13x27xf32, #tpu.memory_space<smem>>
    %1111 = vector.broadcast %1110 : f32 to vector<8x8xf32>
    %1112 = arith.mulf %1111, %1100 : vector<8x8xf32>
    %1113 = arith.addf %1059, %1112 : vector<8x8xf32>
    %c3_577 = arith.constant 3 : index
    %c20_578 = arith.constant 20 : index
    %1114 = memref.load %arg2[%c3_577, %c20_578] : memref<13x27xf32, #tpu.memory_space<smem>>
    %1115 = vector.broadcast %1114 : f32 to vector<8x8xf32>
    %1116 = arith.mulf %1115, %1100 : vector<8x8xf32>
    %1117 = arith.addf %1063, %1116 : vector<8x8xf32>
    %c4_579 = arith.constant 4 : index
    %c20_580 = arith.constant 20 : index
    %1118 = memref.load %arg2[%c4_579, %c20_580] : memref<13x27xf32, #tpu.memory_space<smem>>
    %1119 = vector.broadcast %1118 : f32 to vector<8x8xf32>
    %1120 = arith.mulf %1119, %1100 : vector<8x8xf32>
    %1121 = arith.addf %1067, %1120 : vector<8x8xf32>
    %c5_581 = arith.constant 5 : index
    %c20_582 = arith.constant 20 : index
    %1122 = memref.load %arg2[%c5_581, %c20_582] : memref<13x27xf32, #tpu.memory_space<smem>>
    %1123 = vector.broadcast %1122 : f32 to vector<8x8xf32>
    %1124 = arith.mulf %1123, %1100 : vector<8x8xf32>
    %1125 = arith.addf %1071, %1124 : vector<8x8xf32>
    %c6_583 = arith.constant 6 : index
    %c20_584 = arith.constant 20 : index
    %1126 = memref.load %arg2[%c6_583, %c20_584] : memref<13x27xf32, #tpu.memory_space<smem>>
    %1127 = vector.broadcast %1126 : f32 to vector<8x8xf32>
    %1128 = arith.mulf %1127, %1100 : vector<8x8xf32>
    %1129 = arith.addf %1075, %1128 : vector<8x8xf32>
    %c7_585 = arith.constant 7 : index
    %c20_586 = arith.constant 20 : index
    %1130 = memref.load %arg2[%c7_585, %c20_586] : memref<13x27xf32, #tpu.memory_space<smem>>
    %1131 = vector.broadcast %1130 : f32 to vector<8x8xf32>
    %1132 = arith.mulf %1131, %1100 : vector<8x8xf32>
    %1133 = arith.addf %1079, %1132 : vector<8x8xf32>
    %c8_587 = arith.constant 8 : index
    %c20_588 = arith.constant 20 : index
    %1134 = memref.load %arg2[%c8_587, %c20_588] : memref<13x27xf32, #tpu.memory_space<smem>>
    %1135 = vector.broadcast %1134 : f32 to vector<8x8xf32>
    %1136 = arith.mulf %1135, %1100 : vector<8x8xf32>
    %1137 = arith.addf %1083, %1136 : vector<8x8xf32>
    %c9_589 = arith.constant 9 : index
    %c20_590 = arith.constant 20 : index
    %1138 = memref.load %arg2[%c9_589, %c20_590] : memref<13x27xf32, #tpu.memory_space<smem>>
    %1139 = vector.broadcast %1138 : f32 to vector<8x8xf32>
    %1140 = arith.mulf %1139, %1100 : vector<8x8xf32>
    %1141 = arith.addf %1087, %1140 : vector<8x8xf32>
    %c10_591 = arith.constant 10 : index
    %c20_592 = arith.constant 20 : index
    %1142 = memref.load %arg2[%c10_591, %c20_592] : memref<13x27xf32, #tpu.memory_space<smem>>
    %1143 = vector.broadcast %1142 : f32 to vector<8x8xf32>
    %1144 = arith.mulf %1143, %1100 : vector<8x8xf32>
    %1145 = arith.addf %1091, %1144 : vector<8x8xf32>
    %c11_593 = arith.constant 11 : index
    %c20_594 = arith.constant 20 : index
    %1146 = memref.load %arg2[%c11_593, %c20_594] : memref<13x27xf32, #tpu.memory_space<smem>>
    %1147 = vector.broadcast %1146 : f32 to vector<8x8xf32>
    %1148 = arith.mulf %1147, %1100 : vector<8x8xf32>
    %1149 = arith.addf %1095, %1148 : vector<8x8xf32>
    %c12_595 = arith.constant 12 : index
    %c20_596 = arith.constant 20 : index
    %1150 = memref.load %arg2[%c12_595, %c20_596] : memref<13x27xf32, #tpu.memory_space<smem>>
    %1151 = vector.broadcast %1150 : f32 to vector<8x8xf32>
    %1152 = arith.mulf %1151, %1100 : vector<8x8xf32>
    %1153 = arith.addf %1099, %1152 : vector<8x8xf32>
    %1154 = vector.extract_strided_slice %989 {offsets = [0, 0], sizes = [8, 8], strides = [1, 1]} : vector<9x9xf32> to vector<8x8xf32>
    %1155 = arith.maximumf %1101, %1154 : vector<8x8xf32>
    %c0_597 = arith.constant 0 : index
    %c21 = arith.constant 21 : index
    %1156 = memref.load %arg2[%c0_597, %c21] : memref<13x27xf32, #tpu.memory_space<smem>>
    %1157 = vector.broadcast %1156 : f32 to vector<8x8xf32>
    %1158 = arith.mulf %1157, %1154 : vector<8x8xf32>
    %1159 = arith.addf %1105, %1158 : vector<8x8xf32>
    %c1_598 = arith.constant 1 : index
    %c21_599 = arith.constant 21 : index
    %1160 = memref.load %arg2[%c1_598, %c21_599] : memref<13x27xf32, #tpu.memory_space<smem>>
    %1161 = vector.broadcast %1160 : f32 to vector<8x8xf32>
    %1162 = arith.mulf %1161, %1154 : vector<8x8xf32>
    %1163 = arith.addf %1109, %1162 : vector<8x8xf32>
    %c2_600 = arith.constant 2 : index
    %c21_601 = arith.constant 21 : index
    %1164 = memref.load %arg2[%c2_600, %c21_601] : memref<13x27xf32, #tpu.memory_space<smem>>
    %1165 = vector.broadcast %1164 : f32 to vector<8x8xf32>
    %1166 = arith.mulf %1165, %1154 : vector<8x8xf32>
    %1167 = arith.addf %1113, %1166 : vector<8x8xf32>
    %c3_602 = arith.constant 3 : index
    %c21_603 = arith.constant 21 : index
    %1168 = memref.load %arg2[%c3_602, %c21_603] : memref<13x27xf32, #tpu.memory_space<smem>>
    %1169 = vector.broadcast %1168 : f32 to vector<8x8xf32>
    %1170 = arith.mulf %1169, %1154 : vector<8x8xf32>
    %1171 = arith.addf %1117, %1170 : vector<8x8xf32>
    %c4_604 = arith.constant 4 : index
    %c21_605 = arith.constant 21 : index
    %1172 = memref.load %arg2[%c4_604, %c21_605] : memref<13x27xf32, #tpu.memory_space<smem>>
    %1173 = vector.broadcast %1172 : f32 to vector<8x8xf32>
    %1174 = arith.mulf %1173, %1154 : vector<8x8xf32>
    %1175 = arith.addf %1121, %1174 : vector<8x8xf32>
    %c5_606 = arith.constant 5 : index
    %c21_607 = arith.constant 21 : index
    %1176 = memref.load %arg2[%c5_606, %c21_607] : memref<13x27xf32, #tpu.memory_space<smem>>
    %1177 = vector.broadcast %1176 : f32 to vector<8x8xf32>
    %1178 = arith.mulf %1177, %1154 : vector<8x8xf32>
    %1179 = arith.addf %1125, %1178 : vector<8x8xf32>
    %c6_608 = arith.constant 6 : index
    %c21_609 = arith.constant 21 : index
    %1180 = memref.load %arg2[%c6_608, %c21_609] : memref<13x27xf32, #tpu.memory_space<smem>>
    %1181 = vector.broadcast %1180 : f32 to vector<8x8xf32>
    %1182 = arith.mulf %1181, %1154 : vector<8x8xf32>
    %1183 = arith.addf %1129, %1182 : vector<8x8xf32>
    %c7_610 = arith.constant 7 : index
    %c21_611 = arith.constant 21 : index
    %1184 = memref.load %arg2[%c7_610, %c21_611] : memref<13x27xf32, #tpu.memory_space<smem>>
    %1185 = vector.broadcast %1184 : f32 to vector<8x8xf32>
    %1186 = arith.mulf %1185, %1154 : vector<8x8xf32>
    %1187 = arith.addf %1133, %1186 : vector<8x8xf32>
    %c8_612 = arith.constant 8 : index
    %c21_613 = arith.constant 21 : index
    %1188 = memref.load %arg2[%c8_612, %c21_613] : memref<13x27xf32, #tpu.memory_space<smem>>
    %1189 = vector.broadcast %1188 : f32 to vector<8x8xf32>
    %1190 = arith.mulf %1189, %1154 : vector<8x8xf32>
    %1191 = arith.addf %1137, %1190 : vector<8x8xf32>
    %c9_614 = arith.constant 9 : index
    %c21_615 = arith.constant 21 : index
    %1192 = memref.load %arg2[%c9_614, %c21_615] : memref<13x27xf32, #tpu.memory_space<smem>>
    %1193 = vector.broadcast %1192 : f32 to vector<8x8xf32>
    %1194 = arith.mulf %1193, %1154 : vector<8x8xf32>
    %1195 = arith.addf %1141, %1194 : vector<8x8xf32>
    %c10_616 = arith.constant 10 : index
    %c21_617 = arith.constant 21 : index
    %1196 = memref.load %arg2[%c10_616, %c21_617] : memref<13x27xf32, #tpu.memory_space<smem>>
    %1197 = vector.broadcast %1196 : f32 to vector<8x8xf32>
    %1198 = arith.mulf %1197, %1154 : vector<8x8xf32>
    %1199 = arith.addf %1145, %1198 : vector<8x8xf32>
    %c11_618 = arith.constant 11 : index
    %c21_619 = arith.constant 21 : index
    %1200 = memref.load %arg2[%c11_618, %c21_619] : memref<13x27xf32, #tpu.memory_space<smem>>
    %1201 = vector.broadcast %1200 : f32 to vector<8x8xf32>
    %1202 = arith.mulf %1201, %1154 : vector<8x8xf32>
    %1203 = arith.addf %1149, %1202 : vector<8x8xf32>
    %c12_620 = arith.constant 12 : index
    %c21_621 = arith.constant 21 : index
    %1204 = memref.load %arg2[%c12_620, %c21_621] : memref<13x27xf32, #tpu.memory_space<smem>>
    %1205 = vector.broadcast %1204 : f32 to vector<8x8xf32>
    %1206 = arith.mulf %1205, %1154 : vector<8x8xf32>
    %1207 = arith.addf %1153, %1206 : vector<8x8xf32>
    %1208 = vector.extract_strided_slice %992 {offsets = [0, 0], sizes = [8, 8], strides = [1, 1]} : vector<9x9xf32> to vector<8x8xf32>
    %1209 = arith.maximumf %1155, %1208 : vector<8x8xf32>
    %c0_622 = arith.constant 0 : index
    %c22 = arith.constant 22 : index
    %1210 = memref.load %arg2[%c0_622, %c22] : memref<13x27xf32, #tpu.memory_space<smem>>
    %1211 = vector.broadcast %1210 : f32 to vector<8x8xf32>
    %1212 = arith.mulf %1211, %1208 : vector<8x8xf32>
    %1213 = arith.addf %1159, %1212 : vector<8x8xf32>
    %c1_623 = arith.constant 1 : index
    %c22_624 = arith.constant 22 : index
    %1214 = memref.load %arg2[%c1_623, %c22_624] : memref<13x27xf32, #tpu.memory_space<smem>>
    %1215 = vector.broadcast %1214 : f32 to vector<8x8xf32>
    %1216 = arith.mulf %1215, %1208 : vector<8x8xf32>
    %1217 = arith.addf %1163, %1216 : vector<8x8xf32>
    %c2_625 = arith.constant 2 : index
    %c22_626 = arith.constant 22 : index
    %1218 = memref.load %arg2[%c2_625, %c22_626] : memref<13x27xf32, #tpu.memory_space<smem>>
    %1219 = vector.broadcast %1218 : f32 to vector<8x8xf32>
    %1220 = arith.mulf %1219, %1208 : vector<8x8xf32>
    %1221 = arith.addf %1167, %1220 : vector<8x8xf32>
    %c3_627 = arith.constant 3 : index
    %c22_628 = arith.constant 22 : index
    %1222 = memref.load %arg2[%c3_627, %c22_628] : memref<13x27xf32, #tpu.memory_space<smem>>
    %1223 = vector.broadcast %1222 : f32 to vector<8x8xf32>
    %1224 = arith.mulf %1223, %1208 : vector<8x8xf32>
    %1225 = arith.addf %1171, %1224 : vector<8x8xf32>
    %c4_629 = arith.constant 4 : index
    %c22_630 = arith.constant 22 : index
    %1226 = memref.load %arg2[%c4_629, %c22_630] : memref<13x27xf32, #tpu.memory_space<smem>>
    %1227 = vector.broadcast %1226 : f32 to vector<8x8xf32>
    %1228 = arith.mulf %1227, %1208 : vector<8x8xf32>
    %1229 = arith.addf %1175, %1228 : vector<8x8xf32>
    %c5_631 = arith.constant 5 : index
    %c22_632 = arith.constant 22 : index
    %1230 = memref.load %arg2[%c5_631, %c22_632] : memref<13x27xf32, #tpu.memory_space<smem>>
    %1231 = vector.broadcast %1230 : f32 to vector<8x8xf32>
    %1232 = arith.mulf %1231, %1208 : vector<8x8xf32>
    %1233 = arith.addf %1179, %1232 : vector<8x8xf32>
    %c6_633 = arith.constant 6 : index
    %c22_634 = arith.constant 22 : index
    %1234 = memref.load %arg2[%c6_633, %c22_634] : memref<13x27xf32, #tpu.memory_space<smem>>
    %1235 = vector.broadcast %1234 : f32 to vector<8x8xf32>
    %1236 = arith.mulf %1235, %1208 : vector<8x8xf32>
    %1237 = arith.addf %1183, %1236 : vector<8x8xf32>
    %c7_635 = arith.constant 7 : index
    %c22_636 = arith.constant 22 : index
    %1238 = memref.load %arg2[%c7_635, %c22_636] : memref<13x27xf32, #tpu.memory_space<smem>>
    %1239 = vector.broadcast %1238 : f32 to vector<8x8xf32>
    %1240 = arith.mulf %1239, %1208 : vector<8x8xf32>
    %1241 = arith.addf %1187, %1240 : vector<8x8xf32>
    %c8_637 = arith.constant 8 : index
    %c22_638 = arith.constant 22 : index
    %1242 = memref.load %arg2[%c8_637, %c22_638] : memref<13x27xf32, #tpu.memory_space<smem>>
    %1243 = vector.broadcast %1242 : f32 to vector<8x8xf32>
    %1244 = arith.mulf %1243, %1208 : vector<8x8xf32>
    %1245 = arith.addf %1191, %1244 : vector<8x8xf32>
    %c9_639 = arith.constant 9 : index
    %c22_640 = arith.constant 22 : index
    %1246 = memref.load %arg2[%c9_639, %c22_640] : memref<13x27xf32, #tpu.memory_space<smem>>
    %1247 = vector.broadcast %1246 : f32 to vector<8x8xf32>
    %1248 = arith.mulf %1247, %1208 : vector<8x8xf32>
    %1249 = arith.addf %1195, %1248 : vector<8x8xf32>
    %c10_641 = arith.constant 10 : index
    %c22_642 = arith.constant 22 : index
    %1250 = memref.load %arg2[%c10_641, %c22_642] : memref<13x27xf32, #tpu.memory_space<smem>>
    %1251 = vector.broadcast %1250 : f32 to vector<8x8xf32>
    %1252 = arith.mulf %1251, %1208 : vector<8x8xf32>
    %1253 = arith.addf %1199, %1252 : vector<8x8xf32>
    %c11_643 = arith.constant 11 : index
    %c22_644 = arith.constant 22 : index
    %1254 = memref.load %arg2[%c11_643, %c22_644] : memref<13x27xf32, #tpu.memory_space<smem>>
    %1255 = vector.broadcast %1254 : f32 to vector<8x8xf32>
    %1256 = arith.mulf %1255, %1208 : vector<8x8xf32>
    %1257 = arith.addf %1203, %1256 : vector<8x8xf32>
    %c12_645 = arith.constant 12 : index
    %c22_646 = arith.constant 22 : index
    %1258 = memref.load %arg2[%c12_645, %c22_646] : memref<13x27xf32, #tpu.memory_space<smem>>
    %1259 = vector.broadcast %1258 : f32 to vector<8x8xf32>
    %1260 = arith.mulf %1259, %1208 : vector<8x8xf32>
    %1261 = arith.addf %1207, %1260 : vector<8x8xf32>
    %1262 = vector.extract_strided_slice %989 {offsets = [0, 1], sizes = [8, 8], strides = [1, 1]} : vector<9x9xf32> to vector<8x8xf32>
    %1263 = arith.maximumf %1209, %1262 : vector<8x8xf32>
    %c0_647 = arith.constant 0 : index
    %c23 = arith.constant 23 : index
    %1264 = memref.load %arg2[%c0_647, %c23] : memref<13x27xf32, #tpu.memory_space<smem>>
    %1265 = vector.broadcast %1264 : f32 to vector<8x8xf32>
    %1266 = arith.mulf %1265, %1262 : vector<8x8xf32>
    %1267 = arith.addf %1213, %1266 : vector<8x8xf32>
    %c1_648 = arith.constant 1 : index
    %c23_649 = arith.constant 23 : index
    %1268 = memref.load %arg2[%c1_648, %c23_649] : memref<13x27xf32, #tpu.memory_space<smem>>
    %1269 = vector.broadcast %1268 : f32 to vector<8x8xf32>
    %1270 = arith.mulf %1269, %1262 : vector<8x8xf32>
    %1271 = arith.addf %1217, %1270 : vector<8x8xf32>
    %c2_650 = arith.constant 2 : index
    %c23_651 = arith.constant 23 : index
    %1272 = memref.load %arg2[%c2_650, %c23_651] : memref<13x27xf32, #tpu.memory_space<smem>>
    %1273 = vector.broadcast %1272 : f32 to vector<8x8xf32>
    %1274 = arith.mulf %1273, %1262 : vector<8x8xf32>
    %1275 = arith.addf %1221, %1274 : vector<8x8xf32>
    %c3_652 = arith.constant 3 : index
    %c23_653 = arith.constant 23 : index
    %1276 = memref.load %arg2[%c3_652, %c23_653] : memref<13x27xf32, #tpu.memory_space<smem>>
    %1277 = vector.broadcast %1276 : f32 to vector<8x8xf32>
    %1278 = arith.mulf %1277, %1262 : vector<8x8xf32>
    %1279 = arith.addf %1225, %1278 : vector<8x8xf32>
    %c4_654 = arith.constant 4 : index
    %c23_655 = arith.constant 23 : index
    %1280 = memref.load %arg2[%c4_654, %c23_655] : memref<13x27xf32, #tpu.memory_space<smem>>
    %1281 = vector.broadcast %1280 : f32 to vector<8x8xf32>
    %1282 = arith.mulf %1281, %1262 : vector<8x8xf32>
    %1283 = arith.addf %1229, %1282 : vector<8x8xf32>
    %c5_656 = arith.constant 5 : index
    %c23_657 = arith.constant 23 : index
    %1284 = memref.load %arg2[%c5_656, %c23_657] : memref<13x27xf32, #tpu.memory_space<smem>>
    %1285 = vector.broadcast %1284 : f32 to vector<8x8xf32>
    %1286 = arith.mulf %1285, %1262 : vector<8x8xf32>
    %1287 = arith.addf %1233, %1286 : vector<8x8xf32>
    %c6_658 = arith.constant 6 : index
    %c23_659 = arith.constant 23 : index
    %1288 = memref.load %arg2[%c6_658, %c23_659] : memref<13x27xf32, #tpu.memory_space<smem>>
    %1289 = vector.broadcast %1288 : f32 to vector<8x8xf32>
    %1290 = arith.mulf %1289, %1262 : vector<8x8xf32>
    %1291 = arith.addf %1237, %1290 : vector<8x8xf32>
    %c7_660 = arith.constant 7 : index
    %c23_661 = arith.constant 23 : index
    %1292 = memref.load %arg2[%c7_660, %c23_661] : memref<13x27xf32, #tpu.memory_space<smem>>
    %1293 = vector.broadcast %1292 : f32 to vector<8x8xf32>
    %1294 = arith.mulf %1293, %1262 : vector<8x8xf32>
    %1295 = arith.addf %1241, %1294 : vector<8x8xf32>
    %c8_662 = arith.constant 8 : index
    %c23_663 = arith.constant 23 : index
    %1296 = memref.load %arg2[%c8_662, %c23_663] : memref<13x27xf32, #tpu.memory_space<smem>>
    %1297 = vector.broadcast %1296 : f32 to vector<8x8xf32>
    %1298 = arith.mulf %1297, %1262 : vector<8x8xf32>
    %1299 = arith.addf %1245, %1298 : vector<8x8xf32>
    %c9_664 = arith.constant 9 : index
    %c23_665 = arith.constant 23 : index
    %1300 = memref.load %arg2[%c9_664, %c23_665] : memref<13x27xf32, #tpu.memory_space<smem>>
    %1301 = vector.broadcast %1300 : f32 to vector<8x8xf32>
    %1302 = arith.mulf %1301, %1262 : vector<8x8xf32>
    %1303 = arith.addf %1249, %1302 : vector<8x8xf32>
    %c10_666 = arith.constant 10 : index
    %c23_667 = arith.constant 23 : index
    %1304 = memref.load %arg2[%c10_666, %c23_667] : memref<13x27xf32, #tpu.memory_space<smem>>
    %1305 = vector.broadcast %1304 : f32 to vector<8x8xf32>
    %1306 = arith.mulf %1305, %1262 : vector<8x8xf32>
    %1307 = arith.addf %1253, %1306 : vector<8x8xf32>
    %c11_668 = arith.constant 11 : index
    %c23_669 = arith.constant 23 : index
    %1308 = memref.load %arg2[%c11_668, %c23_669] : memref<13x27xf32, #tpu.memory_space<smem>>
    %1309 = vector.broadcast %1308 : f32 to vector<8x8xf32>
    %1310 = arith.mulf %1309, %1262 : vector<8x8xf32>
    %1311 = arith.addf %1257, %1310 : vector<8x8xf32>
    %c12_670 = arith.constant 12 : index
    %c23_671 = arith.constant 23 : index
    %1312 = memref.load %arg2[%c12_670, %c23_671] : memref<13x27xf32, #tpu.memory_space<smem>>
    %1313 = vector.broadcast %1312 : f32 to vector<8x8xf32>
    %1314 = arith.mulf %1313, %1262 : vector<8x8xf32>
    %1315 = arith.addf %1261, %1314 : vector<8x8xf32>
    %1316 = vector.extract_strided_slice %983 {offsets = [1, 0], sizes = [8, 8], strides = [1, 1]} : vector<9x9xf32> to vector<8x8xf32>
    %1317 = arith.maximumf %1263, %1316 : vector<8x8xf32>
    %c0_672 = arith.constant 0 : index
    %c24 = arith.constant 24 : index
    %1318 = memref.load %arg2[%c0_672, %c24] : memref<13x27xf32, #tpu.memory_space<smem>>
    %1319 = vector.broadcast %1318 : f32 to vector<8x8xf32>
    %1320 = arith.mulf %1319, %1316 : vector<8x8xf32>
    %1321 = arith.addf %1267, %1320 : vector<8x8xf32>
    %c1_673 = arith.constant 1 : index
    %c24_674 = arith.constant 24 : index
    %1322 = memref.load %arg2[%c1_673, %c24_674] : memref<13x27xf32, #tpu.memory_space<smem>>
    %1323 = vector.broadcast %1322 : f32 to vector<8x8xf32>
    %1324 = arith.mulf %1323, %1316 : vector<8x8xf32>
    %1325 = arith.addf %1271, %1324 : vector<8x8xf32>
    %c2_675 = arith.constant 2 : index
    %c24_676 = arith.constant 24 : index
    %1326 = memref.load %arg2[%c2_675, %c24_676] : memref<13x27xf32, #tpu.memory_space<smem>>
    %1327 = vector.broadcast %1326 : f32 to vector<8x8xf32>
    %1328 = arith.mulf %1327, %1316 : vector<8x8xf32>
    %1329 = arith.addf %1275, %1328 : vector<8x8xf32>
    %c3_677 = arith.constant 3 : index
    %c24_678 = arith.constant 24 : index
    %1330 = memref.load %arg2[%c3_677, %c24_678] : memref<13x27xf32, #tpu.memory_space<smem>>
    %1331 = vector.broadcast %1330 : f32 to vector<8x8xf32>
    %1332 = arith.mulf %1331, %1316 : vector<8x8xf32>
    %1333 = arith.addf %1279, %1332 : vector<8x8xf32>
    %c4_679 = arith.constant 4 : index
    %c24_680 = arith.constant 24 : index
    %1334 = memref.load %arg2[%c4_679, %c24_680] : memref<13x27xf32, #tpu.memory_space<smem>>
    %1335 = vector.broadcast %1334 : f32 to vector<8x8xf32>
    %1336 = arith.mulf %1335, %1316 : vector<8x8xf32>
    %1337 = arith.addf %1283, %1336 : vector<8x8xf32>
    %c5_681 = arith.constant 5 : index
    %c24_682 = arith.constant 24 : index
    %1338 = memref.load %arg2[%c5_681, %c24_682] : memref<13x27xf32, #tpu.memory_space<smem>>
    %1339 = vector.broadcast %1338 : f32 to vector<8x8xf32>
    %1340 = arith.mulf %1339, %1316 : vector<8x8xf32>
    %1341 = arith.addf %1287, %1340 : vector<8x8xf32>
    %c6_683 = arith.constant 6 : index
    %c24_684 = arith.constant 24 : index
    %1342 = memref.load %arg2[%c6_683, %c24_684] : memref<13x27xf32, #tpu.memory_space<smem>>
    %1343 = vector.broadcast %1342 : f32 to vector<8x8xf32>
    %1344 = arith.mulf %1343, %1316 : vector<8x8xf32>
    %1345 = arith.addf %1291, %1344 : vector<8x8xf32>
    %c7_685 = arith.constant 7 : index
    %c24_686 = arith.constant 24 : index
    %1346 = memref.load %arg2[%c7_685, %c24_686] : memref<13x27xf32, #tpu.memory_space<smem>>
    %1347 = vector.broadcast %1346 : f32 to vector<8x8xf32>
    %1348 = arith.mulf %1347, %1316 : vector<8x8xf32>
    %1349 = arith.addf %1295, %1348 : vector<8x8xf32>
    %c8_687 = arith.constant 8 : index
    %c24_688 = arith.constant 24 : index
    %1350 = memref.load %arg2[%c8_687, %c24_688] : memref<13x27xf32, #tpu.memory_space<smem>>
    %1351 = vector.broadcast %1350 : f32 to vector<8x8xf32>
    %1352 = arith.mulf %1351, %1316 : vector<8x8xf32>
    %1353 = arith.addf %1299, %1352 : vector<8x8xf32>
    %c9_689 = arith.constant 9 : index
    %c24_690 = arith.constant 24 : index
    %1354 = memref.load %arg2[%c9_689, %c24_690] : memref<13x27xf32, #tpu.memory_space<smem>>
    %1355 = vector.broadcast %1354 : f32 to vector<8x8xf32>
    %1356 = arith.mulf %1355, %1316 : vector<8x8xf32>
    %1357 = arith.addf %1303, %1356 : vector<8x8xf32>
    %c10_691 = arith.constant 10 : index
    %c24_692 = arith.constant 24 : index
    %1358 = memref.load %arg2[%c10_691, %c24_692] : memref<13x27xf32, #tpu.memory_space<smem>>
    %1359 = vector.broadcast %1358 : f32 to vector<8x8xf32>
    %1360 = arith.mulf %1359, %1316 : vector<8x8xf32>
    %1361 = arith.addf %1307, %1360 : vector<8x8xf32>
    %c11_693 = arith.constant 11 : index
    %c24_694 = arith.constant 24 : index
    %1362 = memref.load %arg2[%c11_693, %c24_694] : memref<13x27xf32, #tpu.memory_space<smem>>
    %1363 = vector.broadcast %1362 : f32 to vector<8x8xf32>
    %1364 = arith.mulf %1363, %1316 : vector<8x8xf32>
    %1365 = arith.addf %1311, %1364 : vector<8x8xf32>
    %c12_695 = arith.constant 12 : index
    %c24_696 = arith.constant 24 : index
    %1366 = memref.load %arg2[%c12_695, %c24_696] : memref<13x27xf32, #tpu.memory_space<smem>>
    %1367 = vector.broadcast %1366 : f32 to vector<8x8xf32>
    %1368 = arith.mulf %1367, %1316 : vector<8x8xf32>
    %1369 = arith.addf %1315, %1368 : vector<8x8xf32>
    %1370 = vector.extract_strided_slice %986 {offsets = [1, 0], sizes = [8, 8], strides = [1, 1]} : vector<9x9xf32> to vector<8x8xf32>
    %1371 = arith.maximumf %1317, %1370 : vector<8x8xf32>
    %c0_697 = arith.constant 0 : index
    %c25 = arith.constant 25 : index
    %1372 = memref.load %arg2[%c0_697, %c25] : memref<13x27xf32, #tpu.memory_space<smem>>
    %1373 = vector.broadcast %1372 : f32 to vector<8x8xf32>
    %1374 = arith.mulf %1373, %1370 : vector<8x8xf32>
    %1375 = arith.addf %1321, %1374 : vector<8x8xf32>
    %c1_698 = arith.constant 1 : index
    %c25_699 = arith.constant 25 : index
    %1376 = memref.load %arg2[%c1_698, %c25_699] : memref<13x27xf32, #tpu.memory_space<smem>>
    %1377 = vector.broadcast %1376 : f32 to vector<8x8xf32>
    %1378 = arith.mulf %1377, %1370 : vector<8x8xf32>
    %1379 = arith.addf %1325, %1378 : vector<8x8xf32>
    %c2_700 = arith.constant 2 : index
    %c25_701 = arith.constant 25 : index
    %1380 = memref.load %arg2[%c2_700, %c25_701] : memref<13x27xf32, #tpu.memory_space<smem>>
    %1381 = vector.broadcast %1380 : f32 to vector<8x8xf32>
    %1382 = arith.mulf %1381, %1370 : vector<8x8xf32>
    %1383 = arith.addf %1329, %1382 : vector<8x8xf32>
    %c3_702 = arith.constant 3 : index
    %c25_703 = arith.constant 25 : index
    %1384 = memref.load %arg2[%c3_702, %c25_703] : memref<13x27xf32, #tpu.memory_space<smem>>
    %1385 = vector.broadcast %1384 : f32 to vector<8x8xf32>
    %1386 = arith.mulf %1385, %1370 : vector<8x8xf32>
    %1387 = arith.addf %1333, %1386 : vector<8x8xf32>
    %c4_704 = arith.constant 4 : index
    %c25_705 = arith.constant 25 : index
    %1388 = memref.load %arg2[%c4_704, %c25_705] : memref<13x27xf32, #tpu.memory_space<smem>>
    %1389 = vector.broadcast %1388 : f32 to vector<8x8xf32>
    %1390 = arith.mulf %1389, %1370 : vector<8x8xf32>
    %1391 = arith.addf %1337, %1390 : vector<8x8xf32>
    %c5_706 = arith.constant 5 : index
    %c25_707 = arith.constant 25 : index
    %1392 = memref.load %arg2[%c5_706, %c25_707] : memref<13x27xf32, #tpu.memory_space<smem>>
    %1393 = vector.broadcast %1392 : f32 to vector<8x8xf32>
    %1394 = arith.mulf %1393, %1370 : vector<8x8xf32>
    %1395 = arith.addf %1341, %1394 : vector<8x8xf32>
    %c6_708 = arith.constant 6 : index
    %c25_709 = arith.constant 25 : index
    %1396 = memref.load %arg2[%c6_708, %c25_709] : memref<13x27xf32, #tpu.memory_space<smem>>
    %1397 = vector.broadcast %1396 : f32 to vector<8x8xf32>
    %1398 = arith.mulf %1397, %1370 : vector<8x8xf32>
    %1399 = arith.addf %1345, %1398 : vector<8x8xf32>
    %c7_710 = arith.constant 7 : index
    %c25_711 = arith.constant 25 : index
    %1400 = memref.load %arg2[%c7_710, %c25_711] : memref<13x27xf32, #tpu.memory_space<smem>>
    %1401 = vector.broadcast %1400 : f32 to vector<8x8xf32>
    %1402 = arith.mulf %1401, %1370 : vector<8x8xf32>
    %1403 = arith.addf %1349, %1402 : vector<8x8xf32>
    %c8_712 = arith.constant 8 : index
    %c25_713 = arith.constant 25 : index
    %1404 = memref.load %arg2[%c8_712, %c25_713] : memref<13x27xf32, #tpu.memory_space<smem>>
    %1405 = vector.broadcast %1404 : f32 to vector<8x8xf32>
    %1406 = arith.mulf %1405, %1370 : vector<8x8xf32>
    %1407 = arith.addf %1353, %1406 : vector<8x8xf32>
    %c9_714 = arith.constant 9 : index
    %c25_715 = arith.constant 25 : index
    %1408 = memref.load %arg2[%c9_714, %c25_715] : memref<13x27xf32, #tpu.memory_space<smem>>
    %1409 = vector.broadcast %1408 : f32 to vector<8x8xf32>
    %1410 = arith.mulf %1409, %1370 : vector<8x8xf32>
    %1411 = arith.addf %1357, %1410 : vector<8x8xf32>
    %c10_716 = arith.constant 10 : index
    %c25_717 = arith.constant 25 : index
    %1412 = memref.load %arg2[%c10_716, %c25_717] : memref<13x27xf32, #tpu.memory_space<smem>>
    %1413 = vector.broadcast %1412 : f32 to vector<8x8xf32>
    %1414 = arith.mulf %1413, %1370 : vector<8x8xf32>
    %1415 = arith.addf %1361, %1414 : vector<8x8xf32>
    %c11_718 = arith.constant 11 : index
    %c25_719 = arith.constant 25 : index
    %1416 = memref.load %arg2[%c11_718, %c25_719] : memref<13x27xf32, #tpu.memory_space<smem>>
    %1417 = vector.broadcast %1416 : f32 to vector<8x8xf32>
    %1418 = arith.mulf %1417, %1370 : vector<8x8xf32>
    %1419 = arith.addf %1365, %1418 : vector<8x8xf32>
    %c12_720 = arith.constant 12 : index
    %c25_721 = arith.constant 25 : index
    %1420 = memref.load %arg2[%c12_720, %c25_721] : memref<13x27xf32, #tpu.memory_space<smem>>
    %1421 = vector.broadcast %1420 : f32 to vector<8x8xf32>
    %1422 = arith.mulf %1421, %1370 : vector<8x8xf32>
    %1423 = arith.addf %1369, %1422 : vector<8x8xf32>
    %1424 = vector.extract_strided_slice %983 {offsets = [1, 1], sizes = [8, 8], strides = [1, 1]} : vector<9x9xf32> to vector<8x8xf32>
    %1425 = arith.maximumf %1371, %1424 : vector<8x8xf32>
    %c0_722 = arith.constant 0 : index
    %c26 = arith.constant 26 : index
    %1426 = memref.load %arg2[%c0_722, %c26] : memref<13x27xf32, #tpu.memory_space<smem>>
    %1427 = vector.broadcast %1426 : f32 to vector<8x8xf32>
    %1428 = arith.mulf %1427, %1424 : vector<8x8xf32>
    %1429 = arith.addf %1375, %1428 : vector<8x8xf32>
    %c1_723 = arith.constant 1 : index
    %c26_724 = arith.constant 26 : index
    %1430 = memref.load %arg2[%c1_723, %c26_724] : memref<13x27xf32, #tpu.memory_space<smem>>
    %1431 = vector.broadcast %1430 : f32 to vector<8x8xf32>
    %1432 = arith.mulf %1431, %1424 : vector<8x8xf32>
    %1433 = arith.addf %1379, %1432 : vector<8x8xf32>
    %c2_725 = arith.constant 2 : index
    %c26_726 = arith.constant 26 : index
    %1434 = memref.load %arg2[%c2_725, %c26_726] : memref<13x27xf32, #tpu.memory_space<smem>>
    %1435 = vector.broadcast %1434 : f32 to vector<8x8xf32>
    %1436 = arith.mulf %1435, %1424 : vector<8x8xf32>
    %1437 = arith.addf %1383, %1436 : vector<8x8xf32>
    %c3_727 = arith.constant 3 : index
    %c26_728 = arith.constant 26 : index
    %1438 = memref.load %arg2[%c3_727, %c26_728] : memref<13x27xf32, #tpu.memory_space<smem>>
    %1439 = vector.broadcast %1438 : f32 to vector<8x8xf32>
    %1440 = arith.mulf %1439, %1424 : vector<8x8xf32>
    %1441 = arith.addf %1387, %1440 : vector<8x8xf32>
    %c4_729 = arith.constant 4 : index
    %c26_730 = arith.constant 26 : index
    %1442 = memref.load %arg2[%c4_729, %c26_730] : memref<13x27xf32, #tpu.memory_space<smem>>
    %1443 = vector.broadcast %1442 : f32 to vector<8x8xf32>
    %1444 = arith.mulf %1443, %1424 : vector<8x8xf32>
    %1445 = arith.addf %1391, %1444 : vector<8x8xf32>
    %c5_731 = arith.constant 5 : index
    %c26_732 = arith.constant 26 : index
    %1446 = memref.load %arg2[%c5_731, %c26_732] : memref<13x27xf32, #tpu.memory_space<smem>>
    %1447 = vector.broadcast %1446 : f32 to vector<8x8xf32>
    %1448 = arith.mulf %1447, %1424 : vector<8x8xf32>
    %1449 = arith.addf %1395, %1448 : vector<8x8xf32>
    %c6_733 = arith.constant 6 : index
    %c26_734 = arith.constant 26 : index
    %1450 = memref.load %arg2[%c6_733, %c26_734] : memref<13x27xf32, #tpu.memory_space<smem>>
    %1451 = vector.broadcast %1450 : f32 to vector<8x8xf32>
    %1452 = arith.mulf %1451, %1424 : vector<8x8xf32>
    %1453 = arith.addf %1399, %1452 : vector<8x8xf32>
    %c7_735 = arith.constant 7 : index
    %c26_736 = arith.constant 26 : index
    %1454 = memref.load %arg2[%c7_735, %c26_736] : memref<13x27xf32, #tpu.memory_space<smem>>
    %1455 = vector.broadcast %1454 : f32 to vector<8x8xf32>
    %1456 = arith.mulf %1455, %1424 : vector<8x8xf32>
    %1457 = arith.addf %1403, %1456 : vector<8x8xf32>
    %c8_737 = arith.constant 8 : index
    %c26_738 = arith.constant 26 : index
    %1458 = memref.load %arg2[%c8_737, %c26_738] : memref<13x27xf32, #tpu.memory_space<smem>>
    %1459 = vector.broadcast %1458 : f32 to vector<8x8xf32>
    %1460 = arith.mulf %1459, %1424 : vector<8x8xf32>
    %1461 = arith.addf %1407, %1460 : vector<8x8xf32>
    %c9_739 = arith.constant 9 : index
    %c26_740 = arith.constant 26 : index
    %1462 = memref.load %arg2[%c9_739, %c26_740] : memref<13x27xf32, #tpu.memory_space<smem>>
    %1463 = vector.broadcast %1462 : f32 to vector<8x8xf32>
    %1464 = arith.mulf %1463, %1424 : vector<8x8xf32>
    %1465 = arith.addf %1411, %1464 : vector<8x8xf32>
    %c10_741 = arith.constant 10 : index
    %c26_742 = arith.constant 26 : index
    %1466 = memref.load %arg2[%c10_741, %c26_742] : memref<13x27xf32, #tpu.memory_space<smem>>
    %1467 = vector.broadcast %1466 : f32 to vector<8x8xf32>
    %1468 = arith.mulf %1467, %1424 : vector<8x8xf32>
    %1469 = arith.addf %1415, %1468 : vector<8x8xf32>
    %c11_743 = arith.constant 11 : index
    %c26_744 = arith.constant 26 : index
    %1470 = memref.load %arg2[%c11_743, %c26_744] : memref<13x27xf32, #tpu.memory_space<smem>>
    %1471 = vector.broadcast %1470 : f32 to vector<8x8xf32>
    %1472 = arith.mulf %1471, %1424 : vector<8x8xf32>
    %1473 = arith.addf %1419, %1472 : vector<8x8xf32>
    %c12_745 = arith.constant 12 : index
    %c26_746 = arith.constant 26 : index
    %1474 = memref.load %arg2[%c12_745, %c26_746] : memref<13x27xf32, #tpu.memory_space<smem>>
    %1475 = vector.broadcast %1474 : f32 to vector<8x8xf32>
    %1476 = arith.mulf %1475, %1424 : vector<8x8xf32>
    %1477 = arith.addf %1423, %1476 : vector<8x8xf32>
    %1478 = tpu.concatenate %1429, %1433, %1437, %1441, %1445, %1449, %1453, %1457, %1461, %1465, %1469, %1473, %1477, %431, %928, %1425 in 1 : vector<8x8xf32>, vector<8x8xf32>, vector<8x8xf32>, vector<8x8xf32>, vector<8x8xf32>, vector<8x8xf32>, vector<8x8xf32>, vector<8x8xf32>, vector<8x8xf32>, vector<8x8xf32>, vector<8x8xf32>, vector<8x8xf32>, vector<8x8xf32>, vector<8x8xf32>, vector<8x8xf32>, vector<8x8xf32> -> vector<8x128xf32>
    %1479 = tpu.iota {dimensions = array<i32: 0>} : vector<8x128xi32>
    %1480 = tpu.iota {dimensions = array<i32: 1>} : vector<8x128xi32>
    %c7_i32 = arith.constant 7 : i32
    %1481 = vector.broadcast %c7_i32 : i32 to vector<8x128xi32>
    %1482 = arith.cmpi slt, %1479, %1481 : vector<8x128xi32>
    %c8_i32 = arith.constant 8 : i32
    %c0_i32 = arith.constant 0 : i32
    %1483 = arith.cmpi eq, %c8_i32, %c0_i32 : i32
    %c1_i32 = arith.constant 1 : i32
    %1484 = arith.select %1483, %c1_i32, %c8_i32 : i32
    %1485 = vector.broadcast %1484 : i32 to vector<8x128xi32>
    %1486 = arith.remsi %1480, %1485 : vector<8x128xi32>
    %c0_i32_747 = arith.constant 0 : i32
    %1487 = vector.broadcast %c0_i32_747 : i32 to vector<8x128xi32>
    %1488 = arith.cmpi ne, %1486, %1487 : vector<8x128xi32>
    %c0_i32_748 = arith.constant 0 : i32
    %1489 = vector.broadcast %c0_i32_748 : i32 to vector<8x128xi32>
    %1490 = arith.cmpi slt, %1486, %1489 : vector<8x128xi32>
    %c0_i32_749 = arith.constant 0 : i32
    %1491 = arith.cmpi slt, %1484, %c0_i32_749 : i32
    %1492 = vector.broadcast %1491 : i1 to vector<8x128xi1>
    %1493 = vector.broadcast %1492 : vector<8x128xi1> to vector<8x128xi1>
    %1494 = arith.xori %1490, %1493 : vector<8x128xi1>
    %1495 = arith.andi %1494, %1488 : vector<8x128xi1>
    %1496 = vector.broadcast %1484 : i32 to vector<8x128xi32>
    %1497 = arith.addi %1486, %1496 : vector<8x128xi32>
    %1498 = arith.select %1495, %1497, %1486 : vector<8x128xi1>, vector<8x128xi32>
    %c7_i32_750 = arith.constant 7 : i32
    %1499 = vector.broadcast %c7_i32_750 : i32 to vector<8x128xi32>
    %1500 = arith.cmpi slt, %1498, %1499 : vector<8x128xi32>
    %1501 = arith.andi %1482, %1500 : vector<8x128xi1>
    %1502 = arith.extui %1501 : vector<8x128xi1> to vector<8x128xi32>
    %1503 = arith.sitofp %1502 : vector<8x128xi32> to vector<8x128xf32>
    %1504 = arith.mulf %1478, %1503 : vector<8x128xf32>
    %cst = arith.constant dense<0.000000e+00> : vector<128xf32>
    %1505 = vector.multi_reduction <add>, %1504, %cst [0] : vector<8x128xf32> to vector<128xf32>
    %1506 = vector.shape_cast %1505 : vector<128xf32> to vector<1x128xf32>
    %1507 = arith.mulf %1504, %1478 : vector<8x128xf32>
    %cst_751 = arith.constant dense<0.000000e+00> : vector<128xf32>
    %1508 = vector.multi_reduction <add>, %1507, %cst_751 [0] : vector<8x128xf32> to vector<128xf32>
    %1509 = vector.shape_cast %1508 : vector<128xf32> to vector<1x128xf32>
    %1510 = tpu.concatenate %1506, %1509 in 0 : vector<1x128xf32>, vector<1x128xf32> -> vector<2x128xf32>
    %c0_752 = arith.constant 0 : index
    %c0_753 = arith.constant 0 : index
    %c0_754 = arith.constant 0 : index
    %1511 = vector.load %arg4[%c0_752, %c0_753, %c0_754] : memref<1x2x128xf32, #tpu.memory_space<vmem>>, vector<1x2x128xf32>
    %1512 = vector.shape_cast %1511 : vector<1x2x128xf32> to vector<2x128xf32>
    %1513 = vector.shape_cast %1510 : vector<2x128xf32> to vector<1x2x128xf32>
    tpu.vector_store %arg4[%c0_752, %c0_753, %c0_754], %1513 {strides = array<i32>} : memref<1x2x128xf32, #tpu.memory_space<vmem>>, vector<1x2x128xf32>,
    %c0_755 = arith.constant 0 : index
    %c0_756 = arith.constant 0 : index
    %1514 = vector.load %arg3[%c0_755, %c0_756] : memref<8x128xf32, #tpu.memory_space<vmem>>, vector<8x128xf32>
    tpu.vector_store %arg3[%c0_755, %c0_756], %1478 {strides = array<i32>} : memref<8x128xf32, #tpu.memory_space<vmem>>, vector<8x128xf32>,
    return
  }
  func.func @transform_0(%arg0: i32) -> (i32, i32, i32, i32, i32, i32) {
    %c0_i32 = arith.constant 0 : i32
    %c0_i32_0 = arith.constant 0 : i32
    %c0_i32_1 = arith.constant 0 : i32
    %c0_i32_2 = arith.constant 0 : i32
    %c0_i32_3 = arith.constant 0 : i32
    %c0_i32_4 = arith.constant 0 : i32
    return %arg0, %c0_i32, %c0_i32_0, %c0_i32_1, %c0_i32_2, %c0_i32_3 : i32, i32, i32, i32, i32, i32
  }
  func.func @transform_1(%arg0: i32) -> (i32, i32) {
    %c0_i32 = arith.constant 0 : i32
    %c0_i32_0 = arith.constant 0 : i32
    %c0_i32_1 = arith.constant 0 : i32
    return %c0_i32, %c0_i32_0 : i32, i32
  }
  func.func @transform_2(%arg0: i32) -> (i32, i32) {
    %c0_i32 = arith.constant 0 : i32
    %c0_i32_0 = arith.constant 0 : i32
    return %arg0, %c0_i32 : i32, i32
  }
  func.func @transform_3(%arg0: i32) -> (i32, i32, i32) {
    %c0_i32 = arith.constant 0 : i32
    %c0_i32_0 = arith.constant 0 : i32
    %c0_i32_1 = arith.constant 0 : i32
    return %arg0, %c0_i32, %c0_i32_0 : i32, i32, i32
  }
}

</mosaic_0001>

<llo_original>
// kernel: initial_block.3
$region0: #{initial_block.3}
  #allocation0 [shape = 'u32[]', space=smem, size = 0x4, offset = 0x4, fixed_abs, tag = 'smem constant byte address 0x4 - core index']
  #allocation1 [shape = 'u32[72,128]{1,0:T(1,128)}', space=vmem, size = 0x9000, scoped, tag = 'internal scratch']
  %s0 = inlined_call_operand.vmem [shape: f32[16,128], index: 0, kind: input, shape index: {}]
  %s1 = inlined_call_operand.vmem [shape: f32[1,128], index: 1, kind: input, shape index: {}]
  %s2 = inlined_call_operand.vmem [shape: f32[1,128], index: 2, kind: input, shape index: {}]
  %s3 = inlined_call_operand.vmem [shape: f32[16,128], index: 3, kind: output, shape index: {}]
  %s4 = sld [smem:[#allocation0]]
  $region45: #{initial_block.3} parent=0
    _
  %s6 = ssub.s32 1, %s4
  %s7 = scalar_select 0, %s6, %s4
  loop: start=0, step=1, limit=4
  $region2: #{initial_block.3} parent=0 // loop_pre_header
    _
  $region3: #{initial_block.3} parent=0 // loop_header
    %s9 = sphi 0, %s13
    %p10 = scmp.ge.s32.totalorder %s9, 4
    %s19 = sphi 0, %s21
    %s22 = sphi 0, %s19
    %s23 = sphi 0, %s22
    %s39 = sphi 0, %s23
    %s43 = sphi 0, %s43
    %s45 = sphi 0, %s43
    %s46 = sphi 0, %s45
    %s60 = sphi 0, %s46
    %s64 = sphi 0, %s64
    %s66 = sphi 0, %s64
    %s67 = sphi 0, %s66
    %s81 = sphi 0, %s67
    %s87 = sphi 0, %s89
    %s90 = sphi 0, %s87
    %s91 = sphi 0, %s90
    %s107 = sphi 0, %s91
  $region4: #{initial_block.3} parent=0 // loop_header_branch
    %12 = sbr.rel (%p10) target = $region8
  $region5: #{initial_block.3} parent=0 // loop_body
    %s14 = ssub.s32 %s9, 1
    %s15 = ssub.s32 %s9, 2
    %s16 = sadd.s32 %s9, 1
    %s17 = ssub.s32 %s9, %s16
    %p18 = scmp.eq.s32.totalorder %s17, 0
    %s20 = sadd.s32 %s19, 1
    %s21 = scalar_select %p18, %s19, %s20
    %p24 = pneg %p18
    %p25 = scmp.eq.s32.totalorder %s9, 1
    %p26 = por %p24, %p25
    %p27 = scmp.ne.s32.totalorder %s19, %s22
    %p28 = scmp.eq.s32.totalorder %s9, 0
    %p29 = por %p27, %p28
    %p30 = scmp.ne.s32.totalorder %s19, %s22
    %p31 = scmp.eq.s32.totalorder %s14, 1
    %p32 = por %p30, %p31
    %p33 = scmp.ne.s32.totalorder %s22, %s23
    %p34 = scmp.eq.s32.totalorder %s14, 0
    %p35 = por %p33, %p34
    %p36 = scmp.ne.s32.totalorder %s22, %s23
    %p37 = scmp.eq.s32.totalorder %s15, 1
    %p38 = por %p36, %p37
    %p40 = scmp.ne.s32.totalorder %s23, %s39
    %p41 = scmp.eq.s32.totalorder %s15, 0
    %p42 = por %p40, %p41
    %s44 = sadd.s32 %s43, 1
    %p47 = scmp.eq.s32.totalorder %s9, 1
    %p48 = scmp.ne.s32.totalorder %s43, %s45
    %p49 = scmp.eq.s32.totalorder %s9, 0
    %p50 = por %p48, %p49
    %p51 = scmp.ne.s32.totalorder %s43, %s45
    %p52 = scmp.eq.s32.totalorder %s14, 1
    %p53 = por %p51, %p52
    %p54 = scmp.ne.s32.totalorder %s45, %s46
    %p55 = scmp.eq.s32.totalorder %s14, 0
    %p56 = por %p54, %p55
    %p57 = scmp.ne.s32.totalorder %s45, %s46
    %p58 = scmp.eq.s32.totalorder %s15, 1
    %p59 = por %p57, %p58
    %p61 = scmp.ne.s32.totalorder %s46, %s60
    %p62 = scmp.eq.s32.totalorder %s15, 0
    %p63 = por %p61, %p62
    %s65 = sadd.s32 %s64, 1
    %p68 = scmp.eq.s32.totalorder %s9, 1
    %p69 = scmp.ne.s32.totalorder %s64, %s66
    %p70 = scmp.eq.s32.totalorder %s9, 0
    %p71 = por %p69, %p70
    %p72 = scmp.ne.s32.totalorder %s64, %s66
    %p73 = scmp.eq.s32.totalorder %s14, 1
    %p74 = por %p72, %p73
    %p75 = scmp.ne.s32.totalorder %s66, %s67
    %p76 = scmp.eq.s32.totalorder %s14, 0
    %p77 = por %p75, %p76
    %p78 = scmp.ne.s32.totalorder %s66, %s67
    %p79 = scmp.eq.s32.totalorder %s15, 1
    %p80 = por %p78, %p79
    %p82 = scmp.ne.s32.totalorder %s67, %s81
    %p83 = scmp.eq.s32.totalorder %s15, 0
    %p84 = por %p82, %p83
    %s85 = ssub.s32 %s9, %s16
    %p86 = scmp.eq.s32.totalorder %s85, 0
    %s88 = sadd.s32 %s87, 1
    %s89 = scalar_select %p86, %s87, %s88
    %p92 = pneg %p86
    %p93 = scmp.eq.s32.totalorder %s9, 1
    %p94 = por %p92, %p93
    %p95 = scmp.ne.s32.totalorder %s87, %s90
    %p96 = scmp.eq.s32.totalorder %s9, 0
    %p97 = por %p95, %p96
    %p98 = scmp.ne.s32.totalorder %s87, %s90
    %p99 = scmp.eq.s32.totalorder %s14, 1
    %p100 = por %p98, %p99
    %p101 = scmp.ne.s32.totalorder %s90, %s91
    %p102 = scmp.eq.s32.totalorder %s14, 0
    %p103 = por %p101, %p102
    %p104 = scmp.ne.s32.totalorder %s90, %s91
    %p105 = scmp.eq.s32.totalorder %s15, 1
    %p106 = por %p104, %p105
    %p108 = scmp.ne.s32.totalorder %s91, %s107
    %p109 = scmp.eq.s32.totalorder %s15, 0
    %p110 = por %p108, %p109
    %p111 = scmp.le.s32.totalorder 1, %s9
    %p112 = scmp.lt.s32.totalorder %s9, 3
    %p113 = pnand %p111, %p112
    %p114 = pneg %p113
    // Predicated region
    $region9: #{initial_block.3} parent=5 // pred_check
      _
    $region10: #{initial_block.3} parent=5 // pred_check_branch
      %116 = sbr.rel (%p113) target = $region12
    $region11: #{initial_block.3} parent=5 // pred_region
      %s117 = ssub.s32 %s9, 1
      // Predicated region
      $region13: #{initial_block.3} parent=11 // pred_check
        %p118 = pneg %p56
      $region14: #{initial_block.3} parent=11 // pred_check_branch
        %120 = sbr.rel (%p118) target = $region16
      $region15: #{initial_block.3} parent=11 // pred_region
        _
      $region16: #{initial_block.3} parent=11 // pred_fallthru
        _
      // Predicated region
      $region17: #{initial_block.3} parent=11 // pred_check
        %p121 = pneg %p77
      $region18: #{initial_block.3} parent=11 // pred_check_branch
        %123 = sbr.rel (%p121) target = $region20
      $region19: #{initial_block.3} parent=11 // pred_region
        _
      $region20: #{initial_block.3} parent=11 // pred_fallthru
        _
    $region12: #{initial_block.3} parent=5 // pred_fallthru
      _
    %p124 = scmp.lt.s32.totalorder %s9, 2
    // Predicated region
    $region21: #{initial_block.3} parent=5 // pred_check
      %p125 = pneg %p124
    $region22: #{initial_block.3} parent=5 // pred_check_branch
      %127 = sbr.rel (%p125) target = $region24
    $region23: #{initial_block.3} parent=5 // pred_region
      // Predicated region
      $region25: #{initial_block.3} parent=23 // pred_check
        %p128 = pneg %p29
      $region26: #{initial_block.3} parent=23 // pred_check_branch
        %130 = sbr.rel (%p128) target = $region28
      $region27: #{initial_block.3} parent=23 // pred_region
        %p131 = scmp.lt.s32.totalorder %s9, 1
        %s132 = scalar_select %p131, %s9, 1
        %s133 = smul.addr %s132, 8
        %s134 = scalar_lea.vmem %s0, %s133
      $region28: #{initial_block.3} parent=23 // pred_fallthru
        _
    $region24: #{initial_block.3} parent=5 // pred_fallthru
      _
    %p135 = scmp.le.s32.totalorder 1, %s9
    %p136 = scmp.lt.s32.totalorder %s9, 3
    %p137 = pnand %p135, %p136
    %p138 = pneg %p137
    // Predicated region
    $region29: #{initial_block.3} parent=5 // pred_check
      _
    $region30: #{initial_block.3} parent=5 // pred_check_branch
      %140 = sbr.rel (%p137) target = $region32
    $region31: #{initial_block.3} parent=5 // pred_region
      %s141 = ssub.s32 %s9, 1
      %p142 = scmp.lt.s32.totalorder %s14, 1
      %s143 = scalar_select %p142, %s14, 1
      %s144 = smul.addr %s143, 8
      %s145 = scalar_lea.vmem %s0, %s144
      %p146 = pneg %p35
      %p147 = pneg %p32
      %p148 = pneg %p56
      %p149 = pneg %p53
      %p150 = pneg %p77
      %p151 = pneg %p74
      %p152 = pneg %p103
      %p153 = pneg %p100
      %p154 = scmp.lt.s32.totalorder %s14, 1
      %s155 = scalar_select %p154, %s14, 1
      %s156 = smul.addr %s155, 8
      %s157 = scalar_lea.vmem %s3, %s156
      %p158 = scmp.lt.s32.totalorder %s14, 1
      %s159 = scalar_select %p158, %s14, 1
      %s160 = smul.addr %s159, 8
      %s161 = scalar_lea.vmem %s0, %s160
      %p162 = scmp.lt.s32.totalorder %s14, 1
      %s163 = scalar_select %p162, %s14, 1
      %s164 = smul.addr %s163, 8
      %s165 = scalar_lea.vmem %s3, %s164
      %v166 = vld [vmem:[%s161] sm:$0xff]
      %v167 = vld [vmem:[%s1] sm:$0x1]
      %v169 = vperm.slane %v167, 0
      %v171 = vmul.f32 %v166, %v169
      %v172 = vld [vmem:[%s2] sm:$0x1]
      %v174 = vperm.slane %v172, 0
      %v176 = vadd.f32 %v171, %v174
      %v177 = vmax.f32 %v176, 0.0
      %178 = vst [vmem:[%s165] sm:$0xff] %v177
      %p179 = scmp.lt.s32.totalorder %s14, 1
      %s180 = scalar_select %p179, %s14, 1
      %s181 = smul.addr %s180, 8
      %s182 = scalar_lea.vmem %s3, %s181
      // Predicated region
      $region33: #{initial_block.3} parent=31 // pred_check
        %p183 = pneg %p100
      $region34: #{initial_block.3} parent=31 // pred_check_branch
        %185 = sbr.rel (%p183) target = $region36
      $region35: #{initial_block.3} parent=31 // pred_region
        _
      $region36: #{initial_block.3} parent=31 // pred_fallthru
        _
    $region32: #{initial_block.3} parent=5 // pred_fallthru
      _
    %p186 = scmp.le.s32.totalorder 2, %s9
    // Predicated region
    $region37: #{initial_block.3} parent=5 // pred_check
      %p187 = pneg %p186
    $region38: #{initial_block.3} parent=5 // pred_check_branch
      %189 = sbr.rel (%p187) target = $region40
    $region39: #{initial_block.3} parent=5 // pred_region
      %s190 = ssub.s32 %s9, 2
      // Predicated region
      $region41: #{initial_block.3} parent=39 // pred_check
        %p191 = pneg %p106
      $region42: #{initial_block.3} parent=39 // pred_check_branch
        %193 = sbr.rel (%p191) target = $region44
      $region43: #{initial_block.3} parent=39 // pred_region
        %p194 = scmp.lt.s32.totalorder %s15, 1
        %s195 = scalar_select %p194, %s15, 1
        %s196 = smul.addr %s195, 8
        %s197 = scalar_lea.vmem %s3, %s196
      $region44: #{initial_block.3} parent=39 // pred_fallthru
        _
    $region40: #{initial_block.3} parent=5 // pred_fallthru
      _
  $region6: #{initial_block.3} parent=0 // loop_footer
    %s13 = sadd.s32 1, %s9
  $region7: #{initial_block.3} parent=0 // loop_footer_branch
    %8 = sbr.rel target = $region3
  $region8: #{initial_block.3} parent=0 // loop_exit
    _

// kernel: initial_block.2
$region0: #{initial_block.2}
  #allocation0 [shape = 'u32[]', space=smem, size = 0x4, offset = 0x4, fixed_abs, tag = 'smem constant byte address 0x4 - core index']
  #allocation1 [shape = 'u32[72,128]{1,0:T(1,128)}', space=vmem, size = 0x9000, scoped, tag = 'internal scratch']
  %s0 = inlined_call_operand.vmem [shape: bf16[2,2,2,3,9,9], index: 0, kind: input, shape index: {}]
  %s1 = inlined_call_operand.vmem [shape: f32[13,27], index: 1, kind: input, shape index: {}]
  %s2 = inlined_call_operand.vmem [shape: f32[16,128], index: 2, kind: output, shape index: {0}]
  %s3 = inlined_call_operand.vmem [shape: f32[2,2,128], index: 3, kind: output, shape index: {1}]
  %4 = xla_tuple %s2, %s3
  %s5 = sld [smem:[#allocation0]]
  $region53: #{initial_block.2} parent=0
    _
  %s7 = ssub.s32 1, %s5
  %s8 = scalar_select 0, %s7, %s5
  $region1: #{initial_block.2} parent=0
    #allocation2 [shape = 'u8[8192]{0}', space=smem, size = 0x2000, scoped, tag = 'input window, operand 1, single buffered']
    #allocation3 [shape = 's32[2]{0}', space=sflag, size = 0x8, scoped, tag = 'scoped memory for initial_block.2']
    %9 = vsyncpa [#allocation3], 0
    loop: start=0, step=1, limit=4
    $region2: #{initial_block.2} parent=1 // loop_pre_header
      _
    $region3: #{initial_block.2} parent=1 // loop_header
      %s11 = sphi 0, %s15
      %p12 = scmp.ge.s32.totalorder %s11, 4
      %s21 = sphi 0, %s23
      %s24 = sphi 0, %s21
      %s25 = sphi 0, %s24
      %s41 = sphi 0, %s25
      %s45 = sphi 0, %s45
      %s47 = sphi 0, %s45
      %s48 = sphi 0, %s47
      %s62 = sphi 0, %s48
      %s68 = sphi 0, %s70
      %s71 = sphi 0, %s68
      %s72 = sphi 0, %s71
      %s88 = sphi 0, %s72
      %s94 = sphi 0, %s96
      %s97 = sphi 0, %s94
      %s98 = sphi 0, %s97
      %s114 = sphi 0, %s98
    $region4: #{initial_block.2} parent=1 // loop_header_branch
      %14 = sbr.rel (%p12) target = $region8
    $region5: #{initial_block.2} parent=1 // loop_body
      %s16 = ssub.s32 %s11, 1
      %s17 = ssub.s32 %s11, 2
      %s18 = sadd.s32 %s11, 1
      %s19 = ssub.s32 %s11, %s18
      %p20 = scmp.eq.s32.totalorder %s19, 0
      %s22 = sadd.s32 %s21, 1
      %s23 = scalar_select %p20, %s21, %s22
      %p26 = pneg %p20
      %p27 = scmp.eq.s32.totalorder %s11, 1
      %p28 = por %p26, %p27
      %p29 = scmp.ne.s32.totalorder %s21, %s24
      %p30 = scmp.eq.s32.totalorder %s11, 0
      %p31 = por %p29, %p30
      %p32 = scmp.ne.s32.totalorder %s21, %s24
      %p33 = scmp.eq.s32.totalorder %s16, 1
      %p34 = por %p32, %p33
      %p35 = scmp.ne.s32.totalorder %s24, %s25
      %p36 = scmp.eq.s32.totalorder %s16, 0
      %p37 = por %p35, %p36
      %p38 = scmp.ne.s32.totalorder %s24, %s25
      %p39 = scmp.eq.s32.totalorder %s17, 1
      %p40 = por %p38, %p39
      %p42 = scmp.ne.s32.totalorder %s25, %s41
      %p43 = scmp.eq.s32.totalorder %s17, 0
      %p44 = por %p42, %p43
      %s46 = sadd.s32 %s45, 1
      %p49 = scmp.eq.s32.totalorder %s11, 1
      %p50 = scmp.ne.s32.totalorder %s45, %s47
      %p51 = scmp.eq.s32.totalorder %s11, 0
      %p52 = por %p50, %p51
      %p53 = scmp.ne.s32.totalorder %s45, %s47
      %p54 = scmp.eq.s32.totalorder %s16, 1
      %p55 = por %p53, %p54
      %p56 = scmp.ne.s32.totalorder %s47, %s48
      %p57 = scmp.eq.s32.totalorder %s16, 0
      %p58 = por %p56, %p57
      %p59 = scmp.ne.s32.totalorder %s47, %s48
      %p60 = scmp.eq.s32.totalorder %s17, 1
      %p61 = por %p59, %p60
      %p63 = scmp.ne.s32.totalorder %s48, %s62
      %p64 = scmp.eq.s32.totalorder %s17, 0
      %p65 = por %p63, %p64
      %s66 = ssub.s32 %s11, %s18
      %p67 = scmp.eq.s32.totalorder %s66, 0
      %s69 = sadd.s32 %s68, 1
      %s70 = scalar_select %p67, %s68, %s69
      %p73 = pneg %p67
      %p74 = scmp.eq.s32.totalorder %s11, 1
      %p75 = por %p73, %p74
      %p76 = scmp.ne.s32.totalorder %s68, %s71
      %p77 = scmp.eq.s32.totalorder %s11, 0
      %p78 = por %p76, %p77
      %p79 = scmp.ne.s32.totalorder %s68, %s71
      %p80 = scmp.eq.s32.totalorder %s16, 1
      %p81 = por %p79, %p80
      %p82 = scmp.ne.s32.totalorder %s71, %s72
      %p83 = scmp.eq.s32.totalorder %s16, 0
      %p84 = por %p82, %p83
      %p85 = scmp.ne.s32.totalorder %s71, %s72
      %p86 = scmp.eq.s32.totalorder %s17, 1
      %p87 = por %p85, %p86
      %p89 = scmp.ne.s32.totalorder %s72, %s88
      %p90 = scmp.eq.s32.totalorder %s17, 0
      %p91 = por %p89, %p90
      %s92 = ssub.s32 %s11, %s18
      %p93 = scmp.eq.s32.totalorder %s92, 0
      %s95 = sadd.s32 %s94, 1
      %s96 = scalar_select %p93, %s94, %s95
      %p99 = pneg %p93
      %p100 = scmp.eq.s32.totalorder %s11, 1
      %p101 = por %p99, %p100
      %p102 = scmp.ne.s32.totalorder %s94, %s97
      %p103 = scmp.eq.s32.totalorder %s11, 0
      %p104 = por %p102, %p103
      %p105 = scmp.ne.s32.totalorder %s94, %s97
      %p106 = scmp.eq.s32.totalorder %s16, 1
      %p107 = por %p105, %p106
      %p108 = scmp.ne.s32.totalorder %s97, %s98
      %p109 = scmp.eq.s32.totalorder %s16, 0
      %p110 = por %p108, %p109
      %p111 = scmp.ne.s32.totalorder %s97, %s98
      %p112 = scmp.eq.s32.totalorder %s17, 1
      %p113 = por %p111, %p112
      %p115 = scmp.ne.s32.totalorder %s98, %s114
      %p116 = scmp.eq.s32.totalorder %s17, 0
      %p117 = por %p115, %p116
      %p118 = scmp.le.s32.totalorder 1, %s11
      %p119 = scmp.lt.s32.totalorder %s11, 3
      %p120 = pnand %p118, %p119
      %p121 = pneg %p120
      // Predicated region
      $region9: #{initial_block.2} parent=5 // pred_check
        _
      $region10: #{initial_block.2} parent=5 // pred_check_branch
        %123 = sbr.rel (%p120) target = $region12
      $region11: #{initial_block.2} parent=5 // pred_region
        %s124 = ssub.s32 %s11, 1
        // Predicated region
        $region13: #{initial_block.2} parent=11 // pred_check
          %p125 = pneg %p58
        $region14: #{initial_block.2} parent=11 // pred_check_branch
          %127 = sbr.rel (%p125) target = $region16
        $region15: #{initial_block.2} parent=11 // pred_region
          %129 = vsyncadd [#allocation3], 0
          %s130 = sshll.u32 %s1, 4
          %s131 = int_to_ptr.vmem [resolvable:$true] %s130
          %136 = dma.vmem_to_smem %s131, 256, [#allocation2], [#allocation3], 128, 128, 8
        $region16: #{initial_block.2} parent=11 // pred_fallthru
          _
      $region12: #{initial_block.2} parent=5 // pred_fallthru
        _
      %p137 = scmp.lt.s32.totalorder %s11, 2
      // Predicated region
      $region17: #{initial_block.2} parent=5 // pred_check
        %p138 = pneg %p137
      $region18: #{initial_block.2} parent=5 // pred_check_branch
        %140 = sbr.rel (%p138) target = $region20
      $region19: #{initial_block.2} parent=5 // pred_region
        // Predicated region
        $region21: #{initial_block.2} parent=19 // pred_check
          %p141 = pneg %p31
        $region22: #{initial_block.2} parent=19 // pred_check_branch
          %143 = sbr.rel (%p141) target = $region24
        $region23: #{initial_block.2} parent=19 // pred_region
          %p144 = scmp.lt.s32.totalorder %s11, 1
          %s145 = scalar_select %p144, %s11, 1
          %s146 = smul.addr %s145, 24
          %s147 = smul.addr %s146, 4
          %s148 = scalar_lea.vmem %s0, %s147
        $region24: #{initial_block.2} parent=19 // pred_fallthru
          _
      $region20: #{initial_block.2} parent=5 // pred_fallthru
        _
      %p149 = scmp.le.s32.totalorder 1, %s11
      %p150 = scmp.lt.s32.totalorder %s11, 3
      %p151 = pnand %p149, %p150
      %p152 = pneg %p151
      // Predicated region
      $region25: #{initial_block.2} parent=5 // pred_check
        _
      $region26: #{initial_block.2} parent=5 // pred_check_branch
        %154 = sbr.rel (%p151) target = $region28
      $region27: #{initial_block.2} parent=5 // pred_region
        %s155 = ssub.s32 %s11, 1
        // Predicated region
        $region29: #{initial_block.2} parent=27 // pred_check
          %p156 = pneg %p58
        $region30: #{initial_block.2} parent=27 // pred_check_branch
          %158 = sbr.rel (%p156) target = $region32
        $region31: #{initial_block.2} parent=27 // pred_region
          %160 = dma.done [#allocation3], 256
        $region32: #{initial_block.2} parent=27 // pred_fallthru
          _
        %161 = sfence
        %p162 = scmp.lt.s32.totalorder %s16, 1
        %s163 = scalar_select %p162, %s16, 1
        %s164 = smul.addr %s163, 24
        %s165 = smul.addr %s164, 4
        %s166 = scalar_lea.vmem %s0, %s165
        %p167 = pneg %p37
        %p168 = pneg %p34
        %p169 = pneg %p58
        %p170 = pneg %p55
        %p171 = pneg %p84
        %p172 = pneg %p81
        %p173 = scmp.lt.s32.totalorder %s16, 1
        %s174 = scalar_select %p173, %s16, 1
        %s175 = smul.addr %s174, 8
        %s176 = scalar_lea.vmem %s2, %s175
        %p177 = pneg %p110
        %p178 = pneg %p107
        %p179 = scmp.lt.s32.totalorder %s16, 1
        %s180 = scalar_select %p179, %s16, 1
        %s181 = smul.addr %s180, 2
        %s182 = scalar_lea.vmem %s3, %s181
        %p183 = scmp.lt.s32.totalorder %s16, 1
        %s184 = scalar_select %p183, %s16, 1
        %s185 = smul.addr %s184, 24
        %s186 = smul.addr %s185, 4
        %s187 = scalar_lea.vmem %s0, %s186
        %p188 = scmp.lt.s32.totalorder %s16, 1
        %s189 = scalar_select %p188, %s16, 1
        %s190 = smul.addr %s189, 8
        %s191 = scalar_lea.vmem %s2, %s190
        %p192 = scmp.lt.s32.totalorder %s16, 1
        %s193 = scalar_select %p192, %s16, 1
        %s194 = smul.addr %s193, 2
        %s195 = scalar_lea.vmem %s3, %s194
        %v196 = vld [vmem:[%s187] sm:$0xf]
        %v197 = vld [vmem:[%s187 + $0x4] sm:$0x1]
        %v198 = vunpack.c.l.bf16 %v196
        %v199 = vunpack.c.l.bf16 %v197
        %s200 = scalar_lea.vmem %s187, 24
        %v201 = vld [vmem:[%s200] sm:$0xf]
        %v202 = vld [vmem:[%s200 + $0x4] sm:$0x1]
        %v203 = vunpack.c.l.bf16 %v201
        %v204 = vunpack.c.l.bf16 %v202
        %s205 = scalar_lea.vmem %s187, 48
        %v206 = vld [vmem:[%s205] sm:$0xf]
        %v207 = vunpack.c.l.bf16 %v206
        %s208 = scalar_lea.vmem %s187, 72
        %v209 = vld [vmem:[%s208] sm:$0xf]
        %v210 = vunpack.c.l.bf16 %v209
        %s211 = sld [smem:[#allocation2]]
        %v212 = vstv %s211
        %v213 = vmul.f32 %v212, %v198
        %s214 = sld [smem:[#allocation2 + $0x80]]
        %v215 = vstv %s214
        %v216 = vmul.f32 %v215, %v198
        %s217 = sld [smem:[#allocation2 + $0x100]]
        %v218 = vstv %s217
        %v219 = vmul.f32 %v218, %v198
        %s220 = sld [smem:[#allocation2 + $0x180]]
        %v221 = vstv %s220
        %v222 = vmul.f32 %v221, %v198
        %s223 = sld [smem:[#allocation2 + $0x200]]
        %v224 = vstv %s223
        %v225 = vmul.f32 %v224, %v198
        %s226 = sld [smem:[#allocation2 + $0x280]]
        %v227 = vstv %s226
        %v228 = vmul.f32 %v227, %v198
        %s229 = sld [smem:[#allocation2 + $0x300]]
        %v230 = vstv %s229
        %v231 = vmul.f32 %v230, %v198
        %s232 = sld [smem:[#allocation2 + $0x380]]
        %v233 = vstv %s232
        %v234 = vmul.f32 %v233, %v198
        %s235 = sld [smem:[#allocation2 + $0x400]]
        %v236 = vstv %s235
        %v237 = vmul.f32 %v236, %v198
        %s238 = sld [smem:[#allocation2 + $0x480]]
        %v239 = vstv %s238
        %v240 = vmul.f32 %v239, %v198
        %s241 = sld [smem:[#allocation2 + $0x500]]
        %v242 = vstv %s241
        %v243 = vmul.f32 %v242, %v198
        %s244 = sld [smem:[#allocation2 + $0x580]]
        %v245 = vstv %s244
        %v246 = vmul.f32 %v245, %v198
        %s247 = sld [smem:[#allocation2 + $0x600]]
        %v248 = vstv %s247
        %v249 = vmul.f32 %v248, %v198
        %v250 = vmax.f32 %v198, %v203
        %s251 = sld [smem:[#allocation2 + $0x1]]
        %v252 = vstv %s251
        %v253 = vmul.f32 %v252, %v203
        %v254 = vadd.f32 %v213, %v253
        %s255 = sld [smem:[#allocation2 + $0x81]]
        %v256 = vstv %s255
        %v257 = vmul.f32 %v256, %v203
        %v258 = vadd.f32 %v216, %v257
        %s259 = sld [smem:[#allocation2 + $0x101]]
        %v260 = vstv %s259
        %v261 = vmul.f32 %v260, %v203
        %v262 = vadd.f32 %v219, %v261
        %s263 = sld [smem:[#allocation2 + $0x181]]
        %v264 = vstv %s263
        %v265 = vmul.f32 %v264, %v203
        %v266 = vadd.f32 %v222, %v265
        %s267 = sld [smem:[#allocation2 + $0x201]]
        %v268 = vstv %s267
        %v269 = vmul.f32 %v268, %v203
        %v270 = vadd.f32 %v225, %v269
        %s271 = sld [smem:[#allocation2 + $0x281]]
        %v272 = vstv %s271
        %v273 = vmul.f32 %v272, %v203
        %v274 = vadd.f32 %v228, %v273
        %s275 = sld [smem:[#allocation2 + $0x301]]
        %v276 = vstv %s275
        %v277 = vmul.f32 %v276, %v203
        %v278 = vadd.f32 %v231, %v277
        %s279 = sld [smem:[#allocation2 + $0x381]]
        %v280 = vstv %s279
        %v281 = vmul.f32 %v280, %v203
        %v282 = vadd.f32 %v234, %v281
        %s283 = sld [smem:[#allocation2 + $0x401]]
        %v284 = vstv %s283
        %v285 = vmul.f32 %v284, %v203
        %v286 = vadd.f32 %v237, %v285
        %s287 = sld [smem:[#allocation2 + $0x481]]
        %v288 = vstv %s287
        %v289 = vmul.f32 %v288, %v203
        %v290 = vadd.f32 %v240, %v289
        %s291 = sld [smem:[#allocation2 + $0x501]]
        %v292 = vstv %s291
        %v293 = vmul.f32 %v292, %v203
        %v294 = vadd.f32 %v243, %v293
        %s295 = sld [smem:[#allocation2 + $0x581]]
        %v296 = vstv %s295
        %v297 = vmul.f32 %v296, %v203
        %v298 = vadd.f32 %v246, %v297
        %s299 = sld [smem:[#allocation2 + $0x601]]
        %v300 = vstv %s299
        %v301 = vmul.f32 %v300, %v203
        %v302 = vadd.f32 %v249, %v301
        %304 = vrot.lane.b32.xlu0 %v198, 127
        %v305 = vpop.permute.xlu0 %304
        %v307 = vmax.f32 %v250, %v305
        %s308 = sld [smem:[#allocation2 + $0x2]]
        %v309 = vstv %s308
        %v310 = vmul.f32 %v309, %v198
        %312 = vrot.lane.b32.xlu0 %v310, 127
        %v313 = vpop.permute.xlu0 %312
        %v315 = vadd.f32 %v254, %v313
        %s316 = sld [smem:[#allocation2 + $0x82]]
        %v317 = vstv %s316
        %v318 = vmul.f32 %v317, %v198
        %320 = vrot.lane.b32.xlu0 %v318, 127
        %v321 = vpop.permute.xlu0 %320
        %v323 = vadd.f32 %v258, %v321
        %s324 = sld [smem:[#allocation2 + $0x102]]
        %v325 = vstv %s324
        %v326 = vmul.f32 %v325, %v198
        %328 = vrot.lane.b32.xlu0 %v326, 127
        %v329 = vpop.permute.xlu0 %328
        %v331 = vadd.f32 %v262, %v329
        %s332 = sld [smem:[#allocation2 + $0x182]]
        %v333 = vstv %s332
        %v334 = vmul.f32 %v333, %v198
        %336 = vrot.lane.b32.xlu0 %v334, 127
        %v337 = vpop.permute.xlu0 %336
        %v339 = vadd.f32 %v266, %v337
        %s340 = sld [smem:[#allocation2 + $0x202]]
        %v341 = vstv %s340
        %v342 = vmul.f32 %v341, %v198
        %344 = vrot.lane.b32.xlu0 %v342, 127
        %v345 = vpop.permute.xlu0 %344
        %v347 = vadd.f32 %v270, %v345
        %s348 = sld [smem:[#allocation2 + $0x282]]
        %v349 = vstv %s348
        %v350 = vmul.f32 %v349, %v198
        %352 = vrot.lane.b32.xlu0 %v350, 127
        %v353 = vpop.permute.xlu0 %352
        %v355 = vadd.f32 %v274, %v353
        %s356 = sld [smem:[#allocation2 + $0x302]]
        %v357 = vstv %s356
        %v358 = vmul.f32 %v357, %v198
        %360 = vrot.lane.b32.xlu0 %v358, 127
        %v361 = vpop.permute.xlu0 %360
        %v363 = vadd.f32 %v278, %v361
        %s364 = sld [smem:[#allocation2 + $0x382]]
        %v365 = vstv %s364
        %v366 = vmul.f32 %v365, %v198
        %368 = vrot.lane.b32.xlu0 %v366, 127
        %v369 = vpop.permute.xlu0 %368
        %v371 = vadd.f32 %v282, %v369
        %s372 = sld [smem:[#allocation2 + $0x402]]
        %v373 = vstv %s372
        %v374 = vmul.f32 %v373, %v198
        %376 = vrot.lane.b32.xlu0 %v374, 127
        %v377 = vpop.permute.xlu0 %376
        %v379 = vadd.f32 %v286, %v377
        %s380 = sld [smem:[#allocation2 + $0x482]]
        %v381 = vstv %s380
        %v382 = vmul.f32 %v381, %v198
        %384 = vrot.lane.b32.xlu0 %v382, 127
        %v385 = vpop.permute.xlu0 %384
        %v387 = vadd.f32 %v290, %v385
        %s388 = sld [smem:[#allocation2 + $0x502]]
        %v389 = vstv %s388
        %v390 = vmul.f32 %v389, %v198
        %392 = vrot.lane.b32.xlu0 %v390, 127
        %v393 = vpop.permute.xlu0 %392
        %v395 = vadd.f32 %v294, %v393
        %s396 = sld [smem:[#allocation2 + $0x582]]
        %v397 = vstv %s396
        %v398 = vmul.f32 %v397, %v198
        %400 = vrot.lane.b32.xlu0 %v398, 127
        %v401 = vpop.permute.xlu0 %400
        %v403 = vadd.f32 %v298, %v401
        %s404 = sld [smem:[#allocation2 + $0x602]]
        %v405 = vstv %s404
        %v406 = vmul.f32 %v405, %v198
        %408 = vrot.lane.b32.xlu0 %v406, 127
        %v409 = vpop.permute.xlu0 %408
        %v411 = vadd.f32 %v302, %v409
        %v412 = vmax.f32 %v307, %v207
        %s413 = sld [smem:[#allocation2 + $0x3]]
        %v414 = vstv %s413
        %v415 = vmul.f32 %v414, %v207
        %v416 = vadd.f32 %v315, %v415
        %s417 = sld [smem:[#allocation2 + $0x83]]
        %v418 = vstv %s417
        %v419 = vmul.f32 %v418, %v207
        %v420 = vadd.f32 %v323, %v419
        %s421 = sld [smem:[#allocation2 + $0x103]]
        %v422 = vstv %s421
        %v423 = vmul.f32 %v422, %v207
        %v424 = vadd.f32 %v331, %v423
        %s425 = sld [smem:[#allocation2 + $0x183]]
        %v426 = vstv %s425
        %v427 = vmul.f32 %v426, %v207
        %v428 = vadd.f32 %v339, %v427
        %s429 = sld [smem:[#allocation2 + $0x203]]
        %v430 = vstv %s429
        %v431 = vmul.f32 %v430, %v207
        %v432 = vadd.f32 %v347, %v431
        %s433 = sld [smem:[#allocation2 + $0x283]]
        %v434 = vstv %s433
        %v435 = vmul.f32 %v434, %v207
        %v436 = vadd.f32 %v355, %v435
        %s437 = sld [smem:[#allocation2 + $0x303]]
        %v438 = vstv %s437
        %v439 = vmul.f32 %v438, %v207
        %v440 = vadd.f32 %v363, %v439
        %s441 = sld [smem:[#allocation2 + $0x383]]
        %v442 = vstv %s441
        %v443 = vmul.f32 %v442, %v207
        %v444 = vadd.f32 %v371, %v443
        %s445 = sld [smem:[#allocation2 + $0x403]]
        %v446 = vstv %s445
        %v447 = vmul.f32 %v446, %v207
        %v448 = vadd.f32 %v379, %v447
        %s449 = sld [smem:[#allocation2 + $0x483]]
        %v450 = vstv %s449
        %v451 = vmul.f32 %v450, %v207
        %v452 = vadd.f32 %v387, %v451
        %s453 = sld [smem:[#allocation2 + $0x503]]
        %v454 = vstv %s453
        %v455 = vmul.f32 %v454, %v207
        %v456 = vadd.f32 %v395, %v455
        %s457 = sld [smem:[#allocation2 + $0x583]]
        %v458 = vstv %s457
        %v459 = vmul.f32 %v458, %v207
        %v460 = vadd.f32 %v403, %v459
        %s461 = sld [smem:[#allocation2 + $0x603]]
        %v462 = vstv %s461
        %v463 = vmul.f32 %v462, %v207
        %v464 = vadd.f32 %v411, %v463
        %v465 = vmax.f32 %v412, %v210
        %s466 = sld [smem:[#allocation2 + $0x4]]
        %v467 = vstv %s466
        %v468 = vmul.f32 %v467, %v210
        %v469 = vadd.f32 %v416, %v468
        %s470 = sld [smem:[#allocation2 + $0x84]]
        %v471 = vstv %s470
        %v472 = vmul.f32 %v471, %v210
        %v473 = vadd.f32 %v420, %v472
        %s474 = sld [smem:[#allocation2 + $0x104]]
        %v475 = vstv %s474
        %v476 = vmul.f32 %v475, %v210
        %v477 = vadd.f32 %v424, %v476
        %s478 = sld [smem:[#allocation2 + $0x184]]
        %v479 = vstv %s478
        %v480 = vmul.f32 %v479, %v210
        %v481 = vadd.f32 %v428, %v480
        %s482 = sld [smem:[#allocation2 + $0x204]]
        %v483 = vstv %s482
        %v484 = vmul.f32 %v483, %v210
        %v485 = vadd.f32 %v432, %v484
        %s486 = sld [smem:[#allocation2 + $0x284]]
        %v487 = vstv %s486
        %v488 = vmul.f32 %v487, %v210
        %v489 = vadd.f32 %v436, %v488
        %s490 = sld [smem:[#allocation2 + $0x304]]
        %v491 = vstv %s490
        %v492 = vmul.f32 %v491, %v210
        %v493 = vadd.f32 %v440, %v492
        %s494 = sld [smem:[#allocation2 + $0x384]]
        %v495 = vstv %s494
        %v496 = vmul.f32 %v495, %v210
        %v497 = vadd.f32 %v444, %v496
        %s498 = sld [smem:[#allocation2 + $0x404]]
        %v499 = vstv %s498
        %v500 = vmul.f32 %v499, %v210
        %v501 = vadd.f32 %v448, %v500
        %s502 = sld [smem:[#allocation2 + $0x484]]
        %v503 = vstv %s502
        %v504 = vmul.f32 %v503, %v210
        %v505 = vadd.f32 %v452, %v504
        %s506 = sld [smem:[#allocation2 + $0x504]]
        %v507 = vstv %s506
        %v508 = vmul.f32 %v507, %v210
        %v509 = vadd.f32 %v456, %v508
        %s510 = sld [smem:[#allocation2 + $0x584]]
        %v511 = vstv %s510
        %v512 = vmul.f32 %v511, %v210
        %v513 = vadd.f32 %v460, %v512
        %s514 = sld [smem:[#allocation2 + $0x604]]
        %v515 = vstv %s514
        %v516 = vmul.f32 %v515, %v210
        %v517 = vadd.f32 %v464, %v516
        %519 = vrot.lane.b32.xlu0 %v207, 127
        %v520 = vpop.permute.xlu0 %519
        %v522 = vmax.f32 %v465, %v520
        %s523 = sld [smem:[#allocation2 + $0x5]]
        %v524 = vstv %s523
        %v525 = vmul.f32 %v524, %v207
        %527 = vrot.lane.b32.xlu0 %v525, 127
        %v528 = vpop.permute.xlu0 %527
        %v530 = vadd.f32 %v469, %v528
        %s531 = sld [smem:[#allocation2 + $0x85]]
        %v532 = vstv %s531
        %v533 = vmul.f32 %v532, %v207
        %535 = vrot.lane.b32.xlu0 %v533, 127
        %v536 = vpop.permute.xlu0 %535
        %v538 = vadd.f32 %v473, %v536
        %s539 = sld [smem:[#allocation2 + $0x105]]
        %v540 = vstv %s539
        %v541 = vmul.f32 %v540, %v207
        %543 = vrot.lane.b32.xlu0 %v541, 127
        %v544 = vpop.permute.xlu0 %543
        %v546 = vadd.f32 %v477, %v544
        %s547 = sld [smem:[#allocation2 + $0x185]]
        %v548 = vstv %s547
        %v549 = vmul.f32 %v548, %v207
        %551 = vrot.lane.b32.xlu0 %v549, 127
        %v552 = vpop.permute.xlu0 %551
        %v554 = vadd.f32 %v481, %v552
        %s555 = sld [smem:[#allocation2 + $0x205]]
        %v556 = vstv %s555
        %v557 = vmul.f32 %v556, %v207
        %559 = vrot.lane.b32.xlu0 %v557, 127
        %v560 = vpop.permute.xlu0 %559
        %v562 = vadd.f32 %v485, %v560
        %s563 = sld [smem:[#allocation2 + $0x285]]
        %v564 = vstv %s563
        %v565 = vmul.f32 %v564, %v207
        %567 = vrot.lane.b32.xlu0 %v565, 127
        %v568 = vpop.permute.xlu0 %567
        %v570 = vadd.f32 %v489, %v568
        %s571 = sld [smem:[#allocation2 + $0x305]]
        %v572 = vstv %s571
        %v573 = vmul.f32 %v572, %v207
        %575 = vrot.lane.b32.xlu0 %v573, 127
        %v576 = vpop.permute.xlu0 %575
        %v578 = vadd.f32 %v493, %v576
        %s579 = sld [smem:[#allocation2 + $0x385]]
        %v580 = vstv %s579
        %v581 = vmul.f32 %v580, %v207
        %583 = vrot.lane.b32.xlu0 %v581, 127
        %v584 = vpop.permute.xlu0 %583
        %v586 = vadd.f32 %v497, %v584
        %s587 = sld [smem:[#allocation2 + $0x405]]
        %v588 = vstv %s587
        %v589 = vmul.f32 %v588, %v207
        %591 = vrot.lane.b32.xlu0 %v589, 127
        %v592 = vpop.permute.xlu0 %591
        %v594 = vadd.f32 %v501, %v592
        %s595 = sld [smem:[#allocation2 + $0x485]]
        %v596 = vstv %s595
        %v597 = vmul.f32 %v596, %v207
        %599 = vrot.lane.b32.xlu0 %v597, 127
        %v600 = vpop.permute.xlu0 %599
        %v602 = vadd.f32 %v505, %v600
        %s603 = sld [smem:[#allocation2 + $0x505]]
        %v604 = vstv %s603
        %v605 = vmul.f32 %v604, %v207
        %607 = vrot.lane.b32.xlu0 %v605, 127
        %v608 = vpop.permute.xlu0 %607
        %v610 = vadd.f32 %v509, %v608
        %s611 = sld [smem:[#allocation2 + $0x585]]
        %v612 = vstv %s611
        %v613 = vmul.f32 %v612, %v207
        %615 = vrot.lane.b32.xlu0 %v613, 127
        %v616 = vpop.permute.xlu0 %615
        %v618 = vadd.f32 %v513, %v616
        %s619 = sld [smem:[#allocation2 + $0x605]]
        %v620 = vstv %s619
        %v621 = vmul.f32 %v620, %v207
        %623 = vrot.lane.b32.xlu0 %v621, 127
        %v624 = vpop.permute.xlu0 %623
        %v626 = vadd.f32 %v517, %v624
        %vm628 = vcmask 1046528
        %v629 = vrot.slane %v198, 1
        %v630 = vrot.slane %v199, 1
        %v631 = vsel %vm628, %v629, %v630
        %v633 = vmax.f32 %v522, %v631
        %s634 = sld [smem:[#allocation2 + $0x6]]
        %v635 = vstv %s634
        %v636 = vmul.f32 %v635, %v198
        %v637 = vmul.f32 %v635, %v199
        %v640 = vrot.slane %v636, 1
        %v641 = vrot.slane %v637, 1
        %v642 = vsel %vm628, %v640, %v641
        %v644 = vadd.f32 %v530, %v642
        %s645 = sld [smem:[#allocation2 + $0x86]]
        %v646 = vstv %s645
        %v647 = vmul.f32 %v646, %v198
        %v648 = vmul.f32 %v646, %v199
        %v651 = vrot.slane %v647, 1
        %v652 = vrot.slane %v648, 1
        %v653 = vsel %vm628, %v651, %v652
        %v655 = vadd.f32 %v538, %v653
        %s656 = sld [smem:[#allocation2 + $0x106]]
        %v657 = vstv %s656
        %v658 = vmul.f32 %v657, %v198
        %v659 = vmul.f32 %v657, %v199
        %v662 = vrot.slane %v658, 1
        %v663 = vrot.slane %v659, 1
        %v664 = vsel %vm628, %v662, %v663
        %v666 = vadd.f32 %v546, %v664
        %s667 = sld [smem:[#allocation2 + $0x186]]
        %v668 = vstv %s667
        %v669 = vmul.f32 %v668, %v198
        %v670 = vmul.f32 %v668, %v199
        %v673 = vrot.slane %v669, 1
        %v674 = vrot.slane %v670, 1
        %v675 = vsel %vm628, %v673, %v674
        %v677 = vadd.f32 %v554, %v675
        %s678 = sld [smem:[#allocation2 + $0x206]]
        %v679 = vstv %s678
        %v680 = vmul.f32 %v679, %v198
        %v681 = vmul.f32 %v679, %v199
        %v684 = vrot.slane %v680, 1
        %v685 = vrot.slane %v681, 1
        %v686 = vsel %vm628, %v684, %v685
        %v688 = vadd.f32 %v562, %v686
        %s689 = sld [smem:[#allocation2 + $0x286]]
        %v690 = vstv %s689
        %v691 = vmul.f32 %v690, %v198
        %v692 = vmul.f32 %v690, %v199
        %v695 = vrot.slane %v691, 1
        %v696 = vrot.slane %v692, 1
        %v697 = vsel %vm628, %v695, %v696
        %v699 = vadd.f32 %v570, %v697
        %s700 = sld [smem:[#allocation2 + $0x306]]
        %v701 = vstv %s700
        %v702 = vmul.f32 %v701, %v198
        %v703 = vmul.f32 %v701, %v199
        %v706 = vrot.slane %v702, 1
        %v707 = vrot.slane %v703, 1
        %v708 = vsel %vm628, %v706, %v707
        %v710 = vadd.f32 %v578, %v708
        %s711 = sld [smem:[#allocation2 + $0x386]]
        %v712 = vstv %s711
        %v713 = vmul.f32 %v712, %v198
        %v714 = vmul.f32 %v712, %v199
        %v717 = vrot.slane %v713, 1
        %v718 = vrot.slane %v714, 1
        %v719 = vsel %vm628, %v717, %v718
        %v721 = vadd.f32 %v586, %v719
        %s722 = sld [smem:[#allocation2 + $0x406]]
        %v723 = vstv %s722
        %v724 = vmul.f32 %v723, %v198
        %v725 = vmul.f32 %v723, %v199
        %v728 = vrot.slane %v724, 1
        %v729 = vrot.slane %v725, 1
        %v730 = vsel %vm628, %v728, %v729
        %v732 = vadd.f32 %v594, %v730
        %s733 = sld [smem:[#allocation2 + $0x486]]
        %v734 = vstv %s733
        %v735 = vmul.f32 %v734, %v198
        %v736 = vmul.f32 %v734, %v199
        %v739 = vrot.slane %v735, 1
        %v740 = vrot.slane %v736, 1
        %v741 = vsel %vm628, %v739, %v740
        %v743 = vadd.f32 %v602, %v741
        %s744 = sld [smem:[#allocation2 + $0x506]]
        %v745 = vstv %s744
        %v746 = vmul.f32 %v745, %v198
        %v747 = vmul.f32 %v745, %v199
        %v750 = vrot.slane %v746, 1
        %v751 = vrot.slane %v747, 1
        %v752 = vsel %vm628, %v750, %v751
        %v754 = vadd.f32 %v610, %v752
        %s755 = sld [smem:[#allocation2 + $0x586]]
        %v756 = vstv %s755
        %v757 = vmul.f32 %v756, %v198
        %v758 = vmul.f32 %v756, %v199
        %v761 = vrot.slane %v757, 1
        %v762 = vrot.slane %v758, 1
        %v763 = vsel %vm628, %v761, %v762
        %v765 = vadd.f32 %v618, %v763
        %s766 = sld [smem:[#allocation2 + $0x606]]
        %v767 = vstv %s766
        %v768 = vmul.f32 %v767, %v198
        %v769 = vmul.f32 %v767, %v199
        %v772 = vrot.slane %v768, 1
        %v773 = vrot.slane %v769, 1
        %v774 = vsel %vm628, %v772, %v773
        %v776 = vadd.f32 %v626, %v774
        %v779 = vrot.slane %v203, 1
        %v780 = vrot.slane %v204, 1
        %v781 = vsel %vm628, %v779, %v780
        %v783 = vmax.f32 %v633, %v781
        %s784 = sld [smem:[#allocation2 + $0x7]]
        %v785 = vstv %s784
        %v786 = vmul.f32 %v785, %v203
        %v787 = vmul.f32 %v785, %v204
        %v790 = vrot.slane %v786, 1
        %v791 = vrot.slane %v787, 1
        %v792 = vsel %vm628, %v790, %v791
        %v794 = vadd.f32 %v644, %v792
        %s795 = sld [smem:[#allocation2 + $0x87]]
        %v796 = vstv %s795
        %v797 = vmul.f32 %v796, %v203
        %v798 = vmul.f32 %v796, %v204
        %v801 = vrot.slane %v797, 1
        %v802 = vrot.slane %v798, 1
        %v803 = vsel %vm628, %v801, %v802
        %v805 = vadd.f32 %v655, %v803
        %s806 = sld [smem:[#allocation2 + $0x107]]
        %v807 = vstv %s806
        %v808 = vmul.f32 %v807, %v203
        %v809 = vmul.f32 %v807, %v204
        %v812 = vrot.slane %v808, 1
        %v813 = vrot.slane %v809, 1
        %v814 = vsel %vm628, %v812, %v813
        %v816 = vadd.f32 %v666, %v814
        %s817 = sld [smem:[#allocation2 + $0x187]]
        %v818 = vstv %s817
        %v819 = vmul.f32 %v818, %v203
        %v820 = vmul.f32 %v818, %v204
        %v823 = vrot.slane %v819, 1
        %v824 = vrot.slane %v820, 1
        %v825 = vsel %vm628, %v823, %v824
        %v827 = vadd.f32 %v677, %v825
        %s828 = sld [smem:[#allocation2 + $0x207]]
        %v829 = vstv %s828
        %v830 = vmul.f32 %v829, %v203
        %v831 = vmul.f32 %v829, %v204
        %v834 = vrot.slane %v830, 1
        %v835 = vrot.slane %v831, 1
        %v836 = vsel %vm628, %v834, %v835
        %v838 = vadd.f32 %v688, %v836
        %s839 = sld [smem:[#allocation2 + $0x287]]
        %v840 = vstv %s839
        %v841 = vmul.f32 %v840, %v203
        %v842 = vmul.f32 %v840, %v204
        %v845 = vrot.slane %v841, 1
        %v846 = vrot.slane %v842, 1
        %v847 = vsel %vm628, %v845, %v846
        %v849 = vadd.f32 %v699, %v847
        %s850 = sld [smem:[#allocation2 + $0x307]]
        %v851 = vstv %s850
        %v852 = vmul.f32 %v851, %v203
        %v853 = vmul.f32 %v851, %v204
        %v856 = vrot.slane %v852, 1
        %v857 = vrot.slane %v853, 1
        %v858 = vsel %vm628, %v856, %v857
        %v860 = vadd.f32 %v710, %v858
        %s861 = sld [smem:[#allocation2 + $0x387]]
        %v862 = vstv %s861
        %v863 = vmul.f32 %v862, %v203
        %v864 = vmul.f32 %v862, %v204
        %v867 = vrot.slane %v863, 1
        %v868 = vrot.slane %v864, 1
        %v869 = vsel %vm628, %v867, %v868
        %v871 = vadd.f32 %v721, %v869
        %s872 = sld [smem:[#allocation2 + $0x407]]
        %v873 = vstv %s872
        %v874 = vmul.f32 %v873, %v203
        %v875 = vmul.f32 %v873, %v204
        %v878 = vrot.slane %v874, 1
        %v879 = vrot.slane %v875, 1
        %v880 = vsel %vm628, %v878, %v879
        %v882 = vadd.f32 %v732, %v880
        %s883 = sld [smem:[#allocation2 + $0x487]]
        %v884 = vstv %s883
        %v885 = vmul.f32 %v884, %v203
        %v886 = vmul.f32 %v884, %v204
        %v889 = vrot.slane %v885, 1
        %v890 = vrot.slane %v886, 1
        %v891 = vsel %vm628, %v889, %v890
        %v893 = vadd.f32 %v743, %v891
        %s894 = sld [smem:[#allocation2 + $0x507]]
        %v895 = vstv %s894
        %v896 = vmul.f32 %v895, %v203
        %v897 = vmul.f32 %v895, %v204
        %v900 = vrot.slane %v896, 1
        %v901 = vrot.slane %v897, 1
        %v902 = vsel %vm628, %v900, %v901
        %v904 = vadd.f32 %v754, %v902
        %s905 = sld [smem:[#allocation2 + $0x587]]
        %v906 = vstv %s905
        %v907 = vmul.f32 %v906, %v203
        %v908 = vmul.f32 %v906, %v204
        %v911 = vrot.slane %v907, 1
        %v912 = vrot.slane %v908, 1
        %v913 = vsel %vm628, %v911, %v912
        %v915 = vadd.f32 %v765, %v913
        %s916 = sld [smem:[#allocation2 + $0x607]]
        %v917 = vstv %s916
        %v918 = vmul.f32 %v917, %v203
        %v919 = vmul.f32 %v917, %v204
        %v922 = vrot.slane %v918, 1
        %v923 = vrot.slane %v919, 1
        %v924 = vsel %vm628, %v922, %v923
        %v926 = vadd.f32 %v776, %v924
        %927 = vrot.lane.b32.xlu0 %v631, 127
        %v928 = vpop.permute.xlu0 %927
        %v930 = vmax.f32 %v783, %v928
        %s931 = sld [smem:[#allocation2 + $0x8]]
        %v932 = vstv %s931
        %v933 = vmul.f32 %v932, %v198
        %v934 = vmul.f32 %v932, %v199
        %v937 = vrot.slane %v933, 1
        %v938 = vrot.slane %v934, 1
        %v939 = vsel %vm628, %v937, %v938
        %940 = vrot.lane.b32.xlu0 %v939, 127
        %v941 = vpop.permute.xlu0 %940
        %v943 = vadd.f32 %v794, %v941
        %s944 = sld [smem:[#allocation2 + $0x88]]
        %v945 = vstv %s944
        %v946 = vmul.f32 %v945, %v198
        %v947 = vmul.f32 %v945, %v199
        %v950 = vrot.slane %v946, 1
        %v951 = vrot.slane %v947, 1
        %v952 = vsel %vm628, %v950, %v951
        %953 = vrot.lane.b32.xlu0 %v952, 127
        %v954 = vpop.permute.xlu0 %953
        %v956 = vadd.f32 %v805, %v954
        %s957 = sld [smem:[#allocation2 + $0x108]]
        %v958 = vstv %s957
        %v959 = vmul.f32 %v958, %v198
        %v960 = vmul.f32 %v958, %v199
        %v963 = vrot.slane %v959, 1
        %v964 = vrot.slane %v960, 1
        %v965 = vsel %vm628, %v963, %v964
        %966 = vrot.lane.b32.xlu0 %v965, 127
        %v967 = vpop.permute.xlu0 %966
        %v969 = vadd.f32 %v816, %v967
        %s970 = sld [smem:[#allocation2 + $0x188]]
        %v971 = vstv %s970
        %v972 = vmul.f32 %v971, %v198
        %v973 = vmul.f32 %v971, %v199
        %v976 = vrot.slane %v972, 1
        %v977 = vrot.slane %v973, 1
        %v978 = vsel %vm628, %v976, %v977
        %979 = vrot.lane.b32.xlu0 %v978, 127
        %v980 = vpop.permute.xlu0 %979
        %v982 = vadd.f32 %v827, %v980
        %s983 = sld [smem:[#allocation2 + $0x208]]
        %v984 = vstv %s983
        %v985 = vmul.f32 %v984, %v198
        %v986 = vmul.f32 %v984, %v199
        %v989 = vrot.slane %v985, 1
        %v990 = vrot.slane %v986, 1
        %v991 = vsel %vm628, %v989, %v990
        %992 = vrot.lane.b32.xlu0 %v991, 127
        %v993 = vpop.permute.xlu0 %992
        %v995 = vadd.f32 %v838, %v993
        %s996 = sld [smem:[#allocation2 + $0x288]]
        %v997 = vstv %s996
        %v998 = vmul.f32 %v997, %v198
        %v999 = vmul.f32 %v997, %v199
        %v1002 = vrot.slane %v998, 1
        %v1003 = vrot.slane %v999, 1
        %v1004 = vsel %vm628, %v1002, %v1003
        %1005 = vrot.lane.b32.xlu0 %v1004, 127
        %v1006 = vpop.permute.xlu0 %1005
        %v1008 = vadd.f32 %v849, %v1006
        %s1009 = sld [smem:[#allocation2 + $0x308]]
        %v1010 = vstv %s1009
        %v1011 = vmul.f32 %v1010, %v198
        %v1012 = vmul.f32 %v1010, %v199
        %v1015 = vrot.slane %v1011, 1
        %v1016 = vrot.slane %v1012, 1
        %v1017 = vsel %vm628, %v1015, %v1016
        %1018 = vrot.lane.b32.xlu0 %v1017, 127
        %v1019 = vpop.permute.xlu0 %1018
        %v1021 = vadd.f32 %v860, %v1019
        %s1022 = sld [smem:[#allocation2 + $0x388]]
        %v1023 = vstv %s1022
        %v1024 = vmul.f32 %v1023, %v198
        %v1025 = vmul.f32 %v1023, %v199
        %v1028 = vrot.slane %v1024, 1
        %v1029 = vrot.slane %v1025, 1
        %v1030 = vsel %vm628, %v1028, %v1029
        %1031 = vrot.lane.b32.xlu0 %v1030, 127
        %v1032 = vpop.permute.xlu0 %1031
        %v1034 = vadd.f32 %v871, %v1032
        %s1035 = sld [smem:[#allocation2 + $0x408]]
        %v1036 = vstv %s1035
        %v1037 = vmul.f32 %v1036, %v198
        %v1038 = vmul.f32 %v1036, %v199
        %v1041 = vrot.slane %v1037, 1
        %v1042 = vrot.slane %v1038, 1
        %v1043 = vsel %vm628, %v1041, %v1042
        %1044 = vrot.lane.b32.xlu0 %v1043, 127
        %v1045 = vpop.permute.xlu0 %1044
        %v1047 = vadd.f32 %v882, %v1045
        %s1048 = sld [smem:[#allocation2 + $0x488]]
        %v1049 = vstv %s1048
        %v1050 = vmul.f32 %v1049, %v198
        %v1051 = vmul.f32 %v1049, %v199
        %v1054 = vrot.slane %v1050, 1
        %v1055 = vrot.slane %v1051, 1
        %v1056 = vsel %vm628, %v1054, %v1055
        %1057 = vrot.lane.b32.xlu0 %v1056, 127
        %v1058 = vpop.permute.xlu0 %1057
        %v1060 = vadd.f32 %v893, %v1058
        %s1061 = sld [smem:[#allocation2 + $0x508]]
        %v1062 = vstv %s1061
        %v1063 = vmul.f32 %v1062, %v198
        %v1064 = vmul.f32 %v1062, %v199
        %v1067 = vrot.slane %v1063, 1
        %v1068 = vrot.slane %v1064, 1
        %v1069 = vsel %vm628, %v1067, %v1068
        %1070 = vrot.lane.b32.xlu0 %v1069, 127
        %v1071 = vpop.permute.xlu0 %1070
        %v1073 = vadd.f32 %v904, %v1071
        %s1074 = sld [smem:[#allocation2 + $0x588]]
        %v1075 = vstv %s1074
        %v1076 = vmul.f32 %v1075, %v198
        %v1077 = vmul.f32 %v1075, %v199
        %v1080 = vrot.slane %v1076, 1
        %v1081 = vrot.slane %v1077, 1
        %v1082 = vsel %vm628, %v1080, %v1081
        %1083 = vrot.lane.b32.xlu0 %v1082, 127
        %v1084 = vpop.permute.xlu0 %1083
        %v1086 = vadd.f32 %v915, %v1084
        %s1087 = sld [smem:[#allocation2 + $0x608]]
        %v1088 = vstv %s1087
        %v1089 = vmul.f32 %v1088, %v198
        %v1090 = vmul.f32 %v1088, %v199
        %v1093 = vrot.slane %v1089, 1
        %v1094 = vrot.slane %v1090, 1
        %v1095 = vsel %vm628, %v1093, %v1094
        %1096 = vrot.lane.b32.xlu0 %v1095, 127
        %v1097 = vpop.permute.xlu0 %1096
        %v1099 = vadd.f32 %v926, %v1097
        %s1100 = scalar_lea.vmem %s187, 8
        %v1101 = vld [vmem:[%s1100] sm:$0xf]
        %v1102 = vld [vmem:[%s1100 + $0x4] sm:$0x1]
        %v1103 = vunpack.c.l.bf16 %v1101
        %v1104 = vunpack.c.l.bf16 %v1102
        %s1105 = scalar_lea.vmem %s187, 32
        %v1106 = vld [vmem:[%s1105] sm:$0xf]
        %v1107 = vld [vmem:[%s1105 + $0x4] sm:$0x1]
        %v1108 = vunpack.c.l.bf16 %v1106
        %v1109 = vunpack.c.l.bf16 %v1107
        %s1110 = scalar_lea.vmem %s187, 56
        %v1111 = vld [vmem:[%s1110] sm:$0xf]
        %v1112 = vunpack.c.l.bf16 %v1111
        %s1113 = scalar_lea.vmem %s187, 80
        %v1114 = vld [vmem:[%s1113] sm:$0xf]
        %v1115 = vunpack.c.l.bf16 %v1114
        %s1116 = sld [smem:[#allocation2 + $0x9]]
        %v1117 = vstv %s1116
        %v1118 = vmul.f32 %v1117, %v1103
        %v1119 = vadd.f32 %v943, %v1118
        %s1120 = sld [smem:[#allocation2 + $0x89]]
        %v1121 = vstv %s1120
        %v1122 = vmul.f32 %v1121, %v1103
        %v1123 = vadd.f32 %v956, %v1122
        %s1124 = sld [smem:[#allocation2 + $0x109]]
        %v1125 = vstv %s1124
        %v1126 = vmul.f32 %v1125, %v1103
        %v1127 = vadd.f32 %v969, %v1126
        %s1128 = sld [smem:[#allocation2 + $0x189]]
        %v1129 = vstv %s1128
        %v1130 = vmul.f32 %v1129, %v1103
        %v1131 = vadd.f32 %v982, %v1130
        %s1132 = sld [smem:[#allocation2 + $0x209]]
        %v1133 = vstv %s1132
        %v1134 = vmul.f32 %v1133, %v1103
        %v1135 = vadd.f32 %v995, %v1134
        %s1136 = sld [smem:[#allocation2 + $0x289]]
        %v1137 = vstv %s1136
        %v1138 = vmul.f32 %v1137, %v1103
        %v1139 = vadd.f32 %v1008, %v1138
        %s1140 = sld [smem:[#allocation2 + $0x309]]
        %v1141 = vstv %s1140
        %v1142 = vmul.f32 %v1141, %v1103
        %v1143 = vadd.f32 %v1021, %v1142
        %s1144 = sld [smem:[#allocation2 + $0x389]]
        %v1145 = vstv %s1144
        %v1146 = vmul.f32 %v1145, %v1103
        %v1147 = vadd.f32 %v1034, %v1146
        %s1148 = sld [smem:[#allocation2 + $0x409]]
        %v1149 = vstv %s1148
        %v1150 = vmul.f32 %v1149, %v1103
        %v1151 = vadd.f32 %v1047, %v1150
        %s1152 = sld [smem:[#allocation2 + $0x489]]
        %v1153 = vstv %s1152
        %v1154 = vmul.f32 %v1153, %v1103
        %v1155 = vadd.f32 %v1060, %v1154
        %s1156 = sld [smem:[#allocation2 + $0x509]]
        %v1157 = vstv %s1156
        %v1158 = vmul.f32 %v1157, %v1103
        %v1159 = vadd.f32 %v1073, %v1158
        %s1160 = sld [smem:[#allocation2 + $0x589]]
        %v1161 = vstv %s1160
        %v1162 = vmul.f32 %v1161, %v1103
        %v1163 = vadd.f32 %v1086, %v1162
        %s1164 = sld [smem:[#allocation2 + $0x609]]
        %v1165 = vstv %s1164
        %v1166 = vmul.f32 %v1165, %v1103
        %v1167 = vadd.f32 %v1099, %v1166
        %v1168 = vmax.f32 %v1103, %v1108
        %s1169 = sld [smem:[#allocation2 + $0xa]]
        %v1170 = vstv %s1169
        %v1171 = vmul.f32 %v1170, %v1108
        %v1172 = vadd.f32 %v1119, %v1171
        %s1173 = sld [smem:[#allocation2 + $0x8a]]
        %v1174 = vstv %s1173
        %v1175 = vmul.f32 %v1174, %v1108
        %v1176 = vadd.f32 %v1123, %v1175
        %s1177 = sld [smem:[#allocation2 + $0x10a]]
        %v1178 = vstv %s1177
        %v1179 = vmul.f32 %v1178, %v1108
        %v1180 = vadd.f32 %v1127, %v1179
        %s1181 = sld [smem:[#allocation2 + $0x18a]]
        %v1182 = vstv %s1181
        %v1183 = vmul.f32 %v1182, %v1108
        %v1184 = vadd.f32 %v1131, %v1183
        %s1185 = sld [smem:[#allocation2 + $0x20a]]
        %v1186 = vstv %s1185
        %v1187 = vmul.f32 %v1186, %v1108
        %v1188 = vadd.f32 %v1135, %v1187
        %s1189 = sld [smem:[#allocation2 + $0x28a]]
        %v1190 = vstv %s1189
        %v1191 = vmul.f32 %v1190, %v1108
        %v1192 = vadd.f32 %v1139, %v1191
        %s1193 = sld [smem:[#allocation2 + $0x30a]]
        %v1194 = vstv %s1193
        %v1195 = vmul.f32 %v1194, %v1108
        %v1196 = vadd.f32 %v1143, %v1195
        %s1197 = sld [smem:[#allocation2 + $0x38a]]
        %v1198 = vstv %s1197
        %v1199 = vmul.f32 %v1198, %v1108
        %v1200 = vadd.f32 %v1147, %v1199
        %s1201 = sld [smem:[#allocation2 + $0x40a]]
        %v1202 = vstv %s1201
        %v1203 = vmul.f32 %v1202, %v1108
        %v1204 = vadd.f32 %v1151, %v1203
        %s1205 = sld [smem:[#allocation2 + $0x48a]]
        %v1206 = vstv %s1205
        %v1207 = vmul.f32 %v1206, %v1108
        %v1208 = vadd.f32 %v1155, %v1207
        %s1209 = sld [smem:[#allocation2 + $0x50a]]
        %v1210 = vstv %s1209
        %v1211 = vmul.f32 %v1210, %v1108
        %v1212 = vadd.f32 %v1159, %v1211
        %s1213 = sld [smem:[#allocation2 + $0x58a]]
        %v1214 = vstv %s1213
        %v1215 = vmul.f32 %v1214, %v1108
        %v1216 = vadd.f32 %v1163, %v1215
        %s1217 = sld [smem:[#allocation2 + $0x60a]]
        %v1218 = vstv %s1217
        %v1219 = vmul.f32 %v1218, %v1108
        %v1220 = vadd.f32 %v1167, %v1219
        %1222 = vrot.lane.b32.xlu0 %v1103, 127
        %v1223 = vpop.permute.xlu0 %1222
        %v1225 = vmax.f32 %v1168, %v1223
        %s1226 = sld [smem:[#allocation2 + $0xb]]
        %v1227 = vstv %s1226
        %v1228 = vmul.f32 %v1227, %v1103
        %1230 = vrot.lane.b32.xlu0 %v1228, 127
        %v1231 = vpop.permute.xlu0 %1230
        %v1233 = vadd.f32 %v1172, %v1231
        %s1234 = sld [smem:[#allocation2 + $0x8b]]
        %v1235 = vstv %s1234
        %v1236 = vmul.f32 %v1235, %v1103
        %1238 = vrot.lane.b32.xlu0 %v1236, 127
        %v1239 = vpop.permute.xlu0 %1238
        %v1241 = vadd.f32 %v1176, %v1239
        %s1242 = sld [smem:[#allocation2 + $0x10b]]
        %v1243 = vstv %s1242
        %v1244 = vmul.f32 %v1243, %v1103
        %1246 = vrot.lane.b32.xlu0 %v1244, 127
        %v1247 = vpop.permute.xlu0 %1246
        %v1249 = vadd.f32 %v1180, %v1247
        %s1250 = sld [smem:[#allocation2 + $0x18b]]
        %v1251 = vstv %s1250
        %v1252 = vmul.f32 %v1251, %v1103
        %1254 = vrot.lane.b32.xlu0 %v1252, 127
        %v1255 = vpop.permute.xlu0 %1254
        %v1257 = vadd.f32 %v1184, %v1255
        %s1258 = sld [smem:[#allocation2 + $0x20b]]
        %v1259 = vstv %s1258
        %v1260 = vmul.f32 %v1259, %v1103
        %1262 = vrot.lane.b32.xlu0 %v1260, 127
        %v1263 = vpop.permute.xlu0 %1262
        %v1265 = vadd.f32 %v1188, %v1263
        %s1266 = sld [smem:[#allocation2 + $0x28b]]
        %v1267 = vstv %s1266
        %v1268 = vmul.f32 %v1267, %v1103
        %1270 = vrot.lane.b32.xlu0 %v1268, 127
        %v1271 = vpop.permute.xlu0 %1270
        %v1273 = vadd.f32 %v1192, %v1271
        %s1274 = sld [smem:[#allocation2 + $0x30b]]
        %v1275 = vstv %s1274
        %v1276 = vmul.f32 %v1275, %v1103
        %1278 = vrot.lane.b32.xlu0 %v1276, 127
        %v1279 = vpop.permute.xlu0 %1278
        %v1281 = vadd.f32 %v1196, %v1279
        %s1282 = sld [smem:[#allocation2 + $0x38b]]
        %v1283 = vstv %s1282
        %v1284 = vmul.f32 %v1283, %v1103
        %1286 = vrot.lane.b32.xlu0 %v1284, 127
        %v1287 = vpop.permute.xlu0 %1286
        %v1289 = vadd.f32 %v1200, %v1287
        %s1290 = sld [smem:[#allocation2 + $0x40b]]
        %v1291 = vstv %s1290
        %v1292 = vmul.f32 %v1291, %v1103
        %1294 = vrot.lane.b32.xlu0 %v1292, 127
        %v1295 = vpop.permute.xlu0 %1294
        %v1297 = vadd.f32 %v1204, %v1295
        %s1298 = sld [smem:[#allocation2 + $0x48b]]
        %v1299 = vstv %s1298
        %v1300 = vmul.f32 %v1299, %v1103
        %1302 = vrot.lane.b32.xlu0 %v1300, 127
        %v1303 = vpop.permute.xlu0 %1302
        %v1305 = vadd.f32 %v1208, %v1303
        %s1306 = sld [smem:[#allocation2 + $0x50b]]
        %v1307 = vstv %s1306
        %v1308 = vmul.f32 %v1307, %v1103
        %1310 = vrot.lane.b32.xlu0 %v1308, 127
        %v1311 = vpop.permute.xlu0 %1310
        %v1313 = vadd.f32 %v1212, %v1311
        %s1314 = sld [smem:[#allocation2 + $0x58b]]
        %v1315 = vstv %s1314
        %v1316 = vmul.f32 %v1315, %v1103
        %1318 = vrot.lane.b32.xlu0 %v1316, 127
        %v1319 = vpop.permute.xlu0 %1318
        %v1321 = vadd.f32 %v1216, %v1319
        %s1322 = sld [smem:[#allocation2 + $0x60b]]
        %v1323 = vstv %s1322
        %v1324 = vmul.f32 %v1323, %v1103
        %1326 = vrot.lane.b32.xlu0 %v1324, 127
        %v1327 = vpop.permute.xlu0 %1326
        %v1329 = vadd.f32 %v1220, %v1327
        %v1330 = vmax.f32 %v1225, %v1112
        %s1331 = sld [smem:[#allocation2 + $0xc]]
        %v1332 = vstv %s1331
        %v1333 = vmul.f32 %v1332, %v1112
        %v1334 = vadd.f32 %v1233, %v1333
        %s1335 = sld [smem:[#allocation2 + $0x8c]]
        %v1336 = vstv %s1335
        %v1337 = vmul.f32 %v1336, %v1112
        %v1338 = vadd.f32 %v1241, %v1337
        %s1339 = sld [smem:[#allocation2 + $0x10c]]
        %v1340 = vstv %s1339
        %v1341 = vmul.f32 %v1340, %v1112
        %v1342 = vadd.f32 %v1249, %v1341
        %s1343 = sld [smem:[#allocation2 + $0x18c]]
        %v1344 = vstv %s1343
        %v1345 = vmul.f32 %v1344, %v1112
        %v1346 = vadd.f32 %v1257, %v1345
        %s1347 = sld [smem:[#allocation2 + $0x20c]]
        %v1348 = vstv %s1347
        %v1349 = vmul.f32 %v1348, %v1112
        %v1350 = vadd.f32 %v1265, %v1349
        %s1351 = sld [smem:[#allocation2 + $0x28c]]
        %v1352 = vstv %s1351
        %v1353 = vmul.f32 %v1352, %v1112
        %v1354 = vadd.f32 %v1273, %v1353
        %s1355 = sld [smem:[#allocation2 + $0x30c]]
        %v1356 = vstv %s1355
        %v1357 = vmul.f32 %v1356, %v1112
        %v1358 = vadd.f32 %v1281, %v1357
        %s1359 = sld [smem:[#allocation2 + $0x38c]]
        %v1360 = vstv %s1359
        %v1361 = vmul.f32 %v1360, %v1112
        %v1362 = vadd.f32 %v1289, %v1361
        %s1363 = sld [smem:[#allocation2 + $0x40c]]
        %v1364 = vstv %s1363
        %v1365 = vmul.f32 %v1364, %v1112
        %v1366 = vadd.f32 %v1297, %v1365
        %s1367 = sld [smem:[#allocation2 + $0x48c]]
        %v1368 = vstv %s1367
        %v1369 = vmul.f32 %v1368, %v1112
        %v1370 = vadd.f32 %v1305, %v1369
        %s1371 = sld [smem:[#allocation2 + $0x50c]]
        %v1372 = vstv %s1371
        %v1373 = vmul.f32 %v1372, %v1112
        %v1374 = vadd.f32 %v1313, %v1373
        %s1375 = sld [smem:[#allocation2 + $0x58c]]
        %v1376 = vstv %s1375
        %v1377 = vmul.f32 %v1376, %v1112
        %v1378 = vadd.f32 %v1321, %v1377
        %s1379 = sld [smem:[#allocation2 + $0x60c]]
        %v1380 = vstv %s1379
        %v1381 = vmul.f32 %v1380, %v1112
        %v1382 = vadd.f32 %v1329, %v1381
        %v1383 = vmax.f32 %v1330, %v1115
        %s1384 = sld [smem:[#allocation2 + $0xd]]
        %v1385 = vstv %s1384
        %v1386 = vmul.f32 %v1385, %v1115
        %v1387 = vadd.f32 %v1334, %v1386
        %s1388 = sld [smem:[#allocation2 + $0x8d]]
        %v1389 = vstv %s1388
        %v1390 = vmul.f32 %v1389, %v1115
        %v1391 = vadd.f32 %v1338, %v1390
        %s1392 = sld [smem:[#allocation2 + $0x10d]]
        %v1393 = vstv %s1392
        %v1394 = vmul.f32 %v1393, %v1115
        %v1395 = vadd.f32 %v1342, %v1394
        %s1396 = sld [smem:[#allocation2 + $0x18d]]
        %v1397 = vstv %s1396
        %v1398 = vmul.f32 %v1397, %v1115
        %v1399 = vadd.f32 %v1346, %v1398
        %s1400 = sld [smem:[#allocation2 + $0x20d]]
        %v1401 = vstv %s1400
        %v1402 = vmul.f32 %v1401, %v1115
        %v1403 = vadd.f32 %v1350, %v1402
        %s1404 = sld [smem:[#allocation2 + $0x28d]]
        %v1405 = vstv %s1404
        %v1406 = vmul.f32 %v1405, %v1115
        %v1407 = vadd.f32 %v1354, %v1406
        %s1408 = sld [smem:[#allocation2 + $0x30d]]
        %v1409 = vstv %s1408
        %v1410 = vmul.f32 %v1409, %v1115
        %v1411 = vadd.f32 %v1358, %v1410
        %s1412 = sld [smem:[#allocation2 + $0x38d]]
        %v1413 = vstv %s1412
        %v1414 = vmul.f32 %v1413, %v1115
        %v1415 = vadd.f32 %v1362, %v1414
        %s1416 = sld [smem:[#allocation2 + $0x40d]]
        %v1417 = vstv %s1416
        %v1418 = vmul.f32 %v1417, %v1115
        %v1419 = vadd.f32 %v1366, %v1418
        %s1420 = sld [smem:[#allocation2 + $0x48d]]
        %v1421 = vstv %s1420
        %v1422 = vmul.f32 %v1421, %v1115
        %v1423 = vadd.f32 %v1370, %v1422
        %s1424 = sld [smem:[#allocation2 + $0x50d]]
        %v1425 = vstv %s1424
        %v1426 = vmul.f32 %v1425, %v1115
        %v1427 = vadd.f32 %v1374, %v1426
        %s1428 = sld [smem:[#allocation2 + $0x58d]]
        %v1429 = vstv %s1428
        %v1430 = vmul.f32 %v1429, %v1115
        %v1431 = vadd.f32 %v1378, %v1430
        %s1432 = sld [smem:[#allocation2 + $0x60d]]
        %v1433 = vstv %s1432
        %v1434 = vmul.f32 %v1433, %v1115
        %v1435 = vadd.f32 %v1382, %v1434
        %1437 = vrot.lane.b32.xlu0 %v1112, 127
        %v1438 = vpop.permute.xlu0 %1437
        %v1440 = vmax.f32 %v1383, %v1438
        %s1441 = sld [smem:[#allocation2 + $0xe]]
        %v1442 = vstv %s1441
        %v1443 = vmul.f32 %v1442, %v1112
        %1445 = vrot.lane.b32.xlu0 %v1443, 127
        %v1446 = vpop.permute.xlu0 %1445
        %v1448 = vadd.f32 %v1387, %v1446
        %s1449 = sld [smem:[#allocation2 + $0x8e]]
        %v1450 = vstv %s1449
        %v1451 = vmul.f32 %v1450, %v1112
        %1453 = vrot.lane.b32.xlu0 %v1451, 127
        %v1454 = vpop.permute.xlu0 %1453
        %v1456 = vadd.f32 %v1391, %v1454
        %s1457 = sld [smem:[#allocation2 + $0x10e]]
        %v1458 = vstv %s1457
        %v1459 = vmul.f32 %v1458, %v1112
        %1461 = vrot.lane.b32.xlu0 %v1459, 127
        %v1462 = vpop.permute.xlu0 %1461
        %v1464 = vadd.f32 %v1395, %v1462
        %s1465 = sld [smem:[#allocation2 + $0x18e]]
        %v1466 = vstv %s1465
        %v1467 = vmul.f32 %v1466, %v1112
        %1469 = vrot.lane.b32.xlu0 %v1467, 127
        %v1470 = vpop.permute.xlu0 %1469
        %v1472 = vadd.f32 %v1399, %v1470
        %s1473 = sld [smem:[#allocation2 + $0x20e]]
        %v1474 = vstv %s1473
        %v1475 = vmul.f32 %v1474, %v1112
        %1477 = vrot.lane.b32.xlu0 %v1475, 127
        %v1478 = vpop.permute.xlu0 %1477
        %v1480 = vadd.f32 %v1403, %v1478
        %s1481 = sld [smem:[#allocation2 + $0x28e]]
        %v1482 = vstv %s1481
        %v1483 = vmul.f32 %v1482, %v1112
        %1485 = vrot.lane.b32.xlu0 %v1483, 127
        %v1486 = vpop.permute.xlu0 %1485
        %v1488 = vadd.f32 %v1407, %v1486
        %s1489 = sld [smem:[#allocation2 + $0x30e]]
        %v1490 = vstv %s1489
        %v1491 = vmul.f32 %v1490, %v1112
        %1493 = vrot.lane.b32.xlu0 %v1491, 127
        %v1494 = vpop.permute.xlu0 %1493
        %v1496 = vadd.f32 %v1411, %v1494
        %s1497 = sld [smem:[#allocation2 + $0x38e]]
        %v1498 = vstv %s1497
        %v1499 = vmul.f32 %v1498, %v1112
        %1501 = vrot.lane.b32.xlu0 %v1499, 127
        %v1502 = vpop.permute.xlu0 %1501
        %v1504 = vadd.f32 %v1415, %v1502
        %s1505 = sld [smem:[#allocation2 + $0x40e]]
        %v1506 = vstv %s1505
        %v1507 = vmul.f32 %v1506, %v1112
        %1509 = vrot.lane.b32.xlu0 %v1507, 127
        %v1510 = vpop.permute.xlu0 %1509
        %v1512 = vadd.f32 %v1419, %v1510
        %s1513 = sld [smem:[#allocation2 + $0x48e]]
        %v1514 = vstv %s1513
        %v1515 = vmul.f32 %v1514, %v1112
        %1517 = vrot.lane.b32.xlu0 %v1515, 127
        %v1518 = vpop.permute.xlu0 %1517
        %v1520 = vadd.f32 %v1423, %v1518
        %s1521 = sld [smem:[#allocation2 + $0x50e]]
        %v1522 = vstv %s1521
        %v1523 = vmul.f32 %v1522, %v1112
        %1525 = vrot.lane.b32.xlu0 %v1523, 127
        %v1526 = vpop.permute.xlu0 %1525
        %v1528 = vadd.f32 %v1427, %v1526
        %s1529 = sld [smem:[#allocation2 + $0x58e]]
        %v1530 = vstv %s1529
        %v1531 = vmul.f32 %v1530, %v1112
        %1533 = vrot.lane.b32.xlu0 %v1531, 127
        %v1534 = vpop.permute.xlu0 %1533
        %v1536 = vadd.f32 %v1431, %v1534
        %s1537 = sld [smem:[#allocation2 + $0x60e]]
        %v1538 = vstv %s1537
        %v1539 = vmul.f32 %v1538, %v1112
        %1541 = vrot.lane.b32.xlu0 %v1539, 127
        %v1542 = vpop.permute.xlu0 %1541
        %v1544 = vadd.f32 %v1435, %v1542
        %v1546 = vrot.slane %v1103, 1
        %v1547 = vrot.slane %v1104, 1
        %v1548 = vsel %vm628, %v1546, %v1547
        %v1550 = vmax.f32 %v1440, %v1548
        %s1551 = sld [smem:[#allocation2 + $0xf]]
        %v1552 = vstv %s1551
        %v1553 = vmul.f32 %v1552, %v1103
        %v1554 = vmul.f32 %v1552, %v1104
        %v1557 = vrot.slane %v1553, 1
        %v1558 = vrot.slane %v1554, 1
        %v1559 = vsel %vm628, %v1557, %v1558
        %v1561 = vadd.f32 %v1448, %v1559
        %s1562 = sld [smem:[#allocation2 + $0x8f]]
        %v1563 = vstv %s1562
        %v1564 = vmul.f32 %v1563, %v1103
        %v1565 = vmul.f32 %v1563, %v1104
        %v1568 = vrot.slane %v1564, 1
        %v1569 = vrot.slane %v1565, 1
        %v1570 = vsel %vm628, %v1568, %v1569
        %v1572 = vadd.f32 %v1456, %v1570
        %s1573 = sld [smem:[#allocation2 + $0x10f]]
        %v1574 = vstv %s1573
        %v1575 = vmul.f32 %v1574, %v1103
        %v1576 = vmul.f32 %v1574, %v1104
        %v1579 = vrot.slane %v1575, 1
        %v1580 = vrot.slane %v1576, 1
        %v1581 = vsel %vm628, %v1579, %v1580
        %v1583 = vadd.f32 %v1464, %v1581
        %s1584 = sld [smem:[#allocation2 + $0x18f]]
        %v1585 = vstv %s1584
        %v1586 = vmul.f32 %v1585, %v1103
        %v1587 = vmul.f32 %v1585, %v1104
        %v1590 = vrot.slane %v1586, 1
        %v1591 = vrot.slane %v1587, 1
        %v1592 = vsel %vm628, %v1590, %v1591
        %v1594 = vadd.f32 %v1472, %v1592
        %s1595 = sld [smem:[#allocation2 + $0x20f]]
        %v1596 = vstv %s1595
        %v1597 = vmul.f32 %v1596, %v1103
        %v1598 = vmul.f32 %v1596, %v1104
        %v1601 = vrot.slane %v1597, 1
        %v1602 = vrot.slane %v1598, 1
        %v1603 = vsel %vm628, %v1601, %v1602
        %v1605 = vadd.f32 %v1480, %v1603
        %s1606 = sld [smem:[#allocation2 + $0x28f]]
        %v1607 = vstv %s1606
        %v1608 = vmul.f32 %v1607, %v1103
        %v1609 = vmul.f32 %v1607, %v1104
        %v1612 = vrot.slane %v1608, 1
        %v1613 = vrot.slane %v1609, 1
        %v1614 = vsel %vm628, %v1612, %v1613
        %v1616 = vadd.f32 %v1488, %v1614
        %s1617 = sld [smem:[#allocation2 + $0x30f]]
        %v1618 = vstv %s1617
        %v1619 = vmul.f32 %v1618, %v1103
        %v1620 = vmul.f32 %v1618, %v1104
        %v1623 = vrot.slane %v1619, 1
        %v1624 = vrot.slane %v1620, 1
        %v1625 = vsel %vm628, %v1623, %v1624
        %v1627 = vadd.f32 %v1496, %v1625
        %s1628 = sld [smem:[#allocation2 + $0x38f]]
        %v1629 = vstv %s1628
        %v1630 = vmul.f32 %v1629, %v1103
        %v1631 = vmul.f32 %v1629, %v1104
        %v1634 = vrot.slane %v1630, 1
        %v1635 = vrot.slane %v1631, 1
        %v1636 = vsel %vm628, %v1634, %v1635
        %v1638 = vadd.f32 %v1504, %v1636
        %s1639 = sld [smem:[#allocation2 + $0x40f]]
        %v1640 = vstv %s1639
        %v1641 = vmul.f32 %v1640, %v1103
        %v1642 = vmul.f32 %v1640, %v1104
        %v1645 = vrot.slane %v1641, 1
        %v1646 = vrot.slane %v1642, 1
        %v1647 = vsel %vm628, %v1645, %v1646
        %v1649 = vadd.f32 %v1512, %v1647
        %s1650 = sld [smem:[#allocation2 + $0x48f]]
        %v1651 = vstv %s1650
        %v1652 = vmul.f32 %v1651, %v1103
        %v1653 = vmul.f32 %v1651, %v1104
        %v1656 = vrot.slane %v1652, 1
        %v1657 = vrot.slane %v1653, 1
        %v1658 = vsel %vm628, %v1656, %v1657
        %v1660 = vadd.f32 %v1520, %v1658
        %s1661 = sld [smem:[#allocation2 + $0x50f]]
        %v1662 = vstv %s1661
        %v1663 = vmul.f32 %v1662, %v1103
        %v1664 = vmul.f32 %v1662, %v1104
        %v1667 = vrot.slane %v1663, 1
        %v1668 = vrot.slane %v1664, 1
        %v1669 = vsel %vm628, %v1667, %v1668
        %v1671 = vadd.f32 %v1528, %v1669
        %s1672 = sld [smem:[#allocation2 + $0x58f]]
        %v1673 = vstv %s1672
        %v1674 = vmul.f32 %v1673, %v1103
        %v1675 = vmul.f32 %v1673, %v1104
        %v1678 = vrot.slane %v1674, 1
        %v1679 = vrot.slane %v1675, 1
        %v1680 = vsel %vm628, %v1678, %v1679
        %v1682 = vadd.f32 %v1536, %v1680
        %s1683 = sld [smem:[#allocation2 + $0x60f]]
        %v1684 = vstv %s1683
        %v1685 = vmul.f32 %v1684, %v1103
        %v1686 = vmul.f32 %v1684, %v1104
        %v1689 = vrot.slane %v1685, 1
        %v1690 = vrot.slane %v1686, 1
        %v1691 = vsel %vm628, %v1689, %v1690
        %v1693 = vadd.f32 %v1544, %v1691
        %v1696 = vrot.slane %v1108, 1
        %v1697 = vrot.slane %v1109, 1
        %v1698 = vsel %vm628, %v1696, %v1697
        %v1700 = vmax.f32 %v1550, %v1698
        %s1701 = sld [smem:[#allocation2 + $0x10]]
        %v1702 = vstv %s1701
        %v1703 = vmul.f32 %v1702, %v1108
        %v1704 = vmul.f32 %v1702, %v1109
        %v1707 = vrot.slane %v1703, 1
        %v1708 = vrot.slane %v1704, 1
        %v1709 = vsel %vm628, %v1707, %v1708
        %v1711 = vadd.f32 %v1561, %v1709
        %s1712 = sld [smem:[#allocation2 + $0x90]]
        %v1713 = vstv %s1712
        %v1714 = vmul.f32 %v1713, %v1108
        %v1715 = vmul.f32 %v1713, %v1109
        %v1718 = vrot.slane %v1714, 1
        %v1719 = vrot.slane %v1715, 1
        %v1720 = vsel %vm628, %v1718, %v1719
        %v1722 = vadd.f32 %v1572, %v1720
        %s1723 = sld [smem:[#allocation2 + $0x110]]
        %v1724 = vstv %s1723
        %v1725 = vmul.f32 %v1724, %v1108
        %v1726 = vmul.f32 %v1724, %v1109
        %v1729 = vrot.slane %v1725, 1
        %v1730 = vrot.slane %v1726, 1
        %v1731 = vsel %vm628, %v1729, %v1730
        %v1733 = vadd.f32 %v1583, %v1731
        %s1734 = sld [smem:[#allocation2 + $0x190]]
        %v1735 = vstv %s1734
        %v1736 = vmul.f32 %v1735, %v1108
        %v1737 = vmul.f32 %v1735, %v1109
        %v1740 = vrot.slane %v1736, 1
        %v1741 = vrot.slane %v1737, 1
        %v1742 = vsel %vm628, %v1740, %v1741
        %v1744 = vadd.f32 %v1594, %v1742
        %s1745 = sld [smem:[#allocation2 + $0x210]]
        %v1746 = vstv %s1745
        %v1747 = vmul.f32 %v1746, %v1108
        %v1748 = vmul.f32 %v1746, %v1109
        %v1751 = vrot.slane %v1747, 1
        %v1752 = vrot.slane %v1748, 1
        %v1753 = vsel %vm628, %v1751, %v1752
        %v1755 = vadd.f32 %v1605, %v1753
        %s1756 = sld [smem:[#allocation2 + $0x290]]
        %v1757 = vstv %s1756
        %v1758 = vmul.f32 %v1757, %v1108
        %v1759 = vmul.f32 %v1757, %v1109
        %v1762 = vrot.slane %v1758, 1
        %v1763 = vrot.slane %v1759, 1
        %v1764 = vsel %vm628, %v1762, %v1763
        %v1766 = vadd.f32 %v1616, %v1764
        %s1767 = sld [smem:[#allocation2 + $0x310]]
        %v1768 = vstv %s1767
        %v1769 = vmul.f32 %v1768, %v1108
        %v1770 = vmul.f32 %v1768, %v1109
        %v1773 = vrot.slane %v1769, 1
        %v1774 = vrot.slane %v1770, 1
        %v1775 = vsel %vm628, %v1773, %v1774
        %v1777 = vadd.f32 %v1627, %v1775
        %s1778 = sld [smem:[#allocation2 + $0x390]]
        %v1779 = vstv %s1778
        %v1780 = vmul.f32 %v1779, %v1108
        %v1781 = vmul.f32 %v1779, %v1109
        %v1784 = vrot.slane %v1780, 1
        %v1785 = vrot.slane %v1781, 1
        %v1786 = vsel %vm628, %v1784, %v1785
        %v1788 = vadd.f32 %v1638, %v1786
        %s1789 = sld [smem:[#allocation2 + $0x410]]
        %v1790 = vstv %s1789
        %v1791 = vmul.f32 %v1790, %v1108
        %v1792 = vmul.f32 %v1790, %v1109
        %v1795 = vrot.slane %v1791, 1
        %v1796 = vrot.slane %v1792, 1
        %v1797 = vsel %vm628, %v1795, %v1796
        %v1799 = vadd.f32 %v1649, %v1797
        %s1800 = sld [smem:[#allocation2 + $0x490]]
        %v1801 = vstv %s1800
        %v1802 = vmul.f32 %v1801, %v1108
        %v1803 = vmul.f32 %v1801, %v1109
        %v1806 = vrot.slane %v1802, 1
        %v1807 = vrot.slane %v1803, 1
        %v1808 = vsel %vm628, %v1806, %v1807
        %v1810 = vadd.f32 %v1660, %v1808
        %s1811 = sld [smem:[#allocation2 + $0x510]]
        %v1812 = vstv %s1811
        %v1813 = vmul.f32 %v1812, %v1108
        %v1814 = vmul.f32 %v1812, %v1109
        %v1817 = vrot.slane %v1813, 1
        %v1818 = vrot.slane %v1814, 1
        %v1819 = vsel %vm628, %v1817, %v1818
        %v1821 = vadd.f32 %v1671, %v1819
        %s1822 = sld [smem:[#allocation2 + $0x590]]
        %v1823 = vstv %s1822
        %v1824 = vmul.f32 %v1823, %v1108
        %v1825 = vmul.f32 %v1823, %v1109
        %v1828 = vrot.slane %v1824, 1
        %v1829 = vrot.slane %v1825, 1
        %v1830 = vsel %vm628, %v1828, %v1829
        %v1832 = vadd.f32 %v1682, %v1830
        %s1833 = sld [smem:[#allocation2 + $0x610]]
        %v1834 = vstv %s1833
        %v1835 = vmul.f32 %v1834, %v1108
        %v1836 = vmul.f32 %v1834, %v1109
        %v1839 = vrot.slane %v1835, 1
        %v1840 = vrot.slane %v1836, 1
        %v1841 = vsel %vm628, %v1839, %v1840
        %v1843 = vadd.f32 %v1693, %v1841
        %1844 = vrot.lane.b32.xlu0 %v1548, 127
        %v1845 = vpop.permute.xlu0 %1844
        %v1847 = vmax.f32 %v1700, %v1845
        %s1848 = sld [smem:[#allocation2 + $0x11]]
        %v1849 = vstv %s1848
        %v1850 = vmul.f32 %v1849, %v1103
        %v1851 = vmul.f32 %v1849, %v1104
        %v1854 = vrot.slane %v1850, 1
        %v1855 = vrot.slane %v1851, 1
        %v1856 = vsel %vm628, %v1854, %v1855
        %1857 = vrot.lane.b32.xlu0 %v1856, 127
        %v1858 = vpop.permute.xlu0 %1857
        %v1860 = vadd.f32 %v1711, %v1858
        %s1861 = sld [smem:[#allocation2 + $0x91]]
        %v1862 = vstv %s1861
        %v1863 = vmul.f32 %v1862, %v1103
        %v1864 = vmul.f32 %v1862, %v1104
        %v1867 = vrot.slane %v1863, 1
        %v1868 = vrot.slane %v1864, 1
        %v1869 = vsel %vm628, %v1867, %v1868
        %1870 = vrot.lane.b32.xlu0 %v1869, 127
        %v1871 = vpop.permute.xlu0 %1870
        %v1873 = vadd.f32 %v1722, %v1871
        %s1874 = sld [smem:[#allocation2 + $0x111]]
        %v1875 = vstv %s1874
        %v1876 = vmul.f32 %v1875, %v1103
        %v1877 = vmul.f32 %v1875, %v1104
        %v1880 = vrot.slane %v1876, 1
        %v1881 = vrot.slane %v1877, 1
        %v1882 = vsel %vm628, %v1880, %v1881
        %1883 = vrot.lane.b32.xlu0 %v1882, 127
        %v1884 = vpop.permute.xlu0 %1883
        %v1886 = vadd.f32 %v1733, %v1884
        %s1887 = sld [smem:[#allocation2 + $0x191]]
        %v1888 = vstv %s1887
        %v1889 = vmul.f32 %v1888, %v1103
        %v1890 = vmul.f32 %v1888, %v1104
        %v1893 = vrot.slane %v1889, 1
        %v1894 = vrot.slane %v1890, 1
        %v1895 = vsel %vm628, %v1893, %v1894
        %1896 = vrot.lane.b32.xlu0 %v1895, 127
        %v1897 = vpop.permute.xlu0 %1896
        %v1899 = vadd.f32 %v1744, %v1897
        %s1900 = sld [smem:[#allocation2 + $0x211]]
        %v1901 = vstv %s1900
        %v1902 = vmul.f32 %v1901, %v1103
        %v1903 = vmul.f32 %v1901, %v1104
        %v1906 = vrot.slane %v1902, 1
        %v1907 = vrot.slane %v1903, 1
        %v1908 = vsel %vm628, %v1906, %v1907
        %1909 = vrot.lane.b32.xlu0 %v1908, 127
        %v1910 = vpop.permute.xlu0 %1909
        %v1912 = vadd.f32 %v1755, %v1910
        %s1913 = sld [smem:[#allocation2 + $0x291]]
        %v1914 = vstv %s1913
        %v1915 = vmul.f32 %v1914, %v1103
        %v1916 = vmul.f32 %v1914, %v1104
        %v1919 = vrot.slane %v1915, 1
        %v1920 = vrot.slane %v1916, 1
        %v1921 = vsel %vm628, %v1919, %v1920
        %1922 = vrot.lane.b32.xlu0 %v1921, 127
        %v1923 = vpop.permute.xlu0 %1922
        %v1925 = vadd.f32 %v1766, %v1923
        %s1926 = sld [smem:[#allocation2 + $0x311]]
        %v1927 = vstv %s1926
        %v1928 = vmul.f32 %v1927, %v1103
        %v1929 = vmul.f32 %v1927, %v1104
        %v1932 = vrot.slane %v1928, 1
        %v1933 = vrot.slane %v1929, 1
        %v1934 = vsel %vm628, %v1932, %v1933
        %1935 = vrot.lane.b32.xlu0 %v1934, 127
        %v1936 = vpop.permute.xlu0 %1935
        %v1938 = vadd.f32 %v1777, %v1936
        %s1939 = sld [smem:[#allocation2 + $0x391]]
        %v1940 = vstv %s1939
        %v1941 = vmul.f32 %v1940, %v1103
        %v1942 = vmul.f32 %v1940, %v1104
        %v1945 = vrot.slane %v1941, 1
        %v1946 = vrot.slane %v1942, 1
        %v1947 = vsel %vm628, %v1945, %v1946
        %1948 = vrot.lane.b32.xlu0 %v1947, 127
        %v1949 = vpop.permute.xlu0 %1948
        %v1951 = vadd.f32 %v1788, %v1949
        %s1952 = sld [smem:[#allocation2 + $0x411]]
        %v1953 = vstv %s1952
        %v1954 = vmul.f32 %v1953, %v1103
        %v1955 = vmul.f32 %v1953, %v1104
        %v1958 = vrot.slane %v1954, 1
        %v1959 = vrot.slane %v1955, 1
        %v1960 = vsel %vm628, %v1958, %v1959
        %1961 = vrot.lane.b32.xlu0 %v1960, 127
        %v1962 = vpop.permute.xlu0 %1961
        %v1964 = vadd.f32 %v1799, %v1962
        %s1965 = sld [smem:[#allocation2 + $0x491]]
        %v1966 = vstv %s1965
        %v1967 = vmul.f32 %v1966, %v1103
        %v1968 = vmul.f32 %v1966, %v1104
        %v1971 = vrot.slane %v1967, 1
        %v1972 = vrot.slane %v1968, 1
        %v1973 = vsel %vm628, %v1971, %v1972
        %1974 = vrot.lane.b32.xlu0 %v1973, 127
        %v1975 = vpop.permute.xlu0 %1974
        %v1977 = vadd.f32 %v1810, %v1975
        %s1978 = sld [smem:[#allocation2 + $0x511]]
        %v1979 = vstv %s1978
        %v1980 = vmul.f32 %v1979, %v1103
        %v1981 = vmul.f32 %v1979, %v1104
        %v1984 = vrot.slane %v1980, 1
        %v1985 = vrot.slane %v1981, 1
        %v1986 = vsel %vm628, %v1984, %v1985
        %1987 = vrot.lane.b32.xlu0 %v1986, 127
        %v1988 = vpop.permute.xlu0 %1987
        %v1990 = vadd.f32 %v1821, %v1988
        %s1991 = sld [smem:[#allocation2 + $0x591]]
        %v1992 = vstv %s1991
        %v1993 = vmul.f32 %v1992, %v1103
        %v1994 = vmul.f32 %v1992, %v1104
        %v1997 = vrot.slane %v1993, 1
        %v1998 = vrot.slane %v1994, 1
        %v1999 = vsel %vm628, %v1997, %v1998
        %2000 = vrot.lane.b32.xlu0 %v1999, 127
        %v2001 = vpop.permute.xlu0 %2000
        %v2003 = vadd.f32 %v1832, %v2001
        %s2004 = sld [smem:[#allocation2 + $0x611]]
        %v2005 = vstv %s2004
        %v2006 = vmul.f32 %v2005, %v1103
        %v2007 = vmul.f32 %v2005, %v1104
        %v2010 = vrot.slane %v2006, 1
        %v2011 = vrot.slane %v2007, 1
        %v2012 = vsel %vm628, %v2010, %v2011
        %2013 = vrot.lane.b32.xlu0 %v2012, 127
        %v2014 = vpop.permute.xlu0 %2013
        %v2016 = vadd.f32 %v1843, %v2014
        %s2017 = scalar_lea.vmem %s187, 16
        %v2018 = vld [vmem:[%s2017] sm:$0xf]
        %v2019 = vld [vmem:[%s2017 + $0x4] sm:$0x1]
        %v2020 = vunpack.c.l.bf16 %v2018
        %v2021 = vunpack.c.l.bf16 %v2019
        %s2022 = scalar_lea.vmem %s187, 40
        %v2023 = vld [vmem:[%s2022] sm:$0xf]
        %v2024 = vld [vmem:[%s2022 + $0x4] sm:$0x1]
        %v2025 = vunpack.c.l.bf16 %v2023
        %v2026 = vunpack.c.l.bf16 %v2024
        %s2027 = scalar_lea.vmem %s187, 64
        %v2028 = vld [vmem:[%s2027] sm:$0xf]
        %v2029 = vunpack.c.l.bf16 %v2028
        %s2030 = scalar_lea.vmem %s187, 88
        %v2031 = vld [vmem:[%s2030] sm:$0xf]
        %v2032 = vunpack.c.l.bf16 %v2031
        %s2033 = sld [smem:[#allocation2 + $0x12]]
        %v2034 = vstv %s2033
        %v2035 = vmul.f32 %v2034, %v2020
        %v2036 = vadd.f32 %v1860, %v2035
        %s2037 = sld [smem:[#allocation2 + $0x92]]
        %v2038 = vstv %s2037
        %v2039 = vmul.f32 %v2038, %v2020
        %v2040 = vadd.f32 %v1873, %v2039
        %s2041 = sld [smem:[#allocation2 + $0x112]]
        %v2042 = vstv %s2041
        %v2043 = vmul.f32 %v2042, %v2020
        %v2044 = vadd.f32 %v1886, %v2043
        %s2045 = sld [smem:[#allocation2 + $0x192]]
        %v2046 = vstv %s2045
        %v2047 = vmul.f32 %v2046, %v2020
        %v2048 = vadd.f32 %v1899, %v2047
        %s2049 = sld [smem:[#allocation2 + $0x212]]
        %v2050 = vstv %s2049
        %v2051 = vmul.f32 %v2050, %v2020
        %v2052 = vadd.f32 %v1912, %v2051
        %s2053 = sld [smem:[#allocation2 + $0x292]]
        %v2054 = vstv %s2053
        %v2055 = vmul.f32 %v2054, %v2020
        %v2056 = vadd.f32 %v1925, %v2055
        %s2057 = sld [smem:[#allocation2 + $0x312]]
        %v2058 = vstv %s2057
        %v2059 = vmul.f32 %v2058, %v2020
        %v2060 = vadd.f32 %v1938, %v2059
        %s2061 = sld [smem:[#allocation2 + $0x392]]
        %v2062 = vstv %s2061
        %v2063 = vmul.f32 %v2062, %v2020
        %v2064 = vadd.f32 %v1951, %v2063
        %s2065 = sld [smem:[#allocation2 + $0x412]]
        %v2066 = vstv %s2065
        %v2067 = vmul.f32 %v2066, %v2020
        %v2068 = vadd.f32 %v1964, %v2067
        %s2069 = sld [smem:[#allocation2 + $0x492]]
        %v2070 = vstv %s2069
        %v2071 = vmul.f32 %v2070, %v2020
        %v2072 = vadd.f32 %v1977, %v2071
        %s2073 = sld [smem:[#allocation2 + $0x512]]
        %v2074 = vstv %s2073
        %v2075 = vmul.f32 %v2074, %v2020
        %v2076 = vadd.f32 %v1990, %v2075
        %s2077 = sld [smem:[#allocation2 + $0x592]]
        %v2078 = vstv %s2077
        %v2079 = vmul.f32 %v2078, %v2020
        %v2080 = vadd.f32 %v2003, %v2079
        %s2081 = sld [smem:[#allocation2 + $0x612]]
        %v2082 = vstv %s2081
        %v2083 = vmul.f32 %v2082, %v2020
        %v2084 = vadd.f32 %v2016, %v2083
        %v2085 = vmax.f32 %v2020, %v2025
        %s2086 = sld [smem:[#allocation2 + $0x13]]
        %v2087 = vstv %s2086
        %v2088 = vmul.f32 %v2087, %v2025
        %v2089 = vadd.f32 %v2036, %v2088
        %s2090 = sld [smem:[#allocation2 + $0x93]]
        %v2091 = vstv %s2090
        %v2092 = vmul.f32 %v2091, %v2025
        %v2093 = vadd.f32 %v2040, %v2092
        %s2094 = sld [smem:[#allocation2 + $0x113]]
        %v2095 = vstv %s2094
        %v2096 = vmul.f32 %v2095, %v2025
        %v2097 = vadd.f32 %v2044, %v2096
        %s2098 = sld [smem:[#allocation2 + $0x193]]
        %v2099 = vstv %s2098
        %v2100 = vmul.f32 %v2099, %v2025
        %v2101 = vadd.f32 %v2048, %v2100
        %s2102 = sld [smem:[#allocation2 + $0x213]]
        %v2103 = vstv %s2102
        %v2104 = vmul.f32 %v2103, %v2025
        %v2105 = vadd.f32 %v2052, %v2104
        %s2106 = sld [smem:[#allocation2 + $0x293]]
        %v2107 = vstv %s2106
        %v2108 = vmul.f32 %v2107, %v2025
        %v2109 = vadd.f32 %v2056, %v2108
        %s2110 = sld [smem:[#allocation2 + $0x313]]
        %v2111 = vstv %s2110
        %v2112 = vmul.f32 %v2111, %v2025
        %v2113 = vadd.f32 %v2060, %v2112
        %s2114 = sld [smem:[#allocation2 + $0x393]]
        %v2115 = vstv %s2114
        %v2116 = vmul.f32 %v2115, %v2025
        %v2117 = vadd.f32 %v2064, %v2116
        %s2118 = sld [smem:[#allocation2 + $0x413]]
        %v2119 = vstv %s2118
        %v2120 = vmul.f32 %v2119, %v2025
        %v2121 = vadd.f32 %v2068, %v2120
        %s2122 = sld [smem:[#allocation2 + $0x493]]
        %v2123 = vstv %s2122
        %v2124 = vmul.f32 %v2123, %v2025
        %v2125 = vadd.f32 %v2072, %v2124
        %s2126 = sld [smem:[#allocation2 + $0x513]]
        %v2127 = vstv %s2126
        %v2128 = vmul.f32 %v2127, %v2025
        %v2129 = vadd.f32 %v2076, %v2128
        %s2130 = sld [smem:[#allocation2 + $0x593]]
        %v2131 = vstv %s2130
        %v2132 = vmul.f32 %v2131, %v2025
        %v2133 = vadd.f32 %v2080, %v2132
        %s2134 = sld [smem:[#allocation2 + $0x613]]
        %v2135 = vstv %s2134
        %v2136 = vmul.f32 %v2135, %v2025
        %v2137 = vadd.f32 %v2084, %v2136
        %2139 = vrot.lane.b32.xlu0 %v2020, 127
        %v2140 = vpop.permute.xlu0 %2139
        %v2142 = vmax.f32 %v2085, %v2140
        %s2143 = sld [smem:[#allocation2 + $0x14]]
        %v2144 = vstv %s2143
        %v2145 = vmul.f32 %v2144, %v2020
        %2147 = vrot.lane.b32.xlu0 %v2145, 127
        %v2148 = vpop.permute.xlu0 %2147
        %v2150 = vadd.f32 %v2089, %v2148
        %s2151 = sld [smem:[#allocation2 + $0x94]]
        %v2152 = vstv %s2151
        %v2153 = vmul.f32 %v2152, %v2020
        %2155 = vrot.lane.b32.xlu0 %v2153, 127
        %v2156 = vpop.permute.xlu0 %2155
        %v2158 = vadd.f32 %v2093, %v2156
        %s2159 = sld [smem:[#allocation2 + $0x114]]
        %v2160 = vstv %s2159
        %v2161 = vmul.f32 %v2160, %v2020
        %2163 = vrot.lane.b32.xlu0 %v2161, 127
        %v2164 = vpop.permute.xlu0 %2163
        %v2166 = vadd.f32 %v2097, %v2164
        %s2167 = sld [smem:[#allocation2 + $0x194]]
        %v2168 = vstv %s2167
        %v2169 = vmul.f32 %v2168, %v2020
        %2171 = vrot.lane.b32.xlu0 %v2169, 127
        %v2172 = vpop.permute.xlu0 %2171
        %v2174 = vadd.f32 %v2101, %v2172
        %s2175 = sld [smem:[#allocation2 + $0x214]]
        %v2176 = vstv %s2175
        %v2177 = vmul.f32 %v2176, %v2020
        %2179 = vrot.lane.b32.xlu0 %v2177, 127
        %v2180 = vpop.permute.xlu0 %2179
        %v2182 = vadd.f32 %v2105, %v2180
        %s2183 = sld [smem:[#allocation2 + $0x294]]
        %v2184 = vstv %s2183
        %v2185 = vmul.f32 %v2184, %v2020
        %2187 = vrot.lane.b32.xlu0 %v2185, 127
        %v2188 = vpop.permute.xlu0 %2187
        %v2190 = vadd.f32 %v2109, %v2188
        %s2191 = sld [smem:[#allocation2 + $0x314]]
        %v2192 = vstv %s2191
        %v2193 = vmul.f32 %v2192, %v2020
        %2195 = vrot.lane.b32.xlu0 %v2193, 127
        %v2196 = vpop.permute.xlu0 %2195
        %v2198 = vadd.f32 %v2113, %v2196
        %s2199 = sld [smem:[#allocation2 + $0x394]]
        %v2200 = vstv %s2199
        %v2201 = vmul.f32 %v2200, %v2020
        %2203 = vrot.lane.b32.xlu0 %v2201, 127
        %v2204 = vpop.permute.xlu0 %2203
        %v2206 = vadd.f32 %v2117, %v2204
        %s2207 = sld [smem:[#allocation2 + $0x414]]
        %v2208 = vstv %s2207
        %v2209 = vmul.f32 %v2208, %v2020
        %2211 = vrot.lane.b32.xlu0 %v2209, 127
        %v2212 = vpop.permute.xlu0 %2211
        %v2214 = vadd.f32 %v2121, %v2212
        %s2215 = sld [smem:[#allocation2 + $0x494]]
        %v2216 = vstv %s2215
        %v2217 = vmul.f32 %v2216, %v2020
        %2219 = vrot.lane.b32.xlu0 %v2217, 127
        %v2220 = vpop.permute.xlu0 %2219
        %v2222 = vadd.f32 %v2125, %v2220
        %s2223 = sld [smem:[#allocation2 + $0x514]]
        %v2224 = vstv %s2223
        %v2225 = vmul.f32 %v2224, %v2020
        %2227 = vrot.lane.b32.xlu0 %v2225, 127
        %v2228 = vpop.permute.xlu0 %2227
        %v2230 = vadd.f32 %v2129, %v2228
        %s2231 = sld [smem:[#allocation2 + $0x594]]
        %v2232 = vstv %s2231
        %v2233 = vmul.f32 %v2232, %v2020
        %2235 = vrot.lane.b32.xlu0 %v2233, 127
        %v2236 = vpop.permute.xlu0 %2235
        %v2238 = vadd.f32 %v2133, %v2236
        %s2239 = sld [smem:[#allocation2 + $0x614]]
        %v2240 = vstv %s2239
        %v2241 = vmul.f32 %v2240, %v2020
        %2243 = vrot.lane.b32.xlu0 %v2241, 127
        %v2244 = vpop.permute.xlu0 %2243
        %v2246 = vadd.f32 %v2137, %v2244
        %v2247 = vmax.f32 %v2142, %v2029
        %s2248 = sld [smem:[#allocation2 + $0x15]]
        %v2249 = vstv %s2248
        %v2250 = vmul.f32 %v2249, %v2029
        %v2251 = vadd.f32 %v2150, %v2250
        %s2252 = sld [smem:[#allocation2 + $0x95]]
        %v2253 = vstv %s2252
        %v2254 = vmul.f32 %v2253, %v2029
        %v2255 = vadd.f32 %v2158, %v2254
        %s2256 = sld [smem:[#allocation2 + $0x115]]
        %v2257 = vstv %s2256
        %v2258 = vmul.f32 %v2257, %v2029
        %v2259 = vadd.f32 %v2166, %v2258
        %s2260 = sld [smem:[#allocation2 + $0x195]]
        %v2261 = vstv %s2260
        %v2262 = vmul.f32 %v2261, %v2029
        %v2263 = vadd.f32 %v2174, %v2262
        %s2264 = sld [smem:[#allocation2 + $0x215]]
        %v2265 = vstv %s2264
        %v2266 = vmul.f32 %v2265, %v2029
        %v2267 = vadd.f32 %v2182, %v2266
        %s2268 = sld [smem:[#allocation2 + $0x295]]
        %v2269 = vstv %s2268
        %v2270 = vmul.f32 %v2269, %v2029
        %v2271 = vadd.f32 %v2190, %v2270
        %s2272 = sld [smem:[#allocation2 + $0x315]]
        %v2273 = vstv %s2272
        %v2274 = vmul.f32 %v2273, %v2029
        %v2275 = vadd.f32 %v2198, %v2274
        %s2276 = sld [smem:[#allocation2 + $0x395]]
        %v2277 = vstv %s2276
        %v2278 = vmul.f32 %v2277, %v2029
        %v2279 = vadd.f32 %v2206, %v2278
        %s2280 = sld [smem:[#allocation2 + $0x415]]
        %v2281 = vstv %s2280
        %v2282 = vmul.f32 %v2281, %v2029
        %v2283 = vadd.f32 %v2214, %v2282
        %s2284 = sld [smem:[#allocation2 + $0x495]]
        %v2285 = vstv %s2284
        %v2286 = vmul.f32 %v2285, %v2029
        %v2287 = vadd.f32 %v2222, %v2286
        %s2288 = sld [smem:[#allocation2 + $0x515]]
        %v2289 = vstv %s2288
        %v2290 = vmul.f32 %v2289, %v2029
        %v2291 = vadd.f32 %v2230, %v2290
        %s2292 = sld [smem:[#allocation2 + $0x595]]
        %v2293 = vstv %s2292
        %v2294 = vmul.f32 %v2293, %v2029
        %v2295 = vadd.f32 %v2238, %v2294
        %s2296 = sld [smem:[#allocation2 + $0x615]]
        %v2297 = vstv %s2296
        %v2298 = vmul.f32 %v2297, %v2029
        %v2299 = vadd.f32 %v2246, %v2298
        %v2300 = vmax.f32 %v2247, %v2032
        %s2301 = sld [smem:[#allocation2 + $0x16]]
        %v2302 = vstv %s2301
        %v2303 = vmul.f32 %v2302, %v2032
        %v2304 = vadd.f32 %v2251, %v2303
        %s2305 = sld [smem:[#allocation2 + $0x96]]
        %v2306 = vstv %s2305
        %v2307 = vmul.f32 %v2306, %v2032
        %v2308 = vadd.f32 %v2255, %v2307
        %s2309 = sld [smem:[#allocation2 + $0x116]]
        %v2310 = vstv %s2309
        %v2311 = vmul.f32 %v2310, %v2032
        %v2312 = vadd.f32 %v2259, %v2311
        %s2313 = sld [smem:[#allocation2 + $0x196]]
        %v2314 = vstv %s2313
        %v2315 = vmul.f32 %v2314, %v2032
        %v2316 = vadd.f32 %v2263, %v2315
        %s2317 = sld [smem:[#allocation2 + $0x216]]
        %v2318 = vstv %s2317
        %v2319 = vmul.f32 %v2318, %v2032
        %v2320 = vadd.f32 %v2267, %v2319
        %s2321 = sld [smem:[#allocation2 + $0x296]]
        %v2322 = vstv %s2321
        %v2323 = vmul.f32 %v2322, %v2032
        %v2324 = vadd.f32 %v2271, %v2323
        %s2325 = sld [smem:[#allocation2 + $0x316]]
        %v2326 = vstv %s2325
        %v2327 = vmul.f32 %v2326, %v2032
        %v2328 = vadd.f32 %v2275, %v2327
        %s2329 = sld [smem:[#allocation2 + $0x396]]
        %v2330 = vstv %s2329
        %v2331 = vmul.f32 %v2330, %v2032
        %v2332 = vadd.f32 %v2279, %v2331
        %s2333 = sld [smem:[#allocation2 + $0x416]]
        %v2334 = vstv %s2333
        %v2335 = vmul.f32 %v2334, %v2032
        %v2336 = vadd.f32 %v2283, %v2335
        %s2337 = sld [smem:[#allocation2 + $0x496]]
        %v2338 = vstv %s2337
        %v2339 = vmul.f32 %v2338, %v2032
        %v2340 = vadd.f32 %v2287, %v2339
        %s2341 = sld [smem:[#allocation2 + $0x516]]
        %v2342 = vstv %s2341
        %v2343 = vmul.f32 %v2342, %v2032
        %v2344 = vadd.f32 %v2291, %v2343
        %s2345 = sld [smem:[#allocation2 + $0x596]]
        %v2346 = vstv %s2345
        %v2347 = vmul.f32 %v2346, %v2032
        %v2348 = vadd.f32 %v2295, %v2347
        %s2349 = sld [smem:[#allocation2 + $0x616]]
        %v2350 = vstv %s2349
        %v2351 = vmul.f32 %v2350, %v2032
        %v2352 = vadd.f32 %v2299, %v2351
        %2354 = vrot.lane.b32.xlu0 %v2029, 127
        %v2355 = vpop.permute.xlu0 %2354
        %v2357 = vmax.f32 %v2300, %v2355
        %s2358 = sld [smem:[#allocation2 + $0x17]]
        %v2359 = vstv %s2358
        %v2360 = vmul.f32 %v2359, %v2029
        %2362 = vrot.lane.b32.xlu0 %v2360, 127
        %v2363 = vpop.permute.xlu0 %2362
        %v2365 = vadd.f32 %v2304, %v2363
        %s2366 = sld [smem:[#allocation2 + $0x97]]
        %v2367 = vstv %s2366
        %v2368 = vmul.f32 %v2367, %v2029
        %2370 = vrot.lane.b32.xlu0 %v2368, 127
        %v2371 = vpop.permute.xlu0 %2370
        %v2373 = vadd.f32 %v2308, %v2371
        %s2374 = sld [smem:[#allocation2 + $0x117]]
        %v2375 = vstv %s2374
        %v2376 = vmul.f32 %v2375, %v2029
        %2378 = vrot.lane.b32.xlu0 %v2376, 127
        %v2379 = vpop.permute.xlu0 %2378
        %v2381 = vadd.f32 %v2312, %v2379
        %s2382 = sld [smem:[#allocation2 + $0x197]]
        %v2383 = vstv %s2382
        %v2384 = vmul.f32 %v2383, %v2029
        %2386 = vrot.lane.b32.xlu0 %v2384, 127
        %v2387 = vpop.permute.xlu0 %2386
        %v2389 = vadd.f32 %v2316, %v2387
        %s2390 = sld [smem:[#allocation2 + $0x217]]
        %v2391 = vstv %s2390
        %v2392 = vmul.f32 %v2391, %v2029
        %2394 = vrot.lane.b32.xlu0 %v2392, 127
        %v2395 = vpop.permute.xlu0 %2394
        %v2397 = vadd.f32 %v2320, %v2395
        %s2398 = sld [smem:[#allocation2 + $0x297]]
        %v2399 = vstv %s2398
        %v2400 = vmul.f32 %v2399, %v2029
        %2402 = vrot.lane.b32.xlu0 %v2400, 127
        %v2403 = vpop.permute.xlu0 %2402
        %v2405 = vadd.f32 %v2324, %v2403
        %s2406 = sld [smem:[#allocation2 + $0x317]]
        %v2407 = vstv %s2406
        %v2408 = vmul.f32 %v2407, %v2029
        %2410 = vrot.lane.b32.xlu0 %v2408, 127
        %v2411 = vpop.permute.xlu0 %2410
        %v2413 = vadd.f32 %v2328, %v2411
        %s2414 = sld [smem:[#allocation2 + $0x397]]
        %v2415 = vstv %s2414
        %v2416 = vmul.f32 %v2415, %v2029
        %2418 = vrot.lane.b32.xlu0 %v2416, 127
        %v2419 = vpop.permute.xlu0 %2418
        %v2421 = vadd.f32 %v2332, %v2419
        %s2422 = sld [smem:[#allocation2 + $0x417]]
        %v2423 = vstv %s2422
        %v2424 = vmul.f32 %v2423, %v2029
        %2426 = vrot.lane.b32.xlu0 %v2424, 127
        %v2427 = vpop.permute.xlu0 %2426
        %v2429 = vadd.f32 %v2336, %v2427
        %s2430 = sld [smem:[#allocation2 + $0x497]]
        %v2431 = vstv %s2430
        %v2432 = vmul.f32 %v2431, %v2029
        %2434 = vrot.lane.b32.xlu0 %v2432, 127
        %v2435 = vpop.permute.xlu0 %2434
        %v2437 = vadd.f32 %v2340, %v2435
        %s2438 = sld [smem:[#allocation2 + $0x517]]
        %v2439 = vstv %s2438
        %v2440 = vmul.f32 %v2439, %v2029
        %2442 = vrot.lane.b32.xlu0 %v2440, 127
        %v2443 = vpop.permute.xlu0 %2442
        %v2445 = vadd.f32 %v2344, %v2443
        %s2446 = sld [smem:[#allocation2 + $0x597]]
        %v2447 = vstv %s2446
        %v2448 = vmul.f32 %v2447, %v2029
        %2450 = vrot.lane.b32.xlu0 %v2448, 127
        %v2451 = vpop.permute.xlu0 %2450
        %v2453 = vadd.f32 %v2348, %v2451
        %s2454 = sld [smem:[#allocation2 + $0x617]]
        %v2455 = vstv %s2454
        %v2456 = vmul.f32 %v2455, %v2029
        %2458 = vrot.lane.b32.xlu0 %v2456, 127
        %v2459 = vpop.permute.xlu0 %2458
        %v2461 = vadd.f32 %v2352, %v2459
        %v2463 = vrot.slane %v2020, 1
        %v2464 = vrot.slane %v2021, 1
        %v2465 = vsel %vm628, %v2463, %v2464
        %v2467 = vmax.f32 %v2357, %v2465
        %s2468 = sld [smem:[#allocation2 + $0x18]]
        %v2469 = vstv %s2468
        %v2470 = vmul.f32 %v2469, %v2020
        %v2471 = vmul.f32 %v2469, %v2021
        %v2474 = vrot.slane %v2470, 1
        %v2475 = vrot.slane %v2471, 1
        %v2476 = vsel %vm628, %v2474, %v2475
        %v2478 = vadd.f32 %v2365, %v2476
        %s2479 = sld [smem:[#allocation2 + $0x98]]
        %v2480 = vstv %s2479
        %v2481 = vmul.f32 %v2480, %v2020
        %v2482 = vmul.f32 %v2480, %v2021
        %v2485 = vrot.slane %v2481, 1
        %v2486 = vrot.slane %v2482, 1
        %v2487 = vsel %vm628, %v2485, %v2486
        %v2489 = vadd.f32 %v2373, %v2487
        %s2490 = sld [smem:[#allocation2 + $0x118]]
        %v2491 = vstv %s2490
        %v2492 = vmul.f32 %v2491, %v2020
        %v2493 = vmul.f32 %v2491, %v2021
        %v2496 = vrot.slane %v2492, 1
        %v2497 = vrot.slane %v2493, 1
        %v2498 = vsel %vm628, %v2496, %v2497
        %v2500 = vadd.f32 %v2381, %v2498
        %s2501 = sld [smem:[#allocation2 + $0x198]]
        %v2502 = vstv %s2501
        %v2503 = vmul.f32 %v2502, %v2020
        %v2504 = vmul.f32 %v2502, %v2021
        %v2507 = vrot.slane %v2503, 1
        %v2508 = vrot.slane %v2504, 1
        %v2509 = vsel %vm628, %v2507, %v2508
        %v2511 = vadd.f32 %v2389, %v2509
        %s2512 = sld [smem:[#allocation2 + $0x218]]
        %v2513 = vstv %s2512
        %v2514 = vmul.f32 %v2513, %v2020
        %v2515 = vmul.f32 %v2513, %v2021
        %v2518 = vrot.slane %v2514, 1
        %v2519 = vrot.slane %v2515, 1
        %v2520 = vsel %vm628, %v2518, %v2519
        %v2522 = vadd.f32 %v2397, %v2520
        %s2523 = sld [smem:[#allocation2 + $0x298]]
        %v2524 = vstv %s2523
        %v2525 = vmul.f32 %v2524, %v2020
        %v2526 = vmul.f32 %v2524, %v2021
        %v2529 = vrot.slane %v2525, 1
        %v2530 = vrot.slane %v2526, 1
        %v2531 = vsel %vm628, %v2529, %v2530
        %v2533 = vadd.f32 %v2405, %v2531
        %s2534 = sld [smem:[#allocation2 + $0x318]]
        %v2535 = vstv %s2534
        %v2536 = vmul.f32 %v2535, %v2020
        %v2537 = vmul.f32 %v2535, %v2021
        %v2540 = vrot.slane %v2536, 1
        %v2541 = vrot.slane %v2537, 1
        %v2542 = vsel %vm628, %v2540, %v2541
        %v2544 = vadd.f32 %v2413, %v2542
        %s2545 = sld [smem:[#allocation2 + $0x398]]
        %v2546 = vstv %s2545
        %v2547 = vmul.f32 %v2546, %v2020
        %v2548 = vmul.f32 %v2546, %v2021
        %v2551 = vrot.slane %v2547, 1
        %v2552 = vrot.slane %v2548, 1
        %v2553 = vsel %vm628, %v2551, %v2552
        %v2555 = vadd.f32 %v2421, %v2553
        %s2556 = sld [smem:[#allocation2 + $0x418]]
        %v2557 = vstv %s2556
        %v2558 = vmul.f32 %v2557, %v2020
        %v2559 = vmul.f32 %v2557, %v2021
        %v2562 = vrot.slane %v2558, 1
        %v2563 = vrot.slane %v2559, 1
        %v2564 = vsel %vm628, %v2562, %v2563
        %v2566 = vadd.f32 %v2429, %v2564
        %s2567 = sld [smem:[#allocation2 + $0x498]]
        %v2568 = vstv %s2567
        %v2569 = vmul.f32 %v2568, %v2020
        %v2570 = vmul.f32 %v2568, %v2021
        %v2573 = vrot.slane %v2569, 1
        %v2574 = vrot.slane %v2570, 1
        %v2575 = vsel %vm628, %v2573, %v2574
        %v2577 = vadd.f32 %v2437, %v2575
        %s2578 = sld [smem:[#allocation2 + $0x518]]
        %v2579 = vstv %s2578
        %v2580 = vmul.f32 %v2579, %v2020
        %v2581 = vmul.f32 %v2579, %v2021
        %v2584 = vrot.slane %v2580, 1
        %v2585 = vrot.slane %v2581, 1
        %v2586 = vsel %vm628, %v2584, %v2585
        %v2588 = vadd.f32 %v2445, %v2586
        %s2589 = sld [smem:[#allocation2 + $0x598]]
        %v2590 = vstv %s2589
        %v2591 = vmul.f32 %v2590, %v2020
        %v2592 = vmul.f32 %v2590, %v2021
        %v2595 = vrot.slane %v2591, 1
        %v2596 = vrot.slane %v2592, 1
        %v2597 = vsel %vm628, %v2595, %v2596
        %v2599 = vadd.f32 %v2453, %v2597
        %s2600 = sld [smem:[#allocation2 + $0x618]]
        %v2601 = vstv %s2600
        %v2602 = vmul.f32 %v2601, %v2020
        %v2603 = vmul.f32 %v2601, %v2021
        %v2606 = vrot.slane %v2602, 1
        %v2607 = vrot.slane %v2603, 1
        %v2608 = vsel %vm628, %v2606, %v2607
        %v2610 = vadd.f32 %v2461, %v2608
        %v2613 = vrot.slane %v2025, 1
        %v2614 = vrot.slane %v2026, 1
        %v2615 = vsel %vm628, %v2613, %v2614
        %v2617 = vmax.f32 %v2467, %v2615
        %s2618 = sld [smem:[#allocation2 + $0x19]]
        %v2619 = vstv %s2618
        %v2620 = vmul.f32 %v2619, %v2025
        %v2621 = vmul.f32 %v2619, %v2026
        %v2624 = vrot.slane %v2620, 1
        %v2625 = vrot.slane %v2621, 1
        %v2626 = vsel %vm628, %v2624, %v2625
        %v2628 = vadd.f32 %v2478, %v2626
        %s2629 = sld [smem:[#allocation2 + $0x99]]
        %v2630 = vstv %s2629
        %v2631 = vmul.f32 %v2630, %v2025
        %v2632 = vmul.f32 %v2630, %v2026
        %v2635 = vrot.slane %v2631, 1
        %v2636 = vrot.slane %v2632, 1
        %v2637 = vsel %vm628, %v2635, %v2636
        %v2639 = vadd.f32 %v2489, %v2637
        %s2640 = sld [smem:[#allocation2 + $0x119]]
        %v2641 = vstv %s2640
        %v2642 = vmul.f32 %v2641, %v2025
        %v2643 = vmul.f32 %v2641, %v2026
        %v2646 = vrot.slane %v2642, 1
        %v2647 = vrot.slane %v2643, 1
        %v2648 = vsel %vm628, %v2646, %v2647
        %v2650 = vadd.f32 %v2500, %v2648
        %s2651 = sld [smem:[#allocation2 + $0x199]]
        %v2652 = vstv %s2651
        %v2653 = vmul.f32 %v2652, %v2025
        %v2654 = vmul.f32 %v2652, %v2026
        %v2657 = vrot.slane %v2653, 1
        %v2658 = vrot.slane %v2654, 1
        %v2659 = vsel %vm628, %v2657, %v2658
        %v2661 = vadd.f32 %v2511, %v2659
        %s2662 = sld [smem:[#allocation2 + $0x219]]
        %v2663 = vstv %s2662
        %v2664 = vmul.f32 %v2663, %v2025
        %v2665 = vmul.f32 %v2663, %v2026
        %v2668 = vrot.slane %v2664, 1
        %v2669 = vrot.slane %v2665, 1
        %v2670 = vsel %vm628, %v2668, %v2669
        %v2672 = vadd.f32 %v2522, %v2670
        %s2673 = sld [smem:[#allocation2 + $0x299]]
        %v2674 = vstv %s2673
        %v2675 = vmul.f32 %v2674, %v2025
        %v2676 = vmul.f32 %v2674, %v2026
        %v2679 = vrot.slane %v2675, 1
        %v2680 = vrot.slane %v2676, 1
        %v2681 = vsel %vm628, %v2679, %v2680
        %v2683 = vadd.f32 %v2533, %v2681
        %s2684 = sld [smem:[#allocation2 + $0x319]]
        %v2685 = vstv %s2684
        %v2686 = vmul.f32 %v2685, %v2025
        %v2687 = vmul.f32 %v2685, %v2026
        %v2690 = vrot.slane %v2686, 1
        %v2691 = vrot.slane %v2687, 1
        %v2692 = vsel %vm628, %v2690, %v2691
        %v2694 = vadd.f32 %v2544, %v2692
        %s2695 = sld [smem:[#allocation2 + $0x399]]
        %v2696 = vstv %s2695
        %v2697 = vmul.f32 %v2696, %v2025
        %v2698 = vmul.f32 %v2696, %v2026
        %v2701 = vrot.slane %v2697, 1
        %v2702 = vrot.slane %v2698, 1
        %v2703 = vsel %vm628, %v2701, %v2702
        %v2705 = vadd.f32 %v2555, %v2703
        %s2706 = sld [smem:[#allocation2 + $0x419]]
        %v2707 = vstv %s2706
        %v2708 = vmul.f32 %v2707, %v2025
        %v2709 = vmul.f32 %v2707, %v2026
        %v2712 = vrot.slane %v2708, 1
        %v2713 = vrot.slane %v2709, 1
        %v2714 = vsel %vm628, %v2712, %v2713
        %v2716 = vadd.f32 %v2566, %v2714
        %s2717 = sld [smem:[#allocation2 + $0x499]]
        %v2718 = vstv %s2717
        %v2719 = vmul.f32 %v2718, %v2025
        %v2720 = vmul.f32 %v2718, %v2026
        %v2723 = vrot.slane %v2719, 1
        %v2724 = vrot.slane %v2720, 1
        %v2725 = vsel %vm628, %v2723, %v2724
        %v2727 = vadd.f32 %v2577, %v2725
        %s2728 = sld [smem:[#allocation2 + $0x519]]
        %v2729 = vstv %s2728
        %v2730 = vmul.f32 %v2729, %v2025
        %v2731 = vmul.f32 %v2729, %v2026
        %v2734 = vrot.slane %v2730, 1
        %v2735 = vrot.slane %v2731, 1
        %v2736 = vsel %vm628, %v2734, %v2735
        %v2738 = vadd.f32 %v2588, %v2736
        %s2739 = sld [smem:[#allocation2 + $0x599]]
        %v2740 = vstv %s2739
        %v2741 = vmul.f32 %v2740, %v2025
        %v2742 = vmul.f32 %v2740, %v2026
        %v2745 = vrot.slane %v2741, 1
        %v2746 = vrot.slane %v2742, 1
        %v2747 = vsel %vm628, %v2745, %v2746
        %v2749 = vadd.f32 %v2599, %v2747
        %s2750 = sld [smem:[#allocation2 + $0x619]]
        %v2751 = vstv %s2750
        %v2752 = vmul.f32 %v2751, %v2025
        %v2753 = vmul.f32 %v2751, %v2026
        %v2756 = vrot.slane %v2752, 1
        %v2757 = vrot.slane %v2753, 1
        %v2758 = vsel %vm628, %v2756, %v2757
        %v2760 = vadd.f32 %v2610, %v2758
        %2761 = vrot.lane.b32.xlu0 %v2465, 127
        %v2762 = vpop.permute.xlu0 %2761
        %v2764 = vmax.f32 %v2617, %v2762
        %s2765 = sld [smem:[#allocation2 + $0x1a]]
        %v2766 = vstv %s2765
        %v2767 = vmul.f32 %v2766, %v2020
        %v2768 = vmul.f32 %v2766, %v2021
        %v2771 = vrot.slane %v2767, 1
        %v2772 = vrot.slane %v2768, 1
        %v2773 = vsel %vm628, %v2771, %v2772
        %2774 = vrot.lane.b32.xlu0 %v2773, 127
        %v2775 = vpop.permute.xlu0 %2774
        %v2777 = vadd.f32 %v2628, %v2775
        %s2778 = sld [smem:[#allocation2 + $0x9a]]
        %v2779 = vstv %s2778
        %v2780 = vmul.f32 %v2779, %v2020
        %v2781 = vmul.f32 %v2779, %v2021
        %v2784 = vrot.slane %v2780, 1
        %v2785 = vrot.slane %v2781, 1
        %v2786 = vsel %vm628, %v2784, %v2785
        %2787 = vrot.lane.b32.xlu0 %v2786, 127
        %v2788 = vpop.permute.xlu0 %2787
        %v2790 = vadd.f32 %v2639, %v2788
        %s2791 = sld [smem:[#allocation2 + $0x11a]]
        %v2792 = vstv %s2791
        %v2793 = vmul.f32 %v2792, %v2020
        %v2794 = vmul.f32 %v2792, %v2021
        %v2797 = vrot.slane %v2793, 1
        %v2798 = vrot.slane %v2794, 1
        %v2799 = vsel %vm628, %v2797, %v2798
        %2800 = vrot.lane.b32.xlu0 %v2799, 127
        %v2801 = vpop.permute.xlu0 %2800
        %v2803 = vadd.f32 %v2650, %v2801
        %s2804 = sld [smem:[#allocation2 + $0x19a]]
        %v2805 = vstv %s2804
        %v2806 = vmul.f32 %v2805, %v2020
        %v2807 = vmul.f32 %v2805, %v2021
        %v2810 = vrot.slane %v2806, 1
        %v2811 = vrot.slane %v2807, 1
        %v2812 = vsel %vm628, %v2810, %v2811
        %2813 = vrot.lane.b32.xlu0 %v2812, 127
        %v2814 = vpop.permute.xlu0 %2813
        %v2816 = vadd.f32 %v2661, %v2814
        %s2817 = sld [smem:[#allocation2 + $0x21a]]
        %v2818 = vstv %s2817
        %v2819 = vmul.f32 %v2818, %v2020
        %v2820 = vmul.f32 %v2818, %v2021
        %v2823 = vrot.slane %v2819, 1
        %v2824 = vrot.slane %v2820, 1
        %v2825 = vsel %vm628, %v2823, %v2824
        %2826 = vrot.lane.b32.xlu0 %v2825, 127
        %v2827 = vpop.permute.xlu0 %2826
        %v2829 = vadd.f32 %v2672, %v2827
        %s2830 = sld [smem:[#allocation2 + $0x29a]]
        %v2831 = vstv %s2830
        %v2832 = vmul.f32 %v2831, %v2020
        %v2833 = vmul.f32 %v2831, %v2021
        %v2836 = vrot.slane %v2832, 1
        %v2837 = vrot.slane %v2833, 1
        %v2838 = vsel %vm628, %v2836, %v2837
        %2839 = vrot.lane.b32.xlu0 %v2838, 127
        %v2840 = vpop.permute.xlu0 %2839
        %v2842 = vadd.f32 %v2683, %v2840
        %s2843 = sld [smem:[#allocation2 + $0x31a]]
        %v2844 = vstv %s2843
        %v2845 = vmul.f32 %v2844, %v2020
        %v2846 = vmul.f32 %v2844, %v2021
        %v2849 = vrot.slane %v2845, 1
        %v2850 = vrot.slane %v2846, 1
        %v2851 = vsel %vm628, %v2849, %v2850
        %2852 = vrot.lane.b32.xlu0 %v2851, 127
        %v2853 = vpop.permute.xlu0 %2852
        %v2855 = vadd.f32 %v2694, %v2853
        %s2856 = sld [smem:[#allocation2 + $0x39a]]
        %v2857 = vstv %s2856
        %v2858 = vmul.f32 %v2857, %v2020
        %v2859 = vmul.f32 %v2857, %v2021
        %v2862 = vrot.slane %v2858, 1
        %v2863 = vrot.slane %v2859, 1
        %v2864 = vsel %vm628, %v2862, %v2863
        %2865 = vrot.lane.b32.xlu0 %v2864, 127
        %v2866 = vpop.permute.xlu0 %2865
        %v2868 = vadd.f32 %v2705, %v2866
        %s2869 = sld [smem:[#allocation2 + $0x41a]]
        %v2870 = vstv %s2869
        %v2871 = vmul.f32 %v2870, %v2020
        %v2872 = vmul.f32 %v2870, %v2021
        %v2875 = vrot.slane %v2871, 1
        %v2876 = vrot.slane %v2872, 1
        %v2877 = vsel %vm628, %v2875, %v2876
        %2878 = vrot.lane.b32.xlu0 %v2877, 127
        %v2879 = vpop.permute.xlu0 %2878
        %v2881 = vadd.f32 %v2716, %v2879
        %s2882 = sld [smem:[#allocation2 + $0x49a]]
        %v2883 = vstv %s2882
        %v2884 = vmul.f32 %v2883, %v2020
        %v2885 = vmul.f32 %v2883, %v2021
        %v2888 = vrot.slane %v2884, 1
        %v2889 = vrot.slane %v2885, 1
        %v2890 = vsel %vm628, %v2888, %v2889
        %2891 = vrot.lane.b32.xlu0 %v2890, 127
        %v2892 = vpop.permute.xlu0 %2891
        %v2894 = vadd.f32 %v2727, %v2892
        %s2895 = sld [smem:[#allocation2 + $0x51a]]
        %v2896 = vstv %s2895
        %v2897 = vmul.f32 %v2896, %v2020
        %v2898 = vmul.f32 %v2896, %v2021
        %v2901 = vrot.slane %v2897, 1
        %v2902 = vrot.slane %v2898, 1
        %v2903 = vsel %vm628, %v2901, %v2902
        %2904 = vrot.lane.b32.xlu0 %v2903, 127
        %v2905 = vpop.permute.xlu0 %2904
        %v2907 = vadd.f32 %v2738, %v2905
        %s2908 = sld [smem:[#allocation2 + $0x59a]]
        %v2909 = vstv %s2908
        %v2910 = vmul.f32 %v2909, %v2020
        %v2911 = vmul.f32 %v2909, %v2021
        %v2914 = vrot.slane %v2910, 1
        %v2915 = vrot.slane %v2911, 1
        %v2916 = vsel %vm628, %v2914, %v2915
        %2917 = vrot.lane.b32.xlu0 %v2916, 127
        %v2918 = vpop.permute.xlu0 %2917
        %v2920 = vadd.f32 %v2749, %v2918
        %s2921 = sld [smem:[#allocation2 + $0x61a]]
        %v2922 = vstv %s2921
        %v2923 = vmul.f32 %v2922, %v2020
        %v2924 = vmul.f32 %v2922, %v2021
        %v2927 = vrot.slane %v2923, 1
        %v2928 = vrot.slane %v2924, 1
        %v2929 = vsel %vm628, %v2927, %v2928
        %2930 = vrot.lane.b32.xlu0 %v2929, 127
        %v2931 = vpop.permute.xlu0 %2930
        %v2933 = vadd.f32 %v2760, %v2931
        %2935 = vrot.lane.b32.xlu0 %v2790, 8
        %v2936 = vpop.permute.xlu0 %2935
        %2939 = vrot.lane.b32.xlu0 %v2803, 16
        %v2940 = vpop.permute.xlu0 %2939
        %2943 = vrot.lane.b32.xlu0 %v2816, 24
        %v2944 = vpop.permute.xlu0 %2943
        %2947 = vrot.lane.b32.xlu0 %v2829, 32
        %v2948 = vpop.permute.xlu0 %2947
        %2951 = vrot.lane.b32.xlu0 %v2842, 40
        %v2952 = vpop.permute.xlu0 %2951
        %2955 = vrot.lane.b32.xlu0 %v2855, 48
        %v2956 = vpop.permute.xlu0 %2955
        %2959 = vrot.lane.b32.xlu0 %v2868, 56
        %v2960 = vpop.permute.xlu0 %2959
        %2963 = vrot.lane.b32.xlu0 %v2881, 64
        %v2964 = vpop.permute.xlu0 %2963
        %2967 = vrot.lane.b32.xlu0 %v2894, 72
        %v2968 = vpop.permute.xlu0 %2967
        %2971 = vrot.lane.b32.xlu0 %v2907, 80
        %v2972 = vpop.permute.xlu0 %2971
        %2975 = vrot.lane.b32.xlu0 %v2920, 88
        %v2976 = vpop.permute.xlu0 %2975
        %2979 = vrot.lane.b32.xlu0 %v2933, 96
        %v2980 = vpop.permute.xlu0 %2979
        %2983 = vrot.lane.b32.xlu0 %v930, 104
        %v2984 = vpop.permute.xlu0 %2983
        %2987 = vrot.lane.b32.xlu0 %v1847, 112
        %v2988 = vpop.permute.xlu0 %2987
        %2991 = vrot.lane.b32.xlu0 %v2764, 120
        %v2992 = vpop.permute.xlu0 %2991
        %vm2994 = vcmask 64512
        %v2995 = vsel %vm2994, %v2777, %v2936
        %vm2996 = vcmask 130048
        %v2997 = vsel %vm2996, %v2995, %v2940
        %vm2998 = vcmask 195584
        %v2999 = vsel %vm2998, %v2997, %v2944
        %vm3000 = vcmask 261120
        %v3001 = vsel %vm3000, %v2999, %v2948
        %vm3002 = vcmask 326656
        %v3003 = vsel %vm3002, %v3001, %v2952
        %vm3004 = vcmask 392192
        %v3005 = vsel %vm3004, %v3003, %v2956
        %vm3006 = vcmask 457728
        %v3007 = vsel %vm3006, %v3005, %v2960
        %vm3008 = vcmask 523264
        %v3009 = vsel %vm3008, %v3007, %v2964
        %vm3010 = vcmask 588800
        %v3011 = vsel %vm3010, %v3009, %v2968
        %vm3012 = vcmask 654336
        %v3013 = vsel %vm3012, %v3011, %v2972
        %vm3014 = vcmask 719872
        %v3015 = vsel %vm3014, %v3013, %v2976
        %vm3016 = vcmask 785408
        %v3017 = vsel %vm3016, %v3015, %v2980
        %vm3018 = vcmask 850944
        %v3019 = vsel %vm3018, %v3017, %v2984
        %vm3020 = vcmask 916480
        %v3021 = vsel %vm3020, %v3019, %v2988
        %vm3022 = vcmask 982016
        %v3023 = vsel %vm3022, %v3021, %v2992
        %v3024 = vlaneseq
        %v3025 = vshrl.u32 %v3024, 7
        %v3026 = vlaneseq
        %v3027 = vand.u32 %v3026, 127
        %vm3028 = vcmp.lt.s32.totalorder %v3025, 7
        %vm3029 = vcmp.lt.s32.totalorder %v3027, 0
        %v3030 = vsub.s32 0, %v3027
        %v3031 = vsel %vm3029, %v3030, %v3027
        %v3032 = vshrl.u32 %v3031, 3
        %v3033 = vand.u32 %v3031, 7
        %v3034 = vsub.s32 0, %v3033
        %v3035 = vsel %vm3029, %v3034, %v3033
        %vm3036 = vcmp.ne.s32.totalorder %v3035, 0
        %vm3037 = vcmp.lt.s32.totalorder %v3035, 0
        %vm3038 = vmand %vm3037, %vm3036
        %v3039 = vadd.s32 %v3035, 8
        %v3040 = vsel %vm3038, %v3039, %v3035
        %vm3041 = vcmp.lt.s32.totalorder %v3040, 7
        %vm3042 = vmand %vm3028, %vm3041
        %v3043 = vsel %vm3042, 1, 0
        %v3044 = vcvt.s32.f32 %v3043
        %v3045 = vmul.f32 %v3023, %v3044
        %v3046 = vrot.slane %v3045, 4
        %v3047 = vadd.f32 %v3045, %v3046
        %v3048 = vrot.slane %v3047, 2
        %v3049 = vadd.f32 %v3047, %v3048
        %v3050 = vrot.slane %v3049, 1
        %v3051 = vadd.f32 %v3049, %v3050
        %v3052 = vmul.f32 %v3045, %v3023
        %v3053 = vrot.slane %v3052, 4
        %v3054 = vadd.f32 %v3052, %v3053
        %v3055 = vrot.slane %v3054, 2
        %v3056 = vadd.f32 %v3054, %v3055
        %v3057 = vrot.slane %v3056, 1
        %v3058 = vadd.f32 %v3056, %v3057
        %vm3059 = vcmask 1040384
        %v3060 = vsel %vm3059, %v3051, %v3058
        %3061 = vst [vmem:[%s195] sm:$0x3] %v3060
        %3062 = vst [vmem:[%s191] sm:$0xff] %v3023
        %p3063 = scmp.lt.s32.totalorder %s16, 1
        %s3064 = scalar_select %p3063, %s16, 1
        %s3065 = smul.addr %s3064, 8
        %s3066 = scalar_lea.vmem %s2, %s3065
        %p3067 = scmp.lt.s32.totalorder %s16, 1
        %s3068 = scalar_select %p3067, %s16, 1
        %s3069 = smul.addr %s3068, 2
        %s3070 = scalar_lea.vmem %s3, %s3069
        // Predicated region
        $region33: #{initial_block.2} parent=27 // pred_check
          %p3071 = pneg %p81
        $region34: #{initial_block.2} parent=27 // pred_check_branch
          %3073 = sbr.rel (%p3071) target = $region36
        $region35: #{initial_block.2} parent=27 // pred_region
          _
        $region36: #{initial_block.2} parent=27 // pred_fallthru
          _
        // Predicated region
        $region37: #{initial_block.2} parent=27 // pred_check
          %p3074 = pneg %p107
        $region38: #{initial_block.2} parent=27 // pred_check_branch
          %3076 = sbr.rel (%p3074) target = $region40
        $region39: #{initial_block.2} parent=27 // pred_region
          _
        $region40: #{initial_block.2} parent=27 // pred_fallthru
          _
      $region28: #{initial_block.2} parent=5 // pred_fallthru
        _
      %p3077 = scmp.le.s32.totalorder 2, %s11
      // Predicated region
      $region41: #{initial_block.2} parent=5 // pred_check
        %p3078 = pneg %p3077
      $region42: #{initial_block.2} parent=5 // pred_check_branch
        %3080 = sbr.rel (%p3078) target = $region44
      $region43: #{initial_block.2} parent=5 // pred_region
        %s3081 = ssub.s32 %s11, 2
        // Predicated region
        $region45: #{initial_block.2} parent=43 // pred_check
          %p3082 = pneg %p87
        $region46: #{initial_block.2} parent=43 // pred_check_branch
          %3084 = sbr.rel (%p3082) target = $region48
        $region47: #{initial_block.2} parent=43 // pred_region
          %p3085 = scmp.lt.s32.totalorder %s17, 1
          %s3086 = scalar_select %p3085, %s17, 1
          %s3087 = smul.addr %s3086, 8
          %s3088 = scalar_lea.vmem %s2, %s3087
        $region48: #{initial_block.2} parent=43 // pred_fallthru
          _
        // Predicated region
        $region49: #{initial_block.2} parent=43 // pred_check
          %p3089 = pneg %p113
        $region50: #{initial_block.2} parent=43 // pred_check_branch
          %3091 = sbr.rel (%p3089) target = $region52
        $region51: #{initial_block.2} parent=43 // pred_region
          %p3092 = scmp.lt.s32.totalorder %s17, 1
          %s3093 = scalar_select %p3092, %s17, 1
          %s3094 = smul.addr %s3093, 2
          %s3095 = scalar_lea.vmem %s3, %s3094
        $region52: #{initial_block.2} parent=43 // pred_fallthru
          _
      $region44: #{initial_block.2} parent=5 // pred_fallthru
        _
    $region6: #{initial_block.2} parent=1 // loop_footer
      %s15 = sadd.s32 1, %s11
    $region7: #{initial_block.2} parent=1 // loop_footer_branch
      %10 = sbr.rel target = $region3
    $region8: #{initial_block.2} parent=1 // loop_exit
      _
    %3096 = vsyncpa [#allocation3], 1
    %s3097 = scalar_lea.sflag [#allocation3], 1
    %3098 = vsyncpa %s3097, 1

</llo_original>
